<compile_context>
chip_gen: v7x
topology: tpu7x:2x2x1
jax: 0.10.0
libtpu: 0.0.40
codegen_flags: <defaults>
</compile_context>

<pallas_src>
import functools

import jax
import jax.numpy as jnp
from jax.experimental import pallas as pl
from jax.experimental.pallas import tpu as pltpu

LANE = 128                          # lane-dense padding unit (Cout and K)
TM_MAX = 1024                       # rows per grid step (multiple of 16 for bf16)
VMEM_LIMIT = 32 * 1024 * 1024       # explicit scoped-VMEM cap (fits v5e/v6e/v7x)
BN_EPS = 1e-5
LRELU_SLOPE = 0.2


def _round_up(x, m):
    return -(-x // m) * m


# ----------------------------- Pallas kernels ------------------------------

def _mm_bias_lrelu_kernel(p_ref, w_ref, b_ref, o_ref):
    """o = LeakyReLU(p @ w + b).  p:(TM,K) bf16, w:(K,Cp) bf16, b:(1,Cp) f32."""
    y = jnp.dot(p_ref[...], w_ref[...], preferred_element_type=jnp.float32)
    y = y + b_ref[...]
    o_ref[...] = jnp.where(y >= 0, y, LRELU_SLOPE * y).astype(o_ref.dtype)


def _mm_bn_lrelu_fused_kernel(p_ref, w_ref, g_ref, bt_ref, o_ref, *, inv_m):
    """Single-tile Conv + BatchNorm(exact batch stats) + LeakyReLU, fully fused."""
    y = jnp.dot(p_ref[...], w_ref[...], preferred_element_type=jnp.float32)
    s = jnp.sum(y, axis=0, keepdims=True)            # f32 stats before any cast
    q = jnp.sum(y * y, axis=0, keepdims=True)
    mean = s * inv_m
    var = jnp.maximum(q * inv_m - mean * mean, 0.0)  # biased (training) variance
    scale = g_ref[...] * jax.lax.rsqrt(var + BN_EPS)
    shift = bt_ref[...] - mean * scale
    z = y * scale + shift
    o_ref[...] = jnp.where(z >= 0, z, LRELU_SLOPE * z).astype(o_ref.dtype)


def _mm_stats_kernel(p_ref, w_ref, y_ref, s_ref, q_ref):
    """Multi-tile Conv+BN pass A: y = p @ w (stored bf16) plus *per-tile* partial
    per-channel sum / sum-of-squares in f32 (taken from the f32 dot result).
    Per-tile partials keep the grid axis "parallel" (megacore-safe on v7x)."""
    y = jnp.dot(p_ref[...], w_ref[...], preferred_element_type=jnp.float32)
    y_ref[...] = y.astype(y_ref.dtype)
    s = jnp.sum(y, axis=0, keepdims=True)
    q = jnp.sum(y * y, axis=0, keepdims=True)
    s_ref[...] = jnp.broadcast_to(s, s_ref.shape)    # replicate over the 8 sublanes
    q_ref[...] = jnp.broadcast_to(q, q_ref.shape)


def _scale_shift_lrelu_kernel(y_ref, a_ref, b_ref, o_ref):
    """Multi-tile Conv+BN pass B: o = LeakyReLU(y * a + b) (bf16 in / bf16 out)."""
    z = y_ref[...].astype(jnp.float32) * a_ref[...] + b_ref[...]
    o_ref[...] = jnp.where(z >= 0, z, LRELU_SLOPE * z).astype(o_ref.dtype)


# ------------------------------ JAX glue -----------------------------------

def _tiles(m):
    """Choose (m_pad, tm, n_tiles) for the M axis."""
    if m >= TM_MAX:
        tm = TM_MAX
        m_pad = _round_up(m, tm)
    else:
        m_pad = _round_up(m, 16)
        tm = m_pad
    return m_pad, tm, m_pad // tm


def _im2col_nhwc(x, k, stride, pad):
    """x: (N,H,W,C) -> patches (N*Ho*Wo, k*k*C); K ordered (kh, kw, cin)."""
    n, h, w, c = x.shape
    xp = jnp.pad(x, ((0, 0), (pad, pad), (pad, pad), (0, 0))) if pad else x
    ho = (h + 2 * pad - k) // stride + 1
    wo = (w + 2 * pad - k) // stride + 1
    cols = []
    for i in range(k):
        for j in range(k):
            cols.append(xp[:, i:i + stride * ho:stride, j:j + stride * wo:stride, :])
    patches = jnp.concatenate(cols, axis=-1).reshape(n * ho * wo, k * k * c)
    return patches, ho, wo


def _gemm_prep(x_nhwc, w, stride, pad):
    """bf16 im2col (real channels only) + lane-dense padding of M, K and Cout."""
    cout, cin, k, _ = w.shape
    # Lazy channel slice: the previous layer keeps its lane-padded slab; only the
    # real channels are gathered here (the slice fuses into the im2col concat).
    x = x_nhwc[..., :cin].astype(jnp.bfloat16)
    patches, ho, wo = _im2col_nhwc(x, k, stride, pad)
    m, kk = patches.shape
    k_pad = _round_up(kk, LANE)          # e.g. layer-1 K: 48 -> 128 (lane-dense LHS)
    c_pad = _round_up(cout, LANE)
    m_pad, tm, n_tiles = _tiles(m)
    if m_pad > m or k_pad > kk:
        patches = jnp.pad(patches, ((0, m_pad - m), (0, k_pad - kk)))  # zeros: BN-safe
    # (Cout, Cin, kh, kw) -> (kh, kw, Cin, Cout) -> (K, Cout); matches im2col K order.
    w2d = w.transpose(2, 3, 1, 0).reshape(kk, cout)
    w2d = jnp.pad(w2d, ((0, k_pad - kk), (0, c_pad - cout))).astype(jnp.bfloat16)
    return patches, w2d, m, m_pad, tm, n_tiles, k_pad, c_pad, ho, wo, cout


def _pad_vec(v, cout, c_pad):
    return jnp.pad(v.reshape(1, cout).astype(jnp.float32), ((0, 0), (0, c_pad - cout)))


def _to_nhwc(y, m, m_pad, n, ho, wo, c_pad):
    """(m_pad, c_pad) -> (n, ho, wo, c_pad); a free reshape when m_pad == m."""
    if m_pad > m:
        y = y[:m]
    return y.reshape(n, ho, wo, c_pad)


def _mosaic_params(*axes):
    return pltpu.CompilerParams(dimension_semantics=axes, vmem_limit_bytes=VMEM_LIMIT)


def _conv_bias_lrelu(x_nhwc, w, b, *, stride, pad):
    """Conv(bias) + LeakyReLU(0.2) as one tiled, lane-dense Pallas GEMM (bf16 out)."""
    n = x_nhwc.shape[0]
    patches, w2d, m, m_pad, tm, n_tiles, k_pad, c_pad, ho, wo, cout = _gemm_prep(
        x_nhwc, w, stride, pad)
    b2d = _pad_vec(b, cout, c_pad)

    out = pl.pallas_call(
        _mm_bias_lrelu_kernel,
        out_shape=jax.ShapeDtypeStruct((m_pad, c_pad), jnp.bfloat16),
        grid=(n_tiles,),
        in_specs=[
            pl.BlockSpec((tm, k_pad), lambda i: (i, 0)),
            pl.BlockSpec((k_pad, c_pad), lambda i: (0, 0)),
            pl.BlockSpec((1, c_pad), lambda i: (0, 0)),
        ],
        out_specs=pl.BlockSpec((tm, c_pad), lambda i: (i, 0)),
        compiler_params=_mosaic_params("parallel"),
    )(patches, w2d, b2d)
    return _to_nhwc(out, m, m_pad, n, ho, wo, c_pad)


def _conv_bn_lrelu(x_nhwc, w, gamma, beta, *, stride, pad):
    """Conv(no bias) + BatchNorm(batch stats, eps=1e-5) + LeakyReLU(0.2)."""
    n = x_nhwc.shape[0]
    patches, w2d, m, m_pad, tm, n_tiles, k_pad, c_pad, ho, wo, cout = _gemm_prep(
        x_nhwc, w, stride, pad)
    g2d = _pad_vec(gamma, cout, c_pad)
    bt2d = _pad_vec(beta, cout, c_pad)

    if n_tiles == 1:
        # Whole M axis in one tile: GEMM + exact batch stats + normalize +
        # LeakyReLU in a single kernel (no y HBM round-trip, one launch).
        out = pl.pallas_call(
            functools.partial(_mm_bn_lrelu_fused_kernel, inv_m=1.0 / m),
            out_shape=jax.ShapeDtypeStruct((m_pad, c_pad), jnp.bfloat16),
            grid=(1,),
            in_specs=[
                pl.BlockSpec((m_pad, k_pad), lambda i: (0, 0)),
                pl.BlockSpec((k_pad, c_pad), lambda i: (0, 0)),
                pl.BlockSpec((1, c_pad), lambda i: (0, 0)),
                pl.BlockSpec((1, c_pad), lambda i: (0, 0)),
            ],
            out_specs=pl.BlockSpec((m_pad, c_pad), lambda i: (0, 0)),
            compiler_params=_mosaic_params("parallel"),
        )(patches, w2d, g2d, bt2d)
        return _to_nhwc(out, m, m_pad, n, ho, wo, c_pad)

    # ---------------- Multi-tile path ----------------
    # Pass A: tiled GEMM + per-tile partial per-channel sum / sum-of-squares.
    y, s_part, q_part = pl.pallas_call(
        _mm_stats_kernel,
        out_shape=(
            jax.ShapeDtypeStruct((m_pad, c_pad), jnp.bfloat16),
            jax.ShapeDtypeStruct((n_tiles * 8, c_pad), jnp.float32),
            jax.ShapeDtypeStruct((n_tiles * 8, c_pad), jnp.float32),
        ),
        grid=(n_tiles,),
        in_specs=[
            pl.BlockSpec((tm, k_pad), lambda i: (i, 0)),
            pl.BlockSpec((k_pad, c_pad), lambda i: (0, 0)),
        ],
        out_specs=(
            pl.BlockSpec((tm, c_pad), lambda i: (i, 0)),
            pl.BlockSpec((8, c_pad), lambda i: (i, 0)),
            pl.BlockSpec((8, c_pad), lambda i: (i, 0)),
        ),
        compiler_params=_mosaic_params("parallel"),
    )(patches, w2d)

    # Fold exact batch stats + affine into per-channel scale/shift (tiny, plain JAX).
    s = s_part.reshape(n_tiles, 8, c_pad)[:, 0, :].sum(axis=0, keepdims=True)
    q = q_part.reshape(n_tiles, 8, c_pad)[:, 0, :].sum(axis=0, keepdims=True)
    mean = s / float(m)
    var = jnp.maximum(q / float(m) - mean * mean, 0.0)   # biased (training) variance
    scale = g2d * jax.lax.rsqrt(var + BN_EPS)
    shift = bt2d - mean * scale

    # Pass B: tiled normalize + LeakyReLU (bf16 in / bf16 out).
    out = pl.pallas_call(
        _scale_shift_lrelu_kernel,
        out_shape=jax.ShapeDtypeStruct((m_pad, c_pad), jnp.bfloat16),
        grid=(n_tiles,),
        in_specs=[
            pl.BlockSpec((tm, c_pad), lambda i: (i, 0)),
            pl.BlockSpec((1, c_pad), lambda i: (0, 0)),
            pl.BlockSpec((1, c_pad), lambda i: (0, 0)),
        ],
        out_specs=pl.BlockSpec((tm, c_pad), lambda i: (i, 0)),
        compiler_params=_mosaic_params("parallel"),
    )(y, scale, shift)
    return _to_nhwc(out, m, m_pad, n, ho, wo, c_pad)


def _final_conv_sigmoid(x_nhwc, w, b, *, stride, pad):
    """Final 4x4 -> 1x1 conv + sigmoid in plain XLA: M equals the batch size, so a
    pallas_call would be dominated by fixed launch/pipeline cost (perf review)."""
    cout, cin, k, _ = w.shape
    n = x_nhwc.shape[0]
    x = x_nhwc[..., :cin].astype(jnp.float32)
    patches, ho, wo = _im2col_nhwc(x, k, stride, pad)
    w2d = w.transpose(2, 3, 1, 0).reshape(k * k * cin, cout).astype(jnp.float32)
    y = patches @ w2d + b.reshape(1, cout)
    return jax.nn.sigmoid(y).reshape(n, ho, wo, cout)


# --------------------------- parameter creation -----------------------------

def _xavier_normal(key, shape):
    # shape = (Cout, Cin, k, k)
    fan_out = shape[0] * shape[2] * shape[3]
    fan_in = shape[1] * shape[2] * shape[3]
    std = (2.0 / (fan_in + fan_out)) ** 0.5
    return std * jax.random.normal(key, shape, dtype=jnp.float32)


def init_discriminator_params(key, channels_img, features_d):
    ks = jax.random.split(key, 5)
    fd = features_d
    return {
        # layer 1: Conv(channels_img -> fd, k4 s2 p1, bias) + LeakyReLU
        "w1": _xavier_normal(ks[0], (fd, channels_img, 4, 4)),
        "b1": jnp.zeros((fd,), jnp.float32),
        # blocks: Conv (no bias) + BN(gamma=1, beta=0) + LeakyReLU
        "w2": _xavier_normal(ks[1], (fd * 2, fd, 4, 4)),
        "g2": jnp.ones((fd * 2,), jnp.float32),
        "bt2": jnp.zeros((fd * 2,), jnp.float32),
        "w3": _xavier_normal(ks[2], (fd * 4, fd * 2, 4, 4)),
        "g3": jnp.ones((fd * 4,), jnp.float32),
        "bt3": jnp.zeros((fd * 4,), jnp.float32),
        "w4": _xavier_normal(ks[3], (fd * 8, fd * 4, 4, 4)),
        "g4": jnp.ones((fd * 8,), jnp.float32),
        "bt4": jnp.zeros((fd * 8,), jnp.float32),
        # layer 5: Conv(fd*8 -> 1, k4 s2 p0, bias) + Sigmoid
        "w5": _xavier_normal(ks[4], (1, fd * 8, 4, 4)),
        "b5": jnp.zeros((1,), jnp.float32),
    }


# ------------------------------- forward ------------------------------------

@jax.jit
def discriminator_forward(params, x):
    """x: (N, channels_img, 64, 64) f32 NCHW -> (N, 1, 1, 1) f32 in [0, 1]."""
    h = x.transpose(0, 2, 3, 1)                                        # NCHW -> NHWC once
    h = _conv_bias_lrelu(h, params["w1"], params["b1"],
                         stride=2, pad=1)                              # 64 -> 32
    h = _conv_bn_lrelu(h, params["w2"], params["g2"], params["bt2"],
                       stride=2, pad=1)                                # 32 -> 16
    h = _conv_bn_lrelu(h, params["w3"], params["g3"], params["bt3"],
                       stride=2, pad=1)                                # 16 -> 8
    h = _conv_bn_lrelu(h, params["w4"], params["g4"], params["bt4"],
                       stride=2, pad=1)                                # 8 -> 4
    h = _final_conv_sigmoid(h, params["w5"], params["b5"],
                            stride=2, pad=0)                           # 4 -> 1
    return h.transpose(0, 3, 1, 2)                                     # (N, 1, 1, 1)


# --------------------------------- main --------------------------------------

if __name__ == "__main__":
    key = jax.random.PRNGKey(0)
    k_params, k_x, k_x2 = jax.random.split(key, 3)

    N, channels_img, features_d = 2, 3, 8
    H = W = 64  # DCGAN discriminator expects 64x64 images (conv stack -> 1x1)

    params = init_discriminator_params(k_params, channels_img, features_d)
    x = jax.random.normal(k_x, (N, channels_img, H, W), dtype=jnp.float32)

    out = jax.block_until_ready(discriminator_forward(params, x))
    assert out.shape == (N, 1, 1, 1), out.shape
    assert bool(jnp.all(jnp.isfinite(out)))
    assert bool(jnp.all((out >= 0.0) & (out <= 1.0)))  # sigmoid range

    # Second, slightly larger batch exercises the multi-tile BN path
    # (per-tile partial statistics + "parallel" grid axis) and padded M rows.
    N2 = 5
    x2 = jax.random.normal(k_x2, (N2, channels_img, H, W), dtype=jnp.float32)
    out2 = jax.block_until_ready(discriminator_forward(params, x2))
    assert out2.shape == (N2, 1, 1, 1), out2.shape
    assert bool(jnp.all(jnp.isfinite(out2)))
    assert bool(jnp.all((out2 >= 0.0) & (out2 <= 1.0)))

    print("KERNEL_OK")
</pallas_src>

<mosaic_0001>
module attributes {stable_mosaic.version = 11 : i64} {
  func.func @_mm_bias_lrelu_kernel(%arg0: i32, %arg1: memref<1024x128xbf16, #tpu.memory_space<vmem>>, %arg2: memref<128x128xbf16, #tpu.memory_space<vmem>>, %arg3: memref<1x128xf32, #tpu.memory_space<vmem>>, %arg4: memref<1024x128xbf16, #tpu.memory_space<vmem>>) attributes {dimension_semantics = [#tpu.dimension_semantics<parallel>], iteration_bounds = array<i64: 2>, scalar_prefetch = 0 : i64, scratch_operands = 0 : i64, tpu.core_type = #tpu.core_type<tc>, window_params = [{transform_indices = @transform_0, window_bounds = array<i64: 1024, 128>}, {pipeline_mode = #tpu.pipeline_mode<synchronous>, transform_indices = @transform_1, window_bounds = array<i64: 128, 128>}, {pipeline_mode = #tpu.pipeline_mode<synchronous>, transform_indices = @transform_2, window_bounds = array<i64: 1, 128>}, {transform_indices = @transform_3, window_bounds = array<i64: 1024, 128>}]} {
    %c0 = arith.constant 0 : index
    %c0_0 = arith.constant 0 : index
    %0 = vector.load %arg1[%c0, %c0_0] : memref<1024x128xbf16, #tpu.memory_space<vmem>>, vector<1024x128xbf16>
    %c0_1 = arith.constant 0 : index
    %c0_2 = arith.constant 0 : index
    %1 = vector.load %arg2[%c0_1, %c0_2] : memref<128x128xbf16, #tpu.memory_space<vmem>>, vector<128x128xbf16>
    %cst = arith.constant dense<0.000000e+00> : vector<1024x128xf32>
    %2 = tpu.matmul %0, %1, %cst {dimension_numbers = #tpu.dot_dimension_numbers<[1], [0], [0], [1], [0, 0, 1, 1], [], []>} : vector<1024x128xbf16>, vector<128x128xbf16>, vector<1024x128xf32> -> vector<1024x128xf32>
    %c0_3 = arith.constant 0 : index
    %c0_4 = arith.constant 0 : index
    %3 = vector.load %arg3[%c0_3, %c0_4] : memref<1x128xf32, #tpu.memory_space<vmem>>, vector<1x128xf32>
    %4 = vector.broadcast %3 : vector<1x128xf32> to vector<1024x128xf32>
    %5 = arith.addf %2, %4 : vector<1024x128xf32>
    %cst_5 = arith.constant 0.000000e+00 : f32
    %6 = vector.broadcast %cst_5 : f32 to vector<1024x128xf32>
    %7 = arith.cmpf oge, %5, %6 : vector<1024x128xf32>
    %cst_6 = arith.constant 2.000000e-01 : f32
    %8 = vector.broadcast %cst_6 : f32 to vector<1024x128xf32>
    %9 = arith.mulf %8, %5 : vector<1024x128xf32>
    %10 = arith.select %7, %5, %9 : vector<1024x128xi1>, vector<1024x128xf32>
    %11 = arith.truncf %10 : vector<1024x128xf32> to vector<1024x128xbf16>
    %c0_7 = arith.constant 0 : index
    %c0_8 = arith.constant 0 : index
    %12 = vector.load %arg4[%c0_7, %c0_8] : memref<1024x128xbf16, #tpu.memory_space<vmem>>, vector<1024x128xbf16>
    tpu.vector_store %arg4[%c0_7, %c0_8], %11 {strides = array<i32>} : memref<1024x128xbf16, #tpu.memory_space<vmem>>, vector<1024x128xbf16>,
    return
  }
  func.func @transform_0(%arg0: i32) -> (i32, i32) {
    %c0_i32 = arith.constant 0 : i32
    %c0_i32_0 = arith.constant 0 : i32
    return %arg0, %c0_i32 : i32, i32
  }
  func.func @transform_1(%arg0: i32) -> (i32, i32) {
    %c0_i32 = arith.constant 0 : i32
    %c0_i32_0 = arith.constant 0 : i32
    %c0_i32_1 = arith.constant 0 : i32
    return %c0_i32, %c0_i32_0 : i32, i32
  }
  func.func @transform_2(%arg0: i32) -> (i32, i32) {
    %c0_i32 = arith.constant 0 : i32
    %c0_i32_0 = arith.constant 0 : i32
    %c0_i32_1 = arith.constant 0 : i32
    return %c0_i32, %c0_i32_0 : i32, i32
  }
  func.func @transform_3(%arg0: i32) -> (i32, i32) {
    %c0_i32 = arith.constant 0 : i32
    %c0_i32_0 = arith.constant 0 : i32
    return %arg0, %c0_i32 : i32, i32
  }
}

module attributes {stable_mosaic.version = 11 : i64} {
  func.func @_mm_bn_lrelu_fused_kernel(%arg0: i32, %arg1: memref<512x128xbf16, #tpu.memory_space<vmem>>, %arg2: memref<128x128xbf16, #tpu.memory_space<vmem>>, %arg3: memref<1x128xf32, #tpu.memory_space<vmem>>, %arg4: memref<1x128xf32, #tpu.memory_space<vmem>>, %arg5: memref<512x128xbf16, #tpu.memory_space<vmem>>) attributes {dimension_semantics = [#tpu.dimension_semantics<parallel>], iteration_bounds = array<i64: 1>, scalar_prefetch = 0 : i64, scratch_operands = 0 : i64, tpu.core_type = #tpu.core_type<tc>, window_params = [{pipeline_mode = #tpu.pipeline_mode<synchronous>, transform_indices = @transform_0, window_bounds = array<i64: 512, 128>}, {pipeline_mode = #tpu.pipeline_mode<synchronous>, transform_indices = @transform_1, window_bounds = array<i64: 128, 128>}, {pipeline_mode = #tpu.pipeline_mode<synchronous>, transform_indices = @transform_2, window_bounds = array<i64: 1, 128>}, {pipeline_mode = #tpu.pipeline_mode<synchronous>, transform_indices = @transform_3, window_bounds = array<i64: 1, 128>}, {pipeline_mode = #tpu.pipeline_mode<synchronous>, transform_indices = @transform_4, window_bounds = array<i64: 512, 128>}]} {
    %c0 = arith.constant 0 : index
    %c0_0 = arith.constant 0 : index
    %0 = vector.load %arg1[%c0, %c0_0] : memref<512x128xbf16, #tpu.memory_space<vmem>>, vector<512x128xbf16>
    %c0_1 = arith.constant 0 : index
    %c0_2 = arith.constant 0 : index
    %1 = vector.load %arg2[%c0_1, %c0_2] : memref<128x128xbf16, #tpu.memory_space<vmem>>, vector<128x128xbf16>
    %cst = arith.constant dense<0.000000e+00> : vector<512x128xf32>
    %2 = tpu.matmul %0, %1, %cst {dimension_numbers = #tpu.dot_dimension_numbers<[1], [0], [0], [1], [0, 0, 1, 1], [], []>} : vector<512x128xbf16>, vector<128x128xbf16>, vector<512x128xf32> -> vector<512x128xf32>
    %cst_3 = arith.constant dense<0.000000e+00> : vector<128xf32>
    %3 = vector.multi_reduction <add>, %2, %cst_3 [0] : vector<512x128xf32> to vector<128xf32>
    %4 = vector.shape_cast %3 : vector<128xf32> to vector<1x128xf32>
    %5 = arith.mulf %2, %2 : vector<512x128xf32>
    %cst_4 = arith.constant dense<0.000000e+00> : vector<128xf32>
    %6 = vector.multi_reduction <add>, %5, %cst_4 [0] : vector<512x128xf32> to vector<128xf32>
    %7 = vector.shape_cast %6 : vector<128xf32> to vector<1x128xf32>
    %cst_5 = arith.constant 0.001953125 : f32
    %8 = vector.broadcast %cst_5 : f32 to vector<1x128xf32>
    %9 = arith.mulf %4, %8 : vector<1x128xf32>
    %cst_6 = arith.constant 0.001953125 : f32
    %10 = vector.broadcast %cst_6 : f32 to vector<1x128xf32>
    %11 = arith.mulf %7, %10 : vector<1x128xf32>
    %12 = arith.mulf %9, %9 : vector<1x128xf32>
    %13 = arith.subf %11, %12 : vector<1x128xf32>
    %cst_7 = arith.constant 0.000000e+00 : f32
    %14 = vector.broadcast %cst_7 : f32 to vector<1x128xf32>
    %15 = arith.maximumf %13, %14 : vector<1x128xf32>
    %c0_8 = arith.constant 0 : index
    %c0_9 = arith.constant 0 : index
    %16 = vector.load %arg3[%c0_8, %c0_9] : memref<1x128xf32, #tpu.memory_space<vmem>>, vector<1x128xf32>
    %cst_10 = arith.constant 9.99999974E-6 : f32
    %17 = vector.broadcast %cst_10 : f32 to vector<1x128xf32>
    %18 = arith.addf %15, %17 : vector<1x128xf32>
    %19 = math.rsqrt %18 : vector<1x128xf32>
    %20 = arith.mulf %16, %19 : vector<1x128xf32>
    %c0_11 = arith.constant 0 : index
    %c0_12 = arith.constant 0 : index
    %21 = vector.load %arg4[%c0_11, %c0_12] : memref<1x128xf32, #tpu.memory_space<vmem>>, vector<1x128xf32>
    %22 = arith.mulf %9, %20 : vector<1x128xf32>
    %23 = arith.subf %21, %22 : vector<1x128xf32>
    %24 = vector.broadcast %20 : vector<1x128xf32> to vector<512x128xf32>
    %25 = arith.mulf %2, %24 : vector<512x128xf32>
    %26 = vector.broadcast %23 : vector<1x128xf32> to vector<512x128xf32>
    %27 = arith.addf %25, %26 : vector<512x128xf32>
    %cst_13 = arith.constant 0.000000e+00 : f32
    %28 = vector.broadcast %cst_13 : f32 to vector<512x128xf32>
    %29 = arith.cmpf oge, %27, %28 : vector<512x128xf32>
    %cst_14 = arith.constant 2.000000e-01 : f32
    %30 = vector.broadcast %cst_14 : f32 to vector<512x128xf32>
    %31 = arith.mulf %30, %27 : vector<512x128xf32>
    %32 = arith.select %29, %27, %31 : vector<512x128xi1>, vector<512x128xf32>
    %33 = arith.truncf %32 : vector<512x128xf32> to vector<512x128xbf16>
    %c0_15 = arith.constant 0 : index
    %c0_16 = arith.constant 0 : index
    %34 = vector.load %arg5[%c0_15, %c0_16] : memref<512x128xbf16, #tpu.memory_space<vmem>>, vector<512x128xbf16>
    tpu.vector_store %arg5[%c0_15, %c0_16], %33 {strides = array<i32>} : memref<512x128xbf16, #tpu.memory_space<vmem>>, vector<512x128xbf16>,
    return
  }
  func.func @transform_0(%arg0: i32) -> (i32, i32) {
    %c0_i32 = arith.constant 0 : i32
    %c0_i32_0 = arith.constant 0 : i32
    %c0_i32_1 = arith.constant 0 : i32
    return %c0_i32, %c0_i32_0 : i32, i32
  }
  func.func @transform_1(%arg0: i32) -> (i32, i32) {
    %c0_i32 = arith.constant 0 : i32
    %c0_i32_0 = arith.constant 0 : i32
    %c0_i32_1 = arith.constant 0 : i32
    return %c0_i32, %c0_i32_0 : i32, i32
  }
  func.func @transform_2(%arg0: i32) -> (i32, i32) {
    %c0_i32 = arith.constant 0 : i32
    %c0_i32_0 = arith.constant 0 : i32
    %c0_i32_1 = arith.constant 0 : i32
    return %c0_i32, %c0_i32_0 : i32, i32
  }
  func.func @transform_3(%arg0: i32) -> (i32, i32) {
    %c0_i32 = arith.constant 0 : i32
    %c0_i32_0 = arith.constant 0 : i32
    %c0_i32_1 = arith.constant 0 : i32
    return %c0_i32, %c0_i32_0 : i32, i32
  }
  func.func @transform_4(%arg0: i32) -> (i32, i32) {
    %c0_i32 = arith.constant 0 : i32
    %c0_i32_0 = arith.constant 0 : i32
    %c0_i32_1 = arith.constant 0 : i32
    return %c0_i32, %c0_i32_0 : i32, i32
  }
}

module attributes {stable_mosaic.version = 11 : i64} {
  func.func @_mm_bn_lrelu_fused_kernel(%arg0: i32, %arg1: memref<128x256xbf16, #tpu.memory_space<vmem>>, %arg2: memref<256x128xbf16, #tpu.memory_space<vmem>>, %arg3: memref<1x128xf32, #tpu.memory_space<vmem>>, %arg4: memref<1x128xf32, #tpu.memory_space<vmem>>, %arg5: memref<128x128xbf16, #tpu.memory_space<vmem>>) attributes {dimension_semantics = [#tpu.dimension_semantics<parallel>], iteration_bounds = array<i64: 1>, scalar_prefetch = 0 : i64, scratch_operands = 0 : i64, tpu.core_type = #tpu.core_type<tc>, window_params = [{pipeline_mode = #tpu.pipeline_mode<synchronous>, transform_indices = @transform_0, window_bounds = array<i64: 128, 256>}, {pipeline_mode = #tpu.pipeline_mode<synchronous>, transform_indices = @transform_1, window_bounds = array<i64: 256, 128>}, {pipeline_mode = #tpu.pipeline_mode<synchronous>, transform_indices = @transform_2, window_bounds = array<i64: 1, 128>}, {pipeline_mode = #tpu.pipeline_mode<synchronous>, transform_indices = @transform_3, window_bounds = array<i64: 1, 128>}, {pipeline_mode = #tpu.pipeline_mode<synchronous>, transform_indices = @transform_4, window_bounds = array<i64: 128, 128>}]} {
    %c0 = arith.constant 0 : index
    %c0_0 = arith.constant 0 : index
    %0 = vector.load %arg1[%c0, %c0_0] : memref<128x256xbf16, #tpu.memory_space<vmem>>, vector<128x256xbf16>
    %c0_1 = arith.constant 0 : index
    %c0_2 = arith.constant 0 : index
    %1 = vector.load %arg2[%c0_1, %c0_2] : memref<256x128xbf16, #tpu.memory_space<vmem>>, vector<256x128xbf16>
    %cst = arith.constant dense<0.000000e+00> : vector<128x128xf32>
    %2 = tpu.matmul %0, %1, %cst {dimension_numbers = #tpu.dot_dimension_numbers<[1], [0], [0], [1], [0, 0, 1, 1], [], []>} : vector<128x256xbf16>, vector<256x128xbf16>, vector<128x128xf32> -> vector<128x128xf32>
    %cst_3 = arith.constant dense<0.000000e+00> : vector<128xf32>
    %3 = vector.multi_reduction <add>, %2, %cst_3 [0] : vector<128x128xf32> to vector<128xf32>
    %4 = vector.shape_cast %3 : vector<128xf32> to vector<1x128xf32>
    %5 = arith.mulf %2, %2 : vector<128x128xf32>
    %cst_4 = arith.constant dense<0.000000e+00> : vector<128xf32>
    %6 = vector.multi_reduction <add>, %5, %cst_4 [0] : vector<128x128xf32> to vector<128xf32>
    %7 = vector.shape_cast %6 : vector<128xf32> to vector<1x128xf32>
    %cst_5 = arith.constant 7.812500e-03 : f32
    %8 = vector.broadcast %cst_5 : f32 to vector<1x128xf32>
    %9 = arith.mulf %4, %8 : vector<1x128xf32>
    %cst_6 = arith.constant 7.812500e-03 : f32
    %10 = vector.broadcast %cst_6 : f32 to vector<1x128xf32>
    %11 = arith.mulf %7, %10 : vector<1x128xf32>
    %12 = arith.mulf %9, %9 : vector<1x128xf32>
    %13 = arith.subf %11, %12 : vector<1x128xf32>
    %cst_7 = arith.constant 0.000000e+00 : f32
    %14 = vector.broadcast %cst_7 : f32 to vector<1x128xf32>
    %15 = arith.maximumf %13, %14 : vector<1x128xf32>
    %c0_8 = arith.constant 0 : index
    %c0_9 = arith.constant 0 : index
    %16 = vector.load %arg3[%c0_8, %c0_9] : memref<1x128xf32, #tpu.memory_space<vmem>>, vector<1x128xf32>
    %cst_10 = arith.constant 9.99999974E-6 : f32
    %17 = vector.broadcast %cst_10 : f32 to vector<1x128xf32>
    %18 = arith.addf %15, %17 : vector<1x128xf32>
    %19 = math.rsqrt %18 : vector<1x128xf32>
    %20 = arith.mulf %16, %19 : vector<1x128xf32>
    %c0_11 = arith.constant 0 : index
    %c0_12 = arith.constant 0 : index
    %21 = vector.load %arg4[%c0_11, %c0_12] : memref<1x128xf32, #tpu.memory_space<vmem>>, vector<1x128xf32>
    %22 = arith.mulf %9, %20 : vector<1x128xf32>
    %23 = arith.subf %21, %22 : vector<1x128xf32>
    %24 = vector.broadcast %20 : vector<1x128xf32> to vector<128x128xf32>
    %25 = arith.mulf %2, %24 : vector<128x128xf32>
    %26 = vector.broadcast %23 : vector<1x128xf32> to vector<128x128xf32>
    %27 = arith.addf %25, %26 : vector<128x128xf32>
    %cst_13 = arith.constant 0.000000e+00 : f32
    %28 = vector.broadcast %cst_13 : f32 to vector<128x128xf32>
    %29 = arith.cmpf oge, %27, %28 : vector<128x128xf32>
    %cst_14 = arith.constant 2.000000e-01 : f32
    %30 = vector.broadcast %cst_14 : f32 to vector<128x128xf32>
    %31 = arith.mulf %30, %27 : vector<128x128xf32>
    %32 = arith.select %29, %27, %31 : vector<128x128xi1>, vector<128x128xf32>
    %33 = arith.truncf %32 : vector<128x128xf32> to vector<128x128xbf16>
    %c0_15 = arith.constant 0 : index
    %c0_16 = arith.constant 0 : index
    %34 = vector.load %arg5[%c0_15, %c0_16] : memref<128x128xbf16, #tpu.memory_space<vmem>>, vector<128x128xbf16>
    tpu.vector_store %arg5[%c0_15, %c0_16], %33 {strides = array<i32>} : memref<128x128xbf16, #tpu.memory_space<vmem>>, vector<128x128xbf16>,
    return
  }
  func.func @transform_0(%arg0: i32) -> (i32, i32) {
    %c0_i32 = arith.constant 0 : i32
    %c0_i32_0 = arith.constant 0 : i32
    %c0_i32_1 = arith.constant 0 : i32
    return %c0_i32, %c0_i32_0 : i32, i32
  }
  func.func @transform_1(%arg0: i32) -> (i32, i32) {
    %c0_i32 = arith.constant 0 : i32
    %c0_i32_0 = arith.constant 0 : i32
    %c0_i32_1 = arith.constant 0 : i32
    return %c0_i32, %c0_i32_0 : i32, i32
  }
  func.func @transform_2(%arg0: i32) -> (i32, i32) {
    %c0_i32 = arith.constant 0 : i32
    %c0_i32_0 = arith.constant 0 : i32
    %c0_i32_1 = arith.constant 0 : i32
    return %c0_i32, %c0_i32_0 : i32, i32
  }
  func.func @transform_3(%arg0: i32) -> (i32, i32) {
    %c0_i32 = arith.constant 0 : i32
    %c0_i32_0 = arith.constant 0 : i32
    %c0_i32_1 = arith.constant 0 : i32
    return %c0_i32, %c0_i32_0 : i32, i32
  }
  func.func @transform_4(%arg0: i32) -> (i32, i32) {
    %c0_i32 = arith.constant 0 : i32
    %c0_i32_0 = arith.constant 0 : i32
    %c0_i32_1 = arith.constant 0 : i32
    return %c0_i32, %c0_i32_0 : i32, i32
  }
}

module attributes {stable_mosaic.version = 11 : i64} {
  func.func @_mm_bn_lrelu_fused_kernel(%arg0: i32, %arg1: memref<32x512xbf16, #tpu.memory_space<vmem>>, %arg2: memref<512x128xbf16, #tpu.memory_space<vmem>>, %arg3: memref<1x128xf32, #tpu.memory_space<vmem>>, %arg4: memref<1x128xf32, #tpu.memory_space<vmem>>, %arg5: memref<32x128xbf16, #tpu.memory_space<vmem>>) attributes {dimension_semantics = [#tpu.dimension_semantics<parallel>], iteration_bounds = array<i64: 1>, scalar_prefetch = 0 : i64, scratch_operands = 0 : i64, tpu.core_type = #tpu.core_type<tc>, window_params = [{pipeline_mode = #tpu.pipeline_mode<synchronous>, transform_indices = @transform_0, window_bounds = array<i64: 32, 512>}, {pipeline_mode = #tpu.pipeline_mode<synchronous>, transform_indices = @transform_1, window_bounds = array<i64: 512, 128>}, {pipeline_mode = #tpu.pipeline_mode<synchronous>, transform_indices = @transform_2, window_bounds = array<i64: 1, 128>}, {pipeline_mode = #tpu.pipeline_mode<synchronous>, transform_indices = @transform_3, window_bounds = array<i64: 1, 128>}, {pipeline_mode = #tpu.pipeline_mode<synchronous>, transform_indices = @transform_4, window_bounds = array<i64: 32, 128>}]} {
    %c0 = arith.constant 0 : index
    %c0_0 = arith.constant 0 : index
    %0 = vector.load %arg1[%c0, %c0_0] : memref<32x512xbf16, #tpu.memory_space<vmem>>, vector<32x512xbf16>
    %c0_1 = arith.constant 0 : index
    %c0_2 = arith.constant 0 : index
    %1 = vector.load %arg2[%c0_1, %c0_2] : memref<512x128xbf16, #tpu.memory_space<vmem>>, vector<512x128xbf16>
    %cst = arith.constant dense<0.000000e+00> : vector<32x128xf32>
    %2 = tpu.matmul %0, %1, %cst {dimension_numbers = #tpu.dot_dimension_numbers<[1], [0], [0], [1], [0, 0, 1, 1], [], []>} : vector<32x512xbf16>, vector<512x128xbf16>, vector<32x128xf32> -> vector<32x128xf32>
    %cst_3 = arith.constant dense<0.000000e+00> : vector<128xf32>
    %3 = vector.multi_reduction <add>, %2, %cst_3 [0] : vector<32x128xf32> to vector<128xf32>
    %4 = vector.shape_cast %3 : vector<128xf32> to vector<1x128xf32>
    %5 = arith.mulf %2, %2 : vector<32x128xf32>
    %cst_4 = arith.constant dense<0.000000e+00> : vector<128xf32>
    %6 = vector.multi_reduction <add>, %5, %cst_4 [0] : vector<32x128xf32> to vector<128xf32>
    %7 = vector.shape_cast %6 : vector<128xf32> to vector<1x128xf32>
    %cst_5 = arith.constant 3.125000e-02 : f32
    %8 = vector.broadcast %cst_5 : f32 to vector<1x128xf32>
    %9 = arith.mulf %4, %8 : vector<1x128xf32>
    %cst_6 = arith.constant 3.125000e-02 : f32
    %10 = vector.broadcast %cst_6 : f32 to vector<1x128xf32>
    %11 = arith.mulf %7, %10 : vector<1x128xf32>
    %12 = arith.mulf %9, %9 : vector<1x128xf32>
    %13 = arith.subf %11, %12 : vector<1x128xf32>
    %cst_7 = arith.constant 0.000000e+00 : f32
    %14 = vector.broadcast %cst_7 : f32 to vector<1x128xf32>
    %15 = arith.maximumf %13, %14 : vector<1x128xf32>
    %c0_8 = arith.constant 0 : index
    %c0_9 = arith.constant 0 : index
    %16 = vector.load %arg3[%c0_8, %c0_9] : memref<1x128xf32, #tpu.memory_space<vmem>>, vector<1x128xf32>
    %cst_10 = arith.constant 9.99999974E-6 : f32
    %17 = vector.broadcast %cst_10 : f32 to vector<1x128xf32>
    %18 = arith.addf %15, %17 : vector<1x128xf32>
    %19 = math.rsqrt %18 : vector<1x128xf32>
    %20 = arith.mulf %16, %19 : vector<1x128xf32>
    %c0_11 = arith.constant 0 : index
    %c0_12 = arith.constant 0 : index
    %21 = vector.load %arg4[%c0_11, %c0_12] : memref<1x128xf32, #tpu.memory_space<vmem>>, vector<1x128xf32>
    %22 = arith.mulf %9, %20 : vector<1x128xf32>
    %23 = arith.subf %21, %22 : vector<1x128xf32>
    %24 = vector.broadcast %20 : vector<1x128xf32> to vector<32x128xf32>
    %25 = arith.mulf %2, %24 : vector<32x128xf32>
    %26 = vector.broadcast %23 : vector<1x128xf32> to vector<32x128xf32>
    %27 = arith.addf %25, %26 : vector<32x128xf32>
    %cst_13 = arith.constant 0.000000e+00 : f32
    %28 = vector.broadcast %cst_13 : f32 to vector<32x128xf32>
    %29 = arith.cmpf oge, %27, %28 : vector<32x128xf32>
    %cst_14 = arith.constant 2.000000e-01 : f32
    %30 = vector.broadcast %cst_14 : f32 to vector<32x128xf32>
    %31 = arith.mulf %30, %27 : vector<32x128xf32>
    %32 = arith.select %29, %27, %31 : vector<32x128xi1>, vector<32x128xf32>
    %33 = arith.truncf %32 : vector<32x128xf32> to vector<32x128xbf16>
    %c0_15 = arith.constant 0 : index
    %c0_16 = arith.constant 0 : index
    %34 = vector.load %arg5[%c0_15, %c0_16] : memref<32x128xbf16, #tpu.memory_space<vmem>>, vector<32x128xbf16>
    tpu.vector_store %arg5[%c0_15, %c0_16], %33 {strides = array<i32>} : memref<32x128xbf16, #tpu.memory_space<vmem>>, vector<32x128xbf16>,
    return
  }
  func.func @transform_0(%arg0: i32) -> (i32, i32) {
    %c0_i32 = arith.constant 0 : i32
    %c0_i32_0 = arith.constant 0 : i32
    %c0_i32_1 = arith.constant 0 : i32
    return %c0_i32, %c0_i32_0 : i32, i32
  }
  func.func @transform_1(%arg0: i32) -> (i32, i32) {
    %c0_i32 = arith.constant 0 : i32
    %c0_i32_0 = arith.constant 0 : i32
    %c0_i32_1 = arith.constant 0 : i32
    return %c0_i32, %c0_i32_0 : i32, i32
  }
  func.func @transform_2(%arg0: i32) -> (i32, i32) {
    %c0_i32 = arith.constant 0 : i32
    %c0_i32_0 = arith.constant 0 : i32
    %c0_i32_1 = arith.constant 0 : i32
    return %c0_i32, %c0_i32_0 : i32, i32
  }
  func.func @transform_3(%arg0: i32) -> (i32, i32) {
    %c0_i32 = arith.constant 0 : i32
    %c0_i32_0 = arith.constant 0 : i32
    %c0_i32_1 = arith.constant 0 : i32
    return %c0_i32, %c0_i32_0 : i32, i32
  }
  func.func @transform_4(%arg0: i32) -> (i32, i32) {
    %c0_i32 = arith.constant 0 : i32
    %c0_i32_0 = arith.constant 0 : i32
    %c0_i32_1 = arith.constant 0 : i32
    return %c0_i32, %c0_i32_0 : i32, i32
  }
}

</mosaic_0001>

<llo_original>
// kernel: discriminator_forward.4
$region0: #{discriminator_forward.4}
  #allocation0 [shape = 'u32[]', space=smem, size = 0x4, offset = 0x4, fixed_abs, tag = 'smem constant byte address 0x4 - core index']
  #allocation1 [shape = 'u32[144,128]{1,0:T(1,128)}', space=vmem, size = 0x12000, scoped, tag = 'internal scratch']
  %s0 = inlined_call_operand.vmem [shape: bf16[2048,128], index: 0, kind: input, shape index: {}]
  %s1 = inlined_call_operand.vmem [shape: bf16[128,128], index: 1, kind: input, shape index: {}]
  %s2 = inlined_call_operand.vmem [shape: f32[1,128], index: 2, kind: input, shape index: {}]
  %s3 = inlined_call_operand.vmem [shape: bf16[2048,128], index: 3, kind: output, shape index: {}]
  %s4 = sld [smem:[#allocation0]]
  $region45: #{discriminator_forward.4} parent=0
    _
  %s6 = ssub.s32 1, %s4
  %s7 = scalar_select 0, %s6, %s4
  loop: start=0, step=1, limit=4
  $region2: #{discriminator_forward.4} parent=0 // loop_pre_header
    _
  $region3: #{discriminator_forward.4} parent=0 // loop_header
    %s9 = sphi 0, %s13
    %p10 = scmp.ge.s32.totalorder %s9, 4
    %s19 = sphi 0, %s21
    %s22 = sphi 0, %s19
    %s23 = sphi 0, %s22
    %s39 = sphi 0, %s23
    %s43 = sphi 0, %s43
    %s45 = sphi 0, %s43
    %s46 = sphi 0, %s45
    %s60 = sphi 0, %s46
    %s64 = sphi 0, %s64
    %s66 = sphi 0, %s64
    %s67 = sphi 0, %s66
    %s81 = sphi 0, %s67
    %s87 = sphi 0, %s89
    %s90 = sphi 0, %s87
    %s91 = sphi 0, %s90
    %s107 = sphi 0, %s91
  $region4: #{discriminator_forward.4} parent=0 // loop_header_branch
    %12 = sbr.rel (%p10) target = $region8
  $region5: #{discriminator_forward.4} parent=0 // loop_body
    %s14 = ssub.s32 %s9, 1
    %s15 = ssub.s32 %s9, 2
    %s16 = sadd.s32 %s9, 1
    %s17 = ssub.s32 %s9, %s16
    %p18 = scmp.eq.s32.totalorder %s17, 0
    %s20 = sadd.s32 %s19, 1
    %s21 = scalar_select %p18, %s19, %s20
    %p24 = pneg %p18
    %p25 = scmp.eq.s32.totalorder %s9, 1
    %p26 = por %p24, %p25
    %p27 = scmp.ne.s32.totalorder %s19, %s22
    %p28 = scmp.eq.s32.totalorder %s9, 0
    %p29 = por %p27, %p28
    %p30 = scmp.ne.s32.totalorder %s19, %s22
    %p31 = scmp.eq.s32.totalorder %s14, 1
    %p32 = por %p30, %p31
    %p33 = scmp.ne.s32.totalorder %s22, %s23
    %p34 = scmp.eq.s32.totalorder %s14, 0
    %p35 = por %p33, %p34
    %p36 = scmp.ne.s32.totalorder %s22, %s23
    %p37 = scmp.eq.s32.totalorder %s15, 1
    %p38 = por %p36, %p37
    %p40 = scmp.ne.s32.totalorder %s23, %s39
    %p41 = scmp.eq.s32.totalorder %s15, 0
    %p42 = por %p40, %p41
    %s44 = sadd.s32 %s43, 1
    %p47 = scmp.eq.s32.totalorder %s9, 1
    %p48 = scmp.ne.s32.totalorder %s43, %s45
    %p49 = scmp.eq.s32.totalorder %s9, 0
    %p50 = por %p48, %p49
    %p51 = scmp.ne.s32.totalorder %s43, %s45
    %p52 = scmp.eq.s32.totalorder %s14, 1
    %p53 = por %p51, %p52
    %p54 = scmp.ne.s32.totalorder %s45, %s46
    %p55 = scmp.eq.s32.totalorder %s14, 0
    %p56 = por %p54, %p55
    %p57 = scmp.ne.s32.totalorder %s45, %s46
    %p58 = scmp.eq.s32.totalorder %s15, 1
    %p59 = por %p57, %p58
    %p61 = scmp.ne.s32.totalorder %s46, %s60
    %p62 = scmp.eq.s32.totalorder %s15, 0
    %p63 = por %p61, %p62
    %s65 = sadd.s32 %s64, 1
    %p68 = scmp.eq.s32.totalorder %s9, 1
    %p69 = scmp.ne.s32.totalorder %s64, %s66
    %p70 = scmp.eq.s32.totalorder %s9, 0
    %p71 = por %p69, %p70
    %p72 = scmp.ne.s32.totalorder %s64, %s66
    %p73 = scmp.eq.s32.totalorder %s14, 1
    %p74 = por %p72, %p73
    %p75 = scmp.ne.s32.totalorder %s66, %s67
    %p76 = scmp.eq.s32.totalorder %s14, 0
    %p77 = por %p75, %p76
    %p78 = scmp.ne.s32.totalorder %s66, %s67
    %p79 = scmp.eq.s32.totalorder %s15, 1
    %p80 = por %p78, %p79
    %p82 = scmp.ne.s32.totalorder %s67, %s81
    %p83 = scmp.eq.s32.totalorder %s15, 0
    %p84 = por %p82, %p83
    %s85 = ssub.s32 %s9, %s16
    %p86 = scmp.eq.s32.totalorder %s85, 0
    %s88 = sadd.s32 %s87, 1
    %s89 = scalar_select %p86, %s87, %s88
    %p92 = pneg %p86
    %p93 = scmp.eq.s32.totalorder %s9, 1
    %p94 = por %p92, %p93
    %p95 = scmp.ne.s32.totalorder %s87, %s90
    %p96 = scmp.eq.s32.totalorder %s9, 0
    %p97 = por %p95, %p96
    %p98 = scmp.ne.s32.totalorder %s87, %s90
    %p99 = scmp.eq.s32.totalorder %s14, 1
    %p100 = por %p98, %p99
    %p101 = scmp.ne.s32.totalorder %s90, %s91
    %p102 = scmp.eq.s32.totalorder %s14, 0
    %p103 = por %p101, %p102
    %p104 = scmp.ne.s32.totalorder %s90, %s91
    %p105 = scmp.eq.s32.totalorder %s15, 1
    %p106 = por %p104, %p105
    %p108 = scmp.ne.s32.totalorder %s91, %s107
    %p109 = scmp.eq.s32.totalorder %s15, 0
    %p110 = por %p108, %p109
    %p111 = scmp.le.s32.totalorder 1, %s9
    %p112 = scmp.lt.s32.totalorder %s9, 3
    %p113 = pnand %p111, %p112
    %p114 = pneg %p113
    // Predicated region
    $region9: #{discriminator_forward.4} parent=5 // pred_check
      _
    $region10: #{discriminator_forward.4} parent=5 // pred_check_branch
      %116 = sbr.rel (%p113) target = $region12
    $region11: #{discriminator_forward.4} parent=5 // pred_region
      %s117 = ssub.s32 %s9, 1
      // Predicated region
      $region13: #{discriminator_forward.4} parent=11 // pred_check
        %p118 = pneg %p56
      $region14: #{discriminator_forward.4} parent=11 // pred_check_branch
        %120 = sbr.rel (%p118) target = $region16
      $region15: #{discriminator_forward.4} parent=11 // pred_region
        _
      $region16: #{discriminator_forward.4} parent=11 // pred_fallthru
        _
      // Predicated region
      $region17: #{discriminator_forward.4} parent=11 // pred_check
        %p121 = pneg %p77
      $region18: #{discriminator_forward.4} parent=11 // pred_check_branch
        %123 = sbr.rel (%p121) target = $region20
      $region19: #{discriminator_forward.4} parent=11 // pred_region
        _
      $region20: #{discriminator_forward.4} parent=11 // pred_fallthru
        _
    $region12: #{discriminator_forward.4} parent=5 // pred_fallthru
      _
    %p124 = scmp.lt.s32.totalorder %s9, 2
    // Predicated region
    $region21: #{discriminator_forward.4} parent=5 // pred_check
      %p125 = pneg %p124
    $region22: #{discriminator_forward.4} parent=5 // pred_check_branch
      %127 = sbr.rel (%p125) target = $region24
    $region23: #{discriminator_forward.4} parent=5 // pred_region
      // Predicated region
      $region25: #{discriminator_forward.4} parent=23 // pred_check
        %p128 = pneg %p29
      $region26: #{discriminator_forward.4} parent=23 // pred_check_branch
        %130 = sbr.rel (%p128) target = $region28
      $region27: #{discriminator_forward.4} parent=23 // pred_region
        %s131 = smul.u32 128, %s9
        %p132 = scmp.lt.s32.totalorder %s131, 255
        %s133 = scalar_select %p132, %s131, 255
        %s134 = smul.addr %s133, 4
        %s135 = scalar_lea.vmem %s0, %s134
        %s136 = smul.u32 128, %s9
      $region28: #{discriminator_forward.4} parent=23 // pred_fallthru
        _
    $region24: #{discriminator_forward.4} parent=5 // pred_fallthru
      _
    %p137 = scmp.le.s32.totalorder 1, %s9
    %p138 = scmp.lt.s32.totalorder %s9, 3
    %p139 = pnand %p137, %p138
    %p140 = pneg %p139
    // Predicated region
    $region29: #{discriminator_forward.4} parent=5 // pred_check
      _
    $region30: #{discriminator_forward.4} parent=5 // pred_check_branch
      %142 = sbr.rel (%p139) target = $region32
    $region31: #{discriminator_forward.4} parent=5 // pred_region
      %s143 = ssub.s32 %s9, 1
      %s144 = smul.u32 128, %s14
      %p145 = scmp.lt.s32.totalorder %s144, 255
      %s146 = scalar_select %p145, %s144, 255
      %s147 = smul.addr %s146, 4
      %s148 = scalar_lea.vmem %s0, %s147
      %p149 = pneg %p35
      %p150 = pneg %p32
      %p151 = pneg %p56
      %p152 = pneg %p53
      %p153 = pneg %p77
      %p154 = pneg %p74
      %p155 = pneg %p103
      %p156 = pneg %p100
      %s157 = smul.u32 128, %s14
      %p158 = scmp.lt.s32.totalorder %s157, 255
      %s159 = scalar_select %p158, %s157, 255
      %s160 = smul.addr %s159, 4
      %s161 = scalar_lea.vmem %s3, %s160
      %s162 = smul.u32 128, %s14
      %p163 = scmp.lt.s32.totalorder %s162, 255
      %s164 = scalar_select %p163, %s162, 255
      %s165 = smul.addr %s164, 4
      %s166 = scalar_lea.vmem %s0, %s165
      %s167 = smul.u32 128, %s14
      %s168 = smul.u32 128, %s14
      %p169 = scmp.lt.s32.totalorder %s168, 255
      %s170 = scalar_select %p169, %s168, 255
      %s171 = smul.addr %s170, 4
      %s172 = scalar_lea.vmem %s3, %s171
      %s173 = smul.u32 128, %s14
      %v175 = vld [vmem:[%s166] sm:$0xf]
      %v176 = vld [vmem:[%s166 + $0x4] sm:$0xf]
      %v177 = vld [vmem:[%s166 + $0x8] sm:$0xf]
      %v178 = vld [vmem:[%s166 + $0xc] sm:$0xf]
      %v179 = vld [vmem:[%s166 + $0x10] sm:$0xf]
      %v180 = vld [vmem:[%s166 + $0x14] sm:$0xf]
      %v181 = vld [vmem:[%s166 + $0x18] sm:$0xf]
      %v182 = vld [vmem:[%s166 + $0x1c] sm:$0xf]
      %v183 = vld [vmem:[%s166 + $0x20] sm:$0xf]
      %v184 = vld [vmem:[%s166 + $0x24] sm:$0xf]
      %v185 = vld [vmem:[%s166 + $0x28] sm:$0xf]
      %v186 = vld [vmem:[%s166 + $0x2c] sm:$0xf]
      %v187 = vld [vmem:[%s166 + $0x30] sm:$0xf]
      %v188 = vld [vmem:[%s166 + $0x34] sm:$0xf]
      %v189 = vld [vmem:[%s166 + $0x38] sm:$0xf]
      %v190 = vld [vmem:[%s166 + $0x3c] sm:$0xf]
      %v191 = vld [vmem:[%s166 + $0x40] sm:$0xf]
      %v192 = vld [vmem:[%s166 + $0x44] sm:$0xf]
      %v193 = vld [vmem:[%s166 + $0x48] sm:$0xf]
      %v194 = vld [vmem:[%s166 + $0x4c] sm:$0xf]
      %v195 = vld [vmem:[%s166 + $0x50] sm:$0xf]
      %v196 = vld [vmem:[%s166 + $0x54] sm:$0xf]
      %v197 = vld [vmem:[%s166 + $0x58] sm:$0xf]
      %v198 = vld [vmem:[%s166 + $0x5c] sm:$0xf]
      %v199 = vld [vmem:[%s166 + $0x60] sm:$0xf]
      %v200 = vld [vmem:[%s166 + $0x64] sm:$0xf]
      %v201 = vld [vmem:[%s166 + $0x68] sm:$0xf]
      %v202 = vld [vmem:[%s166 + $0x6c] sm:$0xf]
      %v203 = vld [vmem:[%s166 + $0x70] sm:$0xf]
      %v204 = vld [vmem:[%s166 + $0x74] sm:$0xf]
      %v205 = vld [vmem:[%s166 + $0x78] sm:$0xf]
      %v206 = vld [vmem:[%s166 + $0x7c] sm:$0xf]
      %v207 = vld [vmem:[%s166 + $0x80] sm:$0xf]
      %v208 = vld [vmem:[%s166 + $0x84] sm:$0xf]
      %v209 = vld [vmem:[%s166 + $0x88] sm:$0xf]
      %v210 = vld [vmem:[%s166 + $0x8c] sm:$0xf]
      %v211 = vld [vmem:[%s166 + $0x90] sm:$0xf]
      %v212 = vld [vmem:[%s166 + $0x94] sm:$0xf]
      %v213 = vld [vmem:[%s166 + $0x98] sm:$0xf]
      %v214 = vld [vmem:[%s166 + $0x9c] sm:$0xf]
      %v215 = vld [vmem:[%s166 + $0xa0] sm:$0xf]
      %v216 = vld [vmem:[%s166 + $0xa4] sm:$0xf]
      %v217 = vld [vmem:[%s166 + $0xa8] sm:$0xf]
      %v218 = vld [vmem:[%s166 + $0xac] sm:$0xf]
      %v219 = vld [vmem:[%s166 + $0xb0] sm:$0xf]
      %v220 = vld [vmem:[%s166 + $0xb4] sm:$0xf]
      %v221 = vld [vmem:[%s166 + $0xb8] sm:$0xf]
      %v222 = vld [vmem:[%s166 + $0xbc] sm:$0xf]
      %v223 = vld [vmem:[%s166 + $0xc0] sm:$0xf]
      %v224 = vld [vmem:[%s166 + $0xc4] sm:$0xf]
      %v225 = vld [vmem:[%s166 + $0xc8] sm:$0xf]
      %v226 = vld [vmem:[%s166 + $0xcc] sm:$0xf]
      %v227 = vld [vmem:[%s166 + $0xd0] sm:$0xf]
      %v228 = vld [vmem:[%s166 + $0xd4] sm:$0xf]
      %v229 = vld [vmem:[%s166 + $0xd8] sm:$0xf]
      %v230 = vld [vmem:[%s166 + $0xdc] sm:$0xf]
      %v231 = vld [vmem:[%s166 + $0xe0] sm:$0xf]
      %v232 = vld [vmem:[%s166 + $0xe4] sm:$0xf]
      %v233 = vld [vmem:[%s166 + $0xe8] sm:$0xf]
      %v234 = vld [vmem:[%s166 + $0xec] sm:$0xf]
      %v235 = vld [vmem:[%s166 + $0xf0] sm:$0xf]
      %v236 = vld [vmem:[%s166 + $0xf4] sm:$0xf]
      %v237 = vld [vmem:[%s166 + $0xf8] sm:$0xf]
      %v238 = vld [vmem:[%s166 + $0xfc] sm:$0xf]
      %v239 = vld [vmem:[%s166 + $0x100] sm:$0xf]
      %v240 = vld [vmem:[%s166 + $0x104] sm:$0xf]
      %v241 = vld [vmem:[%s166 + $0x108] sm:$0xf]
      %v242 = vld [vmem:[%s166 + $0x10c] sm:$0xf]
      %v243 = vld [vmem:[%s166 + $0x110] sm:$0xf]
      %v244 = vld [vmem:[%s166 + $0x114] sm:$0xf]
      %v245 = vld [vmem:[%s166 + $0x118] sm:$0xf]
      %v246 = vld [vmem:[%s166 + $0x11c] sm:$0xf]
      %v247 = vld [vmem:[%s166 + $0x120] sm:$0xf]
      %v248 = vld [vmem:[%s166 + $0x124] sm:$0xf]
      %v249 = vld [vmem:[%s166 + $0x128] sm:$0xf]
      %v250 = vld [vmem:[%s166 + $0x12c] sm:$0xf]
      %v251 = vld [vmem:[%s166 + $0x130] sm:$0xf]
      %v252 = vld [vmem:[%s166 + $0x134] sm:$0xf]
      %v253 = vld [vmem:[%s166 + $0x138] sm:$0xf]
      %v254 = vld [vmem:[%s166 + $0x13c] sm:$0xf]
      %v255 = vld [vmem:[%s166 + $0x140] sm:$0xf]
      %v256 = vld [vmem:[%s166 + $0x144] sm:$0xf]
      %v257 = vld [vmem:[%s166 + $0x148] sm:$0xf]
      %v258 = vld [vmem:[%s166 + $0x14c] sm:$0xf]
      %v259 = vld [vmem:[%s166 + $0x150] sm:$0xf]
      %v260 = vld [vmem:[%s166 + $0x154] sm:$0xf]
      %v261 = vld [vmem:[%s166 + $0x158] sm:$0xf]
      %v262 = vld [vmem:[%s166 + $0x15c] sm:$0xf]
      %v263 = vld [vmem:[%s166 + $0x160] sm:$0xf]
      %v264 = vld [vmem:[%s166 + $0x164] sm:$0xf]
      %v265 = vld [vmem:[%s166 + $0x168] sm:$0xf]
      %v266 = vld [vmem:[%s166 + $0x16c] sm:$0xf]
      %v267 = vld [vmem:[%s166 + $0x170] sm:$0xf]
      %v268 = vld [vmem:[%s166 + $0x174] sm:$0xf]
      %v269 = vld [vmem:[%s166 + $0x178] sm:$0xf]
      %v270 = vld [vmem:[%s166 + $0x17c] sm:$0xf]
      %v271 = vld [vmem:[%s166 + $0x180] sm:$0xf]
      %v272 = vld [vmem:[%s166 + $0x184] sm:$0xf]
      %v273 = vld [vmem:[%s166 + $0x188] sm:$0xf]
      %v274 = vld [vmem:[%s166 + $0x18c] sm:$0xf]
      %v275 = vld [vmem:[%s166 + $0x190] sm:$0xf]
      %v276 = vld [vmem:[%s166 + $0x194] sm:$0xf]
      %v277 = vld [vmem:[%s166 + $0x198] sm:$0xf]
      %v278 = vld [vmem:[%s166 + $0x19c] sm:$0xf]
      %v279 = vld [vmem:[%s166 + $0x1a0] sm:$0xf]
      %v280 = vld [vmem:[%s166 + $0x1a4] sm:$0xf]
      %v281 = vld [vmem:[%s166 + $0x1a8] sm:$0xf]
      %v282 = vld [vmem:[%s166 + $0x1ac] sm:$0xf]
      %v283 = vld [vmem:[%s166 + $0x1b0] sm:$0xf]
      %v284 = vld [vmem:[%s166 + $0x1b4] sm:$0xf]
      %v285 = vld [vmem:[%s166 + $0x1b8] sm:$0xf]
      %v286 = vld [vmem:[%s166 + $0x1bc] sm:$0xf]
      %v287 = vld [vmem:[%s166 + $0x1c0] sm:$0xf]
      %v288 = vld [vmem:[%s166 + $0x1c4] sm:$0xf]
      %v289 = vld [vmem:[%s166 + $0x1c8] sm:$0xf]
      %v290 = vld [vmem:[%s166 + $0x1cc] sm:$0xf]
      %v291 = vld [vmem:[%s166 + $0x1d0] sm:$0xf]
      %v292 = vld [vmem:[%s166 + $0x1d4] sm:$0xf]
      %v293 = vld [vmem:[%s166 + $0x1d8] sm:$0xf]
      %v294 = vld [vmem:[%s166 + $0x1dc] sm:$0xf]
      %v295 = vld [vmem:[%s166 + $0x1e0] sm:$0xf]
      %v296 = vld [vmem:[%s166 + $0x1e4] sm:$0xf]
      %v297 = vld [vmem:[%s166 + $0x1e8] sm:$0xf]
      %v298 = vld [vmem:[%s166 + $0x1ec] sm:$0xf]
      %v299 = vld [vmem:[%s166 + $0x1f0] sm:$0xf]
      %v300 = vld [vmem:[%s166 + $0x1f4] sm:$0xf]
      %v301 = vld [vmem:[%s166 + $0x1f8] sm:$0xf]
      %v302 = vld [vmem:[%s166 + $0x1fc] sm:$0xf]
      %v303 = vld [vmem:[%s1] sm:$0xf]
      %v304 = vld [vmem:[%s1 + $0x4] sm:$0xf]
      %v305 = vld [vmem:[%s1 + $0x8] sm:$0xf]
      %v306 = vld [vmem:[%s1 + $0xc] sm:$0xf]
      %v307 = vld [vmem:[%s1 + $0x10] sm:$0xf]
      %v308 = vld [vmem:[%s1 + $0x14] sm:$0xf]
      %v309 = vld [vmem:[%s1 + $0x18] sm:$0xf]
      %v310 = vld [vmem:[%s1 + $0x1c] sm:$0xf]
      %v311 = vld [vmem:[%s1 + $0x20] sm:$0xf]
      %v312 = vld [vmem:[%s1 + $0x24] sm:$0xf]
      %v313 = vld [vmem:[%s1 + $0x28] sm:$0xf]
      %v314 = vld [vmem:[%s1 + $0x2c] sm:$0xf]
      %v315 = vld [vmem:[%s1 + $0x30] sm:$0xf]
      %v316 = vld [vmem:[%s1 + $0x34] sm:$0xf]
      %v317 = vld [vmem:[%s1 + $0x38] sm:$0xf]
      %v318 = vld [vmem:[%s1 + $0x3c] sm:$0xf]
      %v319 = vld [vmem:[%s2] sm:$0x1]
      %v321 = vlaneseq
      %v322 = vshrl.u32 %v321, 7
      %v323 = vsub.s32 0, %v322
      %v324 = vrot.slane %v319, %v323
      %v454 = vunpack.c.l.b16 %v175
      %v455 = vunpack.c.l.b16 %v176
      %v456 = vunpack.c.l.b16 %v177
      %v457 = vunpack.c.l.b16 %v178
      %v458 = vunpack.c.l.b16 %v179
      %v459 = vunpack.c.l.b16 %v180
      %v460 = vunpack.c.l.b16 %v181
      %v461 = vunpack.c.l.b16 %v182
      %v462 = vunpack.c.l.b16 %v183
      %v463 = vunpack.c.l.b16 %v184
      %v464 = vunpack.c.l.b16 %v185
      %v465 = vunpack.c.l.b16 %v186
      %v466 = vunpack.c.l.b16 %v187
      %v467 = vunpack.c.l.b16 %v188
      %v468 = vunpack.c.l.b16 %v189
      %v469 = vunpack.c.l.b16 %v190
      %v470 = vunpack.c.l.b16 %v191
      %v471 = vunpack.c.l.b16 %v192
      %v472 = vunpack.c.l.b16 %v193
      %v473 = vunpack.c.l.b16 %v194
      %v474 = vunpack.c.l.b16 %v195
      %v475 = vunpack.c.l.b16 %v196
      %v476 = vunpack.c.l.b16 %v197
      %v477 = vunpack.c.l.b16 %v198
      %v478 = vunpack.c.l.b16 %v199
      %v479 = vunpack.c.l.b16 %v200
      %v480 = vunpack.c.l.b16 %v201
      %v481 = vunpack.c.l.b16 %v202
      %v482 = vunpack.c.l.b16 %v203
      %v483 = vunpack.c.l.b16 %v204
      %v484 = vunpack.c.l.b16 %v205
      %v485 = vunpack.c.l.b16 %v206
      %v486 = vunpack.c.l.b16 %v207
      %v487 = vunpack.c.l.b16 %v208
      %v488 = vunpack.c.l.b16 %v209
      %v489 = vunpack.c.l.b16 %v210
      %v490 = vunpack.c.l.b16 %v211
      %v491 = vunpack.c.l.b16 %v212
      %v492 = vunpack.c.l.b16 %v213
      %v493 = vunpack.c.l.b16 %v214
      %v494 = vunpack.c.l.b16 %v215
      %v495 = vunpack.c.l.b16 %v216
      %v496 = vunpack.c.l.b16 %v217
      %v497 = vunpack.c.l.b16 %v218
      %v498 = vunpack.c.l.b16 %v219
      %v499 = vunpack.c.l.b16 %v220
      %v500 = vunpack.c.l.b16 %v221
      %v501 = vunpack.c.l.b16 %v222
      %v502 = vunpack.c.l.b16 %v223
      %v503 = vunpack.c.l.b16 %v224
      %v504 = vunpack.c.l.b16 %v225
      %v505 = vunpack.c.l.b16 %v226
      %v506 = vunpack.c.l.b16 %v227
      %v507 = vunpack.c.l.b16 %v228
      %v508 = vunpack.c.l.b16 %v229
      %v509 = vunpack.c.l.b16 %v230
      %v510 = vunpack.c.l.b16 %v231
      %v511 = vunpack.c.l.b16 %v232
      %v512 = vunpack.c.l.b16 %v233
      %v513 = vunpack.c.l.b16 %v234
      %v514 = vunpack.c.l.b16 %v235
      %v515 = vunpack.c.l.b16 %v236
      %v516 = vunpack.c.l.b16 %v237
      %v517 = vunpack.c.l.b16 %v238
      %v518 = vunpack.c.l.b16 %v239
      %v519 = vunpack.c.l.b16 %v240
      %v520 = vunpack.c.l.b16 %v241
      %v521 = vunpack.c.l.b16 %v242
      %v522 = vunpack.c.l.b16 %v243
      %v523 = vunpack.c.l.b16 %v244
      %v524 = vunpack.c.l.b16 %v245
      %v525 = vunpack.c.l.b16 %v246
      %v526 = vunpack.c.l.b16 %v247
      %v527 = vunpack.c.l.b16 %v248
      %v528 = vunpack.c.l.b16 %v249
      %v529 = vunpack.c.l.b16 %v250
      %v530 = vunpack.c.l.b16 %v251
      %v531 = vunpack.c.l.b16 %v252
      %v532 = vunpack.c.l.b16 %v253
      %v533 = vunpack.c.l.b16 %v254
      %v534 = vunpack.c.l.b16 %v255
      %v535 = vunpack.c.l.b16 %v256
      %v536 = vunpack.c.l.b16 %v257
      %v537 = vunpack.c.l.b16 %v258
      %v538 = vunpack.c.l.b16 %v259
      %v539 = vunpack.c.l.b16 %v260
      %v540 = vunpack.c.l.b16 %v261
      %v541 = vunpack.c.l.b16 %v262
      %v542 = vunpack.c.l.b16 %v263
      %v543 = vunpack.c.l.b16 %v264
      %v544 = vunpack.c.l.b16 %v265
      %v545 = vunpack.c.l.b16 %v266
      %v546 = vunpack.c.l.b16 %v267
      %v547 = vunpack.c.l.b16 %v268
      %v548 = vunpack.c.l.b16 %v269
      %v549 = vunpack.c.l.b16 %v270
      %v550 = vunpack.c.l.b16 %v271
      %v551 = vunpack.c.l.b16 %v272
      %v552 = vunpack.c.l.b16 %v273
      %v553 = vunpack.c.l.b16 %v274
      %v554 = vunpack.c.l.b16 %v275
      %v555 = vunpack.c.l.b16 %v276
      %v556 = vunpack.c.l.b16 %v277
      %v557 = vunpack.c.l.b16 %v278
      %v558 = vunpack.c.l.b16 %v279
      %v559 = vunpack.c.l.b16 %v280
      %v560 = vunpack.c.l.b16 %v281
      %v561 = vunpack.c.l.b16 %v282
      %v562 = vunpack.c.l.b16 %v283
      %v563 = vunpack.c.l.b16 %v284
      %v564 = vunpack.c.l.b16 %v285
      %v565 = vunpack.c.l.b16 %v286
      %v566 = vunpack.c.l.b16 %v287
      %v567 = vunpack.c.l.b16 %v288
      %v568 = vunpack.c.l.b16 %v289
      %v569 = vunpack.c.l.b16 %v290
      %v570 = vunpack.c.l.b16 %v291
      %v571 = vunpack.c.l.b16 %v292
      %v572 = vunpack.c.l.b16 %v293
      %v573 = vunpack.c.l.b16 %v294
      %v574 = vunpack.c.l.b16 %v295
      %v575 = vunpack.c.l.b16 %v296
      %v576 = vunpack.c.l.b16 %v297
      %v577 = vunpack.c.l.b16 %v298
      %v578 = vunpack.c.l.b16 %v299
      %v579 = vunpack.c.l.b16 %v300
      %v580 = vunpack.c.l.b16 %v301
      %v581 = vunpack.c.l.b16 %v302
      %v582 = vpack.c.b16 %v455, %v454
      %v583 = vpack.c.b16 %v457, %v456
      %v584 = vpack.c.b16 %v459, %v458
      %v585 = vpack.c.b16 %v461, %v460
      %v586 = vpack.c.b16 %v463, %v462
      %v587 = vpack.c.b16 %v465, %v464
      %v588 = vpack.c.b16 %v467, %v466
      %v589 = vpack.c.b16 %v469, %v468
      %v590 = vpack.c.b16 %v471, %v470
      %v591 = vpack.c.b16 %v473, %v472
      %v592 = vpack.c.b16 %v475, %v474
      %v593 = vpack.c.b16 %v477, %v476
      %v594 = vpack.c.b16 %v479, %v478
      %v595 = vpack.c.b16 %v481, %v480
      %v596 = vpack.c.b16 %v483, %v482
      %v597 = vpack.c.b16 %v485, %v484
      %v598 = vpack.c.b16 %v487, %v486
      %v599 = vpack.c.b16 %v489, %v488
      %v600 = vpack.c.b16 %v491, %v490
      %v601 = vpack.c.b16 %v493, %v492
      %v602 = vpack.c.b16 %v495, %v494
      %v603 = vpack.c.b16 %v497, %v496
      %v604 = vpack.c.b16 %v499, %v498
      %v605 = vpack.c.b16 %v501, %v500
      %v606 = vpack.c.b16 %v503, %v502
      %v607 = vpack.c.b16 %v505, %v504
      %v608 = vpack.c.b16 %v507, %v506
      %v609 = vpack.c.b16 %v509, %v508
      %v610 = vpack.c.b16 %v511, %v510
      %v611 = vpack.c.b16 %v513, %v512
      %v612 = vpack.c.b16 %v515, %v514
      %v613 = vpack.c.b16 %v517, %v516
      %v614 = vpack.c.b16 %v519, %v518
      %v615 = vpack.c.b16 %v521, %v520
      %v616 = vpack.c.b16 %v523, %v522
      %v617 = vpack.c.b16 %v525, %v524
      %v618 = vpack.c.b16 %v527, %v526
      %v619 = vpack.c.b16 %v529, %v528
      %v620 = vpack.c.b16 %v531, %v530
      %v621 = vpack.c.b16 %v533, %v532
      %v622 = vpack.c.b16 %v535, %v534
      %v623 = vpack.c.b16 %v537, %v536
      %v624 = vpack.c.b16 %v539, %v538
      %v625 = vpack.c.b16 %v541, %v540
      %v626 = vpack.c.b16 %v543, %v542
      %v627 = vpack.c.b16 %v545, %v544
      %v628 = vpack.c.b16 %v547, %v546
      %v629 = vpack.c.b16 %v549, %v548
      %v630 = vpack.c.b16 %v551, %v550
      %v631 = vpack.c.b16 %v553, %v552
      %v632 = vpack.c.b16 %v555, %v554
      %v633 = vpack.c.b16 %v557, %v556
      %v634 = vpack.c.b16 %v559, %v558
      %v635 = vpack.c.b16 %v561, %v560
      %v636 = vpack.c.b16 %v563, %v562
      %v637 = vpack.c.b16 %v565, %v564
      %v638 = vpack.c.b16 %v567, %v566
      %v639 = vpack.c.b16 %v569, %v568
      %v640 = vpack.c.b16 %v571, %v570
      %v641 = vpack.c.b16 %v573, %v572
      %v642 = vpack.c.b16 %v575, %v574
      %v643 = vpack.c.b16 %v577, %v576
      %v644 = vpack.c.b16 %v579, %v578
      %v645 = vpack.c.b16 %v581, %v580
      %v726 = vunpack.c.l.b16 %v303
      %v727 = vunpack.c.l.b16 %v304
      %v728 = vunpack.c.l.b16 %v305
      %v729 = vunpack.c.l.b16 %v306
      %v730 = vunpack.c.l.b16 %v307
      %v731 = vunpack.c.l.b16 %v308
      %v732 = vunpack.c.l.b16 %v309
      %v733 = vunpack.c.l.b16 %v310
      %v734 = vunpack.c.l.b16 %v311
      %v735 = vunpack.c.l.b16 %v312
      %v736 = vunpack.c.l.b16 %v313
      %v737 = vunpack.c.l.b16 %v314
      %v738 = vunpack.c.l.b16 %v315
      %v739 = vunpack.c.l.b16 %v316
      %v740 = vunpack.c.l.b16 %v317
      %v741 = vunpack.c.l.b16 %v318
      %v742 = vpack.c.b16 %v727, %v726
      %v743 = vpack.c.b16 %v729, %v728
      %v744 = vpack.c.b16 %v731, %v730
      %v745 = vpack.c.b16 %v733, %v732
      %v746 = vpack.c.b16 %v735, %v734
      %v747 = vpack.c.b16 %v737, %v736
      %v748 = vpack.c.b16 %v739, %v738
      %v749 = vpack.c.b16 %v741, %v740
      %758 = vmatprep.subr.bf16.mxu0 0
      %759 = vmatpush1.bf16.msra.mxu0 %v742
      %760 = vmatprep.subr.bf16.mxu0 0
      %761 = vmatpush1.bf16.msra.mxu0 %v743
      %762 = vmatprep.subr.bf16.mxu0 0
      %763 = vmatpush1.bf16.msra.mxu0 %v744
      %764 = vmatprep.subr.bf16.mxu0 0
      %765 = vmatpush1.bf16.msra.mxu0 %v745
      %766 = vmatprep.subr.bf16.mxu0 0
      %767 = vmatpush1.bf16.msra.mxu0 %v746
      %768 = vmatprep.subr.bf16.mxu0 0
      %769 = vmatpush1.bf16.msra.mxu0 %v747
      %770 = vmatprep.subr.bf16.mxu0 0
      %771 = vmatpush1.bf16.msra.mxu0 %v748
      %772 = vmatprep.subr.bf16.mxu0 0
      %773 = vmatpush1.bf16.msra.mxu0 %v749
      %774 = vmatprep.subr.bf16.mxu0 0
      %775 = vmatpush1.bf16.msra.mxu0 0
      %776 = vmatprep.subr.bf16.mxu0 0
      %777 = vmatpush1.bf16.msra.mxu0 0
      %778 = vmatprep.subr.bf16.mxu0 0
      %779 = vmatpush1.bf16.msra.mxu0 0
      %780 = vmatprep.subr.bf16.mxu0 0
      %781 = vmatpush1.bf16.msra.mxu0 0
      %782 = vmatprep.subr.bf16.mxu0 0
      %783 = vmatpush1.bf16.msra.mxu0 0
      %784 = vmatprep.subr.bf16.mxu0 0
      %785 = vmatpush1.bf16.msra.mxu0 0
      %786 = vmatprep.subr.bf16.mxu0 0
      %787 = vmatpush1.bf16.msra.mxu0 0
      %788 = vmatprep.subr.bf16.mxu0 0
      %789 = vmatpush1.bf16.msra.mxu0 0
      %790 = vmatprep.mubr.bf16.mxu0 0
      %791 = vmatmul.mubr.bf16.gmra.mrb[0].mxu0 %v582
      %v792 = vpop.f32.mrb[0].mxu0
      %v793 = vadd.f32 %v324, %v792
      %v794 = vpop.f32.mrb[0].mxu0
      %v795 = vpop.f32.mrb[0].mxu0
      %v796 = vadd.f32 %v324, %v795
      %v797 = vpop.f32.mrb[0].mxu0
      %798 = vmatprep.mubr.bf16.mxu0 0
      %799 = vmatmul.mubr.bf16.gmra.mrb[0].mxu0 %v583
      %v800 = vpop.f32.mrb[0].mxu0
      %v801 = vadd.f32 %v324, %v800
      %v802 = vpop.f32.mrb[0].mxu0
      %v803 = vpop.f32.mrb[0].mxu0
      %v804 = vadd.f32 %v324, %v803
      %v805 = vpop.f32.mrb[0].mxu0
      %806 = vmatprep.mubr.bf16.mxu0 0
      %807 = vmatmul.mubr.bf16.gmra.mrb[0].mxu0 %v584
      %v808 = vpop.f32.mrb[0].mxu0
      %v809 = vadd.f32 %v324, %v808
      %v810 = vpop.f32.mrb[0].mxu0
      %v811 = vpop.f32.mrb[0].mxu0
      %v812 = vadd.f32 %v324, %v811
      %v813 = vpop.f32.mrb[0].mxu0
      %814 = vmatprep.mubr.bf16.mxu0 0
      %815 = vmatmul.mubr.bf16.gmra.mrb[0].mxu0 %v585
      %v816 = vpop.f32.mrb[0].mxu0
      %v817 = vadd.f32 %v324, %v816
      %v818 = vpop.f32.mrb[0].mxu0
      %v819 = vpop.f32.mrb[0].mxu0
      %v820 = vadd.f32 %v324, %v819
      %v821 = vpop.f32.mrb[0].mxu0
      %822 = vmatprep.mubr.bf16.mxu0 0
      %823 = vmatmul.mubr.bf16.gmra.mrb[0].mxu0 %v586
      %v824 = vpop.f32.mrb[0].mxu0
      %v825 = vadd.f32 %v324, %v824
      %v826 = vpop.f32.mrb[0].mxu0
      %v827 = vpop.f32.mrb[0].mxu0
      %v828 = vadd.f32 %v324, %v827
      %v829 = vpop.f32.mrb[0].mxu0
      %830 = vmatprep.mubr.bf16.mxu0 0
      %831 = vmatmul.mubr.bf16.gmra.mrb[0].mxu0 %v587
      %v832 = vpop.f32.mrb[0].mxu0
      %v833 = vadd.f32 %v324, %v832
      %v834 = vpop.f32.mrb[0].mxu0
      %v835 = vpop.f32.mrb[0].mxu0
      %v836 = vadd.f32 %v324, %v835
      %v837 = vpop.f32.mrb[0].mxu0
      %838 = vmatprep.mubr.bf16.mxu0 0
      %839 = vmatmul.mubr.bf16.gmra.mrb[0].mxu0 %v588
      %v840 = vpop.f32.mrb[0].mxu0
      %v841 = vadd.f32 %v324, %v840
      %v842 = vpop.f32.mrb[0].mxu0
      %v843 = vpop.f32.mrb[0].mxu0
      %v844 = vadd.f32 %v324, %v843
      %v845 = vpop.f32.mrb[0].mxu0
      %846 = vmatprep.mubr.bf16.mxu0 0
      %847 = vmatmul.mubr.bf16.gmra.mrb[0].mxu0 %v589
      %v848 = vpop.f32.mrb[0].mxu0
      %v849 = vadd.f32 %v324, %v848
      %v850 = vpop.f32.mrb[0].mxu0
      %v851 = vpop.f32.mrb[0].mxu0
      %v852 = vadd.f32 %v324, %v851
      %v853 = vpop.f32.mrb[0].mxu0
      %854 = vmatprep.mubr.bf16.mxu0 0
      %855 = vmatmul.mubr.bf16.gmra.mrb[0].mxu0 %v590
      %v856 = vpop.f32.mrb[0].mxu0
      %v857 = vadd.f32 %v324, %v856
      %v858 = vpop.f32.mrb[0].mxu0
      %v859 = vpop.f32.mrb[0].mxu0
      %v860 = vadd.f32 %v324, %v859
      %v861 = vpop.f32.mrb[0].mxu0
      %862 = vmatprep.mubr.bf16.mxu0 0
      %863 = vmatmul.mubr.bf16.gmra.mrb[0].mxu0 %v591
      %v864 = vpop.f32.mrb[0].mxu0
      %v865 = vadd.f32 %v324, %v864
      %v866 = vpop.f32.mrb[0].mxu0
      %v867 = vpop.f32.mrb[0].mxu0
      %v868 = vadd.f32 %v324, %v867
      %v869 = vpop.f32.mrb[0].mxu0
      %870 = vmatprep.mubr.bf16.mxu0 0
      %871 = vmatmul.mubr.bf16.gmra.mrb[0].mxu0 %v592
      %v872 = vpop.f32.mrb[0].mxu0
      %v873 = vadd.f32 %v324, %v872
      %v874 = vpop.f32.mrb[0].mxu0
      %v875 = vpop.f32.mrb[0].mxu0
      %v876 = vadd.f32 %v324, %v875
      %v877 = vpop.f32.mrb[0].mxu0
      %878 = vmatprep.mubr.bf16.mxu0 0
      %879 = vmatmul.mubr.bf16.gmra.mrb[0].mxu0 %v593
      %v880 = vpop.f32.mrb[0].mxu0
      %v881 = vadd.f32 %v324, %v880
      %v882 = vpop.f32.mrb[0].mxu0
      %v883 = vpop.f32.mrb[0].mxu0
      %v884 = vadd.f32 %v324, %v883
      %v885 = vpop.f32.mrb[0].mxu0
      %886 = vmatprep.mubr.bf16.mxu0 0
      %887 = vmatmul.mubr.bf16.gmra.mrb[0].mxu0 %v594
      %v888 = vpop.f32.mrb[0].mxu0
      %v889 = vadd.f32 %v324, %v888
      %v890 = vpop.f32.mrb[0].mxu0
      %v891 = vpop.f32.mrb[0].mxu0
      %v892 = vadd.f32 %v324, %v891
      %v893 = vpop.f32.mrb[0].mxu0
      %894 = vmatprep.mubr.bf16.mxu0 0
      %895 = vmatmul.mubr.bf16.gmra.mrb[0].mxu0 %v595
      %v896 = vpop.f32.mrb[0].mxu0
      %v897 = vadd.f32 %v324, %v896
      %v898 = vpop.f32.mrb[0].mxu0
      %v899 = vpop.f32.mrb[0].mxu0
      %v900 = vadd.f32 %v324, %v899
      %v901 = vpop.f32.mrb[0].mxu0
      %902 = vmatprep.mubr.bf16.mxu0 0
      %903 = vmatmul.mubr.bf16.gmra.mrb[0].mxu0 %v596
      %v904 = vpop.f32.mrb[0].mxu0
      %v905 = vadd.f32 %v324, %v904
      %v906 = vpop.f32.mrb[0].mxu0
      %v907 = vpop.f32.mrb[0].mxu0
      %v908 = vadd.f32 %v324, %v907
      %v909 = vpop.f32.mrb[0].mxu0
      %910 = vmatprep.mubr.bf16.mxu0 0
      %911 = vmatmul.mubr.bf16.gmra.mrb[0].mxu0 %v597
      %v912 = vpop.f32.mrb[0].mxu0
      %v913 = vadd.f32 %v324, %v912
      %v914 = vpop.f32.mrb[0].mxu0
      %v915 = vpop.f32.mrb[0].mxu0
      %v916 = vadd.f32 %v324, %v915
      %v917 = vpop.f32.mrb[0].mxu0
      %918 = vmatprep.mubr.bf16.mxu0 0
      %919 = vmatmul.mubr.bf16.gmra.mrb[0].mxu0 %v598
      %v920 = vpop.f32.mrb[0].mxu0
      %v921 = vadd.f32 %v324, %v920
      %v922 = vpop.f32.mrb[0].mxu0
      %v923 = vpop.f32.mrb[0].mxu0
      %v924 = vadd.f32 %v324, %v923
      %v925 = vpop.f32.mrb[0].mxu0
      %926 = vmatprep.mubr.bf16.mxu0 0
      %927 = vmatmul.mubr.bf16.gmra.mrb[0].mxu0 %v599
      %v928 = vpop.f32.mrb[0].mxu0
      %v929 = vadd.f32 %v324, %v928
      %v930 = vpop.f32.mrb[0].mxu0
      %v931 = vpop.f32.mrb[0].mxu0
      %v932 = vadd.f32 %v324, %v931
      %v933 = vpop.f32.mrb[0].mxu0
      %934 = vmatprep.mubr.bf16.mxu0 0
      %935 = vmatmul.mubr.bf16.gmra.mrb[0].mxu0 %v600
      %v936 = vpop.f32.mrb[0].mxu0
      %v937 = vadd.f32 %v324, %v936
      %v938 = vpop.f32.mrb[0].mxu0
      %v939 = vpop.f32.mrb[0].mxu0
      %v940 = vadd.f32 %v324, %v939
      %v941 = vpop.f32.mrb[0].mxu0
      %942 = vmatprep.mubr.bf16.mxu0 0
      %943 = vmatmul.mubr.bf16.gmra.mrb[0].mxu0 %v601
      %v944 = vpop.f32.mrb[0].mxu0
      %v945 = vadd.f32 %v324, %v944
      %v946 = vpop.f32.mrb[0].mxu0
      %v947 = vpop.f32.mrb[0].mxu0
      %v948 = vadd.f32 %v324, %v947
      %v949 = vpop.f32.mrb[0].mxu0
      %950 = vmatprep.mubr.bf16.mxu0 0
      %951 = vmatmul.mubr.bf16.gmra.mrb[0].mxu0 %v602
      %v952 = vpop.f32.mrb[0].mxu0
      %v953 = vadd.f32 %v324, %v952
      %v954 = vpop.f32.mrb[0].mxu0
      %v955 = vpop.f32.mrb[0].mxu0
      %v956 = vadd.f32 %v324, %v955
      %v957 = vpop.f32.mrb[0].mxu0
      %958 = vmatprep.mubr.bf16.mxu0 0
      %959 = vmatmul.mubr.bf16.gmra.mrb[0].mxu0 %v603
      %v960 = vpop.f32.mrb[0].mxu0
      %v961 = vadd.f32 %v324, %v960
      %v962 = vpop.f32.mrb[0].mxu0
      %v963 = vpop.f32.mrb[0].mxu0
      %v964 = vadd.f32 %v324, %v963
      %v965 = vpop.f32.mrb[0].mxu0
      %966 = vmatprep.mubr.bf16.mxu0 0
      %967 = vmatmul.mubr.bf16.gmra.mrb[0].mxu0 %v604
      %v968 = vpop.f32.mrb[0].mxu0
      %v969 = vadd.f32 %v324, %v968
      %v970 = vpop.f32.mrb[0].mxu0
      %v971 = vpop.f32.mrb[0].mxu0
      %v972 = vadd.f32 %v324, %v971
      %v973 = vpop.f32.mrb[0].mxu0
      %974 = vmatprep.mubr.bf16.mxu0 0
      %975 = vmatmul.mubr.bf16.gmra.mrb[0].mxu0 %v605
      %v976 = vpop.f32.mrb[0].mxu0
      %v977 = vadd.f32 %v324, %v976
      %v978 = vpop.f32.mrb[0].mxu0
      %v979 = vpop.f32.mrb[0].mxu0
      %v980 = vadd.f32 %v324, %v979
      %v981 = vpop.f32.mrb[0].mxu0
      %982 = vmatprep.mubr.bf16.mxu0 0
      %983 = vmatmul.mubr.bf16.gmra.mrb[0].mxu0 %v606
      %v984 = vpop.f32.mrb[0].mxu0
      %v985 = vadd.f32 %v324, %v984
      %v986 = vpop.f32.mrb[0].mxu0
      %v987 = vpop.f32.mrb[0].mxu0
      %v988 = vadd.f32 %v324, %v987
      %v989 = vpop.f32.mrb[0].mxu0
      %990 = vmatprep.mubr.bf16.mxu0 0
      %991 = vmatmul.mubr.bf16.gmra.mrb[0].mxu0 %v607
      %v992 = vpop.f32.mrb[0].mxu0
      %v993 = vadd.f32 %v324, %v992
      %v994 = vpop.f32.mrb[0].mxu0
      %v995 = vpop.f32.mrb[0].mxu0
      %v996 = vadd.f32 %v324, %v995
      %v997 = vpop.f32.mrb[0].mxu0
      %998 = vmatprep.mubr.bf16.mxu0 0
      %999 = vmatmul.mubr.bf16.gmra.mrb[0].mxu0 %v608
      %v1000 = vpop.f32.mrb[0].mxu0
      %v1001 = vadd.f32 %v324, %v1000
      %v1002 = vpop.f32.mrb[0].mxu0
      %v1003 = vpop.f32.mrb[0].mxu0
      %v1004 = vadd.f32 %v324, %v1003
      %v1005 = vpop.f32.mrb[0].mxu0
      %1006 = vmatprep.mubr.bf16.mxu0 0
      %1007 = vmatmul.mubr.bf16.gmra.mrb[0].mxu0 %v609
      %v1008 = vpop.f32.mrb[0].mxu0
      %v1009 = vadd.f32 %v324, %v1008
      %v1010 = vpop.f32.mrb[0].mxu0
      %v1011 = vpop.f32.mrb[0].mxu0
      %v1012 = vadd.f32 %v324, %v1011
      %v1013 = vpop.f32.mrb[0].mxu0
      %1014 = vmatprep.mubr.bf16.mxu0 0
      %1015 = vmatmul.mubr.bf16.gmra.mrb[0].mxu0 %v610
      %v1016 = vpop.f32.mrb[0].mxu0
      %v1017 = vadd.f32 %v324, %v1016
      %v1018 = vpop.f32.mrb[0].mxu0
      %v1019 = vpop.f32.mrb[0].mxu0
      %v1020 = vadd.f32 %v324, %v1019
      %v1021 = vpop.f32.mrb[0].mxu0
      %1022 = vmatprep.mubr.bf16.mxu0 0
      %1023 = vmatmul.mubr.bf16.gmra.mrb[0].mxu0 %v611
      %v1024 = vpop.f32.mrb[0].mxu0
      %v1025 = vadd.f32 %v324, %v1024
      %v1026 = vpop.f32.mrb[0].mxu0
      %v1027 = vpop.f32.mrb[0].mxu0
      %v1028 = vadd.f32 %v324, %v1027
      %v1029 = vpop.f32.mrb[0].mxu0
      %1030 = vmatprep.mubr.bf16.mxu0 0
      %1031 = vmatmul.mubr.bf16.gmra.mrb[0].mxu0 %v612
      %v1032 = vpop.f32.mrb[0].mxu0
      %v1033 = vadd.f32 %v324, %v1032
      %v1034 = vpop.f32.mrb[0].mxu0
      %v1035 = vpop.f32.mrb[0].mxu0
      %v1036 = vadd.f32 %v324, %v1035
      %v1037 = vpop.f32.mrb[0].mxu0
      %1038 = vmatprep.mubr.bf16.mxu0 0
      %1039 = vmatmul.mubr.bf16.gmra.mrb[0].mxu0 %v613
      %v1040 = vpop.f32.mrb[0].mxu0
      %v1041 = vadd.f32 %v324, %v1040
      %v1042 = vpop.f32.mrb[0].mxu0
      %v1043 = vpop.f32.mrb[0].mxu0
      %v1044 = vadd.f32 %v324, %v1043
      %v1045 = vpop.f32.mrb[0].mxu0
      %1046 = vmatprep.mubr.bf16.mxu0 0
      %1047 = vmatmul.mubr.bf16.gmra.mrb[0].mxu0 %v614
      %v1048 = vpop.f32.mrb[0].mxu0
      %v1049 = vadd.f32 %v324, %v1048
      %v1050 = vpop.f32.mrb[0].mxu0
      %v1051 = vpop.f32.mrb[0].mxu0
      %v1052 = vadd.f32 %v324, %v1051
      %v1053 = vpop.f32.mrb[0].mxu0
      %1054 = vmatprep.mubr.bf16.mxu0 0
      %1055 = vmatmul.mubr.bf16.gmra.mrb[0].mxu0 %v615
      %v1056 = vpop.f32.mrb[0].mxu0
      %v1057 = vadd.f32 %v324, %v1056
      %v1058 = vpop.f32.mrb[0].mxu0
      %v1059 = vpop.f32.mrb[0].mxu0
      %v1060 = vadd.f32 %v324, %v1059
      %v1061 = vpop.f32.mrb[0].mxu0
      %1062 = vmatprep.mubr.bf16.mxu0 0
      %1063 = vmatmul.mubr.bf16.gmra.mrb[0].mxu0 %v616
      %v1064 = vpop.f32.mrb[0].mxu0
      %v1065 = vadd.f32 %v324, %v1064
      %v1066 = vpop.f32.mrb[0].mxu0
      %v1067 = vpop.f32.mrb[0].mxu0
      %v1068 = vadd.f32 %v324, %v1067
      %v1069 = vpop.f32.mrb[0].mxu0
      %1070 = vmatprep.mubr.bf16.mxu0 0
      %1071 = vmatmul.mubr.bf16.gmra.mrb[0].mxu0 %v617
      %v1072 = vpop.f32.mrb[0].mxu0
      %v1073 = vadd.f32 %v324, %v1072
      %v1074 = vpop.f32.mrb[0].mxu0
      %v1075 = vpop.f32.mrb[0].mxu0
      %v1076 = vadd.f32 %v324, %v1075
      %v1077 = vpop.f32.mrb[0].mxu0
      %1078 = vmatprep.mubr.bf16.mxu0 0
      %1079 = vmatmul.mubr.bf16.gmra.mrb[0].mxu0 %v618
      %v1080 = vpop.f32.mrb[0].mxu0
      %v1081 = vadd.f32 %v324, %v1080
      %v1082 = vpop.f32.mrb[0].mxu0
      %v1083 = vpop.f32.mrb[0].mxu0
      %v1084 = vadd.f32 %v324, %v1083
      %v1085 = vpop.f32.mrb[0].mxu0
      %1086 = vmatprep.mubr.bf16.mxu0 0
      %1087 = vmatmul.mubr.bf16.gmra.mrb[0].mxu0 %v619
      %v1088 = vpop.f32.mrb[0].mxu0
      %v1089 = vadd.f32 %v324, %v1088
      %v1090 = vpop.f32.mrb[0].mxu0
      %v1091 = vpop.f32.mrb[0].mxu0
      %v1092 = vadd.f32 %v324, %v1091
      %v1093 = vpop.f32.mrb[0].mxu0
      %1094 = vmatprep.mubr.bf16.mxu0 0
      %1095 = vmatmul.mubr.bf16.gmra.mrb[0].mxu0 %v620
      %v1096 = vpop.f32.mrb[0].mxu0
      %v1097 = vadd.f32 %v324, %v1096
      %v1098 = vpop.f32.mrb[0].mxu0
      %v1099 = vpop.f32.mrb[0].mxu0
      %v1100 = vadd.f32 %v324, %v1099
      %v1101 = vpop.f32.mrb[0].mxu0
      %1102 = vmatprep.mubr.bf16.mxu0 0
      %1103 = vmatmul.mubr.bf16.gmra.mrb[0].mxu0 %v621
      %v1104 = vpop.f32.mrb[0].mxu0
      %v1105 = vadd.f32 %v324, %v1104
      %v1106 = vpop.f32.mrb[0].mxu0
      %v1107 = vpop.f32.mrb[0].mxu0
      %v1108 = vadd.f32 %v324, %v1107
      %v1109 = vpop.f32.mrb[0].mxu0
      %1110 = vmatprep.mubr.bf16.mxu0 0
      %1111 = vmatmul.mubr.bf16.gmra.mrb[0].mxu0 %v622
      %v1112 = vpop.f32.mrb[0].mxu0
      %v1113 = vadd.f32 %v324, %v1112
      %v1114 = vpop.f32.mrb[0].mxu0
      %v1115 = vpop.f32.mrb[0].mxu0
      %v1116 = vadd.f32 %v324, %v1115
      %v1117 = vpop.f32.mrb[0].mxu0
      %1118 = vmatprep.mubr.bf16.mxu0 0
      %1119 = vmatmul.mubr.bf16.gmra.mrb[0].mxu0 %v623
      %v1120 = vpop.f32.mrb[0].mxu0
      %v1121 = vadd.f32 %v324, %v1120
      %v1122 = vpop.f32.mrb[0].mxu0
      %v1123 = vpop.f32.mrb[0].mxu0
      %v1124 = vadd.f32 %v324, %v1123
      %v1125 = vpop.f32.mrb[0].mxu0
      %1126 = vmatprep.mubr.bf16.mxu0 0
      %1127 = vmatmul.mubr.bf16.gmra.mrb[0].mxu0 %v624
      %v1128 = vpop.f32.mrb[0].mxu0
      %v1129 = vadd.f32 %v324, %v1128
      %v1130 = vpop.f32.mrb[0].mxu0
      %v1131 = vpop.f32.mrb[0].mxu0
      %v1132 = vadd.f32 %v324, %v1131
      %v1133 = vpop.f32.mrb[0].mxu0
      %1134 = vmatprep.mubr.bf16.mxu0 0
      %1135 = vmatmul.mubr.bf16.gmra.mrb[0].mxu0 %v625
      %v1136 = vpop.f32.mrb[0].mxu0
      %v1137 = vadd.f32 %v324, %v1136
      %v1138 = vpop.f32.mrb[0].mxu0
      %v1139 = vpop.f32.mrb[0].mxu0
      %v1140 = vadd.f32 %v324, %v1139
      %v1141 = vpop.f32.mrb[0].mxu0
      %1142 = vmatprep.mubr.bf16.mxu0 0
      %1143 = vmatmul.mubr.bf16.gmra.mrb[0].mxu0 %v626
      %v1144 = vpop.f32.mrb[0].mxu0
      %v1145 = vadd.f32 %v324, %v1144
      %v1146 = vpop.f32.mrb[0].mxu0
      %v1147 = vpop.f32.mrb[0].mxu0
      %v1148 = vadd.f32 %v324, %v1147
      %v1149 = vpop.f32.mrb[0].mxu0
      %1150 = vmatprep.mubr.bf16.mxu0 0
      %1151 = vmatmul.mubr.bf16.gmra.mrb[0].mxu0 %v627
      %v1152 = vpop.f32.mrb[0].mxu0
      %v1153 = vadd.f32 %v324, %v1152
      %v1154 = vpop.f32.mrb[0].mxu0
      %v1155 = vpop.f32.mrb[0].mxu0
      %v1156 = vadd.f32 %v324, %v1155
      %v1157 = vpop.f32.mrb[0].mxu0
      %1158 = vmatprep.mubr.bf16.mxu0 0
      %1159 = vmatmul.mubr.bf16.gmra.mrb[0].mxu0 %v628
      %v1160 = vpop.f32.mrb[0].mxu0
      %v1161 = vadd.f32 %v324, %v1160
      %v1162 = vpop.f32.mrb[0].mxu0
      %v1163 = vpop.f32.mrb[0].mxu0
      %v1164 = vadd.f32 %v324, %v1163
      %v1165 = vpop.f32.mrb[0].mxu0
      %1166 = vmatprep.mubr.bf16.mxu0 0
      %1167 = vmatmul.mubr.bf16.gmra.mrb[0].mxu0 %v629
      %v1168 = vpop.f32.mrb[0].mxu0
      %v1169 = vadd.f32 %v324, %v1168
      %v1170 = vpop.f32.mrb[0].mxu0
      %v1171 = vpop.f32.mrb[0].mxu0
      %v1172 = vadd.f32 %v324, %v1171
      %v1173 = vpop.f32.mrb[0].mxu0
      %1174 = vmatprep.mubr.bf16.mxu0 0
      %1175 = vmatmul.mubr.bf16.gmra.mrb[0].mxu0 %v630
      %v1176 = vpop.f32.mrb[0].mxu0
      %v1177 = vadd.f32 %v324, %v1176
      %v1178 = vpop.f32.mrb[0].mxu0
      %v1179 = vpop.f32.mrb[0].mxu0
      %v1180 = vadd.f32 %v324, %v1179
      %v1181 = vpop.f32.mrb[0].mxu0
      %1182 = vmatprep.mubr.bf16.mxu0 0
      %1183 = vmatmul.mubr.bf16.gmra.mrb[0].mxu0 %v631
      %v1184 = vpop.f32.mrb[0].mxu0
      %v1185 = vadd.f32 %v324, %v1184
      %v1186 = vpop.f32.mrb[0].mxu0
      %v1187 = vpop.f32.mrb[0].mxu0
      %v1188 = vadd.f32 %v324, %v1187
      %v1189 = vpop.f32.mrb[0].mxu0
      %1190 = vmatprep.mubr.bf16.mxu0 0
      %1191 = vmatmul.mubr.bf16.gmra.mrb[0].mxu0 %v632
      %v1192 = vpop.f32.mrb[0].mxu0
      %v1193 = vadd.f32 %v324, %v1192
      %v1194 = vpop.f32.mrb[0].mxu0
      %v1195 = vpop.f32.mrb[0].mxu0
      %v1196 = vadd.f32 %v324, %v1195
      %v1197 = vpop.f32.mrb[0].mxu0
      %1198 = vmatprep.mubr.bf16.mxu0 0
      %1199 = vmatmul.mubr.bf16.gmra.mrb[0].mxu0 %v633
      %v1200 = vpop.f32.mrb[0].mxu0
      %v1201 = vadd.f32 %v324, %v1200
      %v1202 = vpop.f32.mrb[0].mxu0
      %v1203 = vpop.f32.mrb[0].mxu0
      %v1204 = vadd.f32 %v324, %v1203
      %v1205 = vpop.f32.mrb[0].mxu0
      %1206 = vmatprep.mubr.bf16.mxu0 0
      %1207 = vmatmul.mubr.bf16.gmra.mrb[0].mxu0 %v634
      %v1208 = vpop.f32.mrb[0].mxu0
      %v1209 = vadd.f32 %v324, %v1208
      %v1210 = vpop.f32.mrb[0].mxu0
      %v1211 = vpop.f32.mrb[0].mxu0
      %v1212 = vadd.f32 %v324, %v1211
      %v1213 = vpop.f32.mrb[0].mxu0
      %1214 = vmatprep.mubr.bf16.mxu0 0
      %1215 = vmatmul.mubr.bf16.gmra.mrb[0].mxu0 %v635
      %v1216 = vpop.f32.mrb[0].mxu0
      %v1217 = vadd.f32 %v324, %v1216
      %v1218 = vpop.f32.mrb[0].mxu0
      %v1219 = vpop.f32.mrb[0].mxu0
      %v1220 = vadd.f32 %v324, %v1219
      %v1221 = vpop.f32.mrb[0].mxu0
      %1222 = vmatprep.mubr.bf16.mxu0 0
      %1223 = vmatmul.mubr.bf16.gmra.mrb[0].mxu0 %v636
      %v1224 = vpop.f32.mrb[0].mxu0
      %v1225 = vadd.f32 %v324, %v1224
      %v1226 = vpop.f32.mrb[0].mxu0
      %v1227 = vpop.f32.mrb[0].mxu0
      %v1228 = vadd.f32 %v324, %v1227
      %v1229 = vpop.f32.mrb[0].mxu0
      %1230 = vmatprep.mubr.bf16.mxu0 0
      %1231 = vmatmul.mubr.bf16.gmra.mrb[0].mxu0 %v637
      %v1232 = vpop.f32.mrb[0].mxu0
      %v1233 = vadd.f32 %v324, %v1232
      %v1234 = vpop.f32.mrb[0].mxu0
      %v1235 = vpop.f32.mrb[0].mxu0
      %v1236 = vadd.f32 %v324, %v1235
      %v1237 = vpop.f32.mrb[0].mxu0
      %1238 = vmatprep.mubr.bf16.mxu0 0
      %1239 = vmatmul.mubr.bf16.gmra.mrb[0].mxu0 %v638
      %v1240 = vpop.f32.mrb[0].mxu0
      %v1241 = vadd.f32 %v324, %v1240
      %v1242 = vpop.f32.mrb[0].mxu0
      %v1243 = vpop.f32.mrb[0].mxu0
      %v1244 = vadd.f32 %v324, %v1243
      %v1245 = vpop.f32.mrb[0].mxu0
      %1246 = vmatprep.mubr.bf16.mxu0 0
      %1247 = vmatmul.mubr.bf16.gmra.mrb[0].mxu0 %v639
      %v1248 = vpop.f32.mrb[0].mxu0
      %v1249 = vadd.f32 %v324, %v1248
      %v1250 = vpop.f32.mrb[0].mxu0
      %v1251 = vpop.f32.mrb[0].mxu0
      %v1252 = vadd.f32 %v324, %v1251
      %v1253 = vpop.f32.mrb[0].mxu0
      %1254 = vmatprep.mubr.bf16.mxu0 0
      %1255 = vmatmul.mubr.bf16.gmra.mrb[0].mxu0 %v640
      %v1256 = vpop.f32.mrb[0].mxu0
      %v1257 = vadd.f32 %v324, %v1256
      %v1258 = vpop.f32.mrb[0].mxu0
      %v1259 = vpop.f32.mrb[0].mxu0
      %v1260 = vadd.f32 %v324, %v1259
      %v1261 = vpop.f32.mrb[0].mxu0
      %1262 = vmatprep.mubr.bf16.mxu0 0
      %1263 = vmatmul.mubr.bf16.gmra.mrb[0].mxu0 %v641
      %v1264 = vpop.f32.mrb[0].mxu0
      %v1265 = vadd.f32 %v324, %v1264
      %v1266 = vpop.f32.mrb[0].mxu0
      %v1267 = vpop.f32.mrb[0].mxu0
      %v1268 = vadd.f32 %v324, %v1267
      %v1269 = vpop.f32.mrb[0].mxu0
      %1270 = vmatprep.mubr.bf16.mxu0 0
      %1271 = vmatmul.mubr.bf16.gmra.mrb[0].mxu0 %v642
      %v1272 = vpop.f32.mrb[0].mxu0
      %v1273 = vadd.f32 %v324, %v1272
      %v1274 = vpop.f32.mrb[0].mxu0
      %v1275 = vpop.f32.mrb[0].mxu0
      %v1276 = vadd.f32 %v324, %v1275
      %v1277 = vpop.f32.mrb[0].mxu0
      %1278 = vmatprep.mubr.bf16.mxu0 0
      %1279 = vmatmul.mubr.bf16.gmra.mrb[0].mxu0 %v643
      %v1280 = vpop.f32.mrb[0].mxu0
      %v1281 = vadd.f32 %v324, %v1280
      %v1282 = vpop.f32.mrb[0].mxu0
      %v1283 = vpop.f32.mrb[0].mxu0
      %v1284 = vadd.f32 %v324, %v1283
      %v1285 = vpop.f32.mrb[0].mxu0
      %1286 = vmatprep.mubr.bf16.mxu0 0
      %1287 = vmatmul.mubr.bf16.gmra.mrb[0].mxu0 %v644
      %v1288 = vpop.f32.mrb[0].mxu0
      %v1289 = vadd.f32 %v324, %v1288
      %v1290 = vpop.f32.mrb[0].mxu0
      %v1291 = vpop.f32.mrb[0].mxu0
      %v1292 = vadd.f32 %v324, %v1291
      %v1293 = vpop.f32.mrb[0].mxu0
      %1294 = vmatprep.mubr.bf16.mxu0 0
      %1295 = vmatmul.mubr.bf16.gmra.mrb[0].mxu0 %v645
      %v1296 = vpop.f32.mrb[0].mxu0
      %v1297 = vadd.f32 %v324, %v1296
      %v1298 = vpop.f32.mrb[0].mxu0
      %v1299 = vpop.f32.mrb[0].mxu0
      %v1300 = vadd.f32 %v324, %v1299
      %v1301 = vpop.f32.mrb[0].mxu0
      %1302 = vdwg.mxu0
      %vm1303 = vcmp.ge.f32.partialorder %v793, 0.0
      %vm1304 = vcmp.ge.f32.partialorder %v796, 0.0
      %vm1305 = vcmp.ge.f32.partialorder %v801, 0.0
      %vm1306 = vcmp.ge.f32.partialorder %v804, 0.0
      %vm1307 = vcmp.ge.f32.partialorder %v809, 0.0
      %vm1308 = vcmp.ge.f32.partialorder %v812, 0.0
      %vm1309 = vcmp.ge.f32.partialorder %v817, 0.0
      %vm1310 = vcmp.ge.f32.partialorder %v820, 0.0
      %vm1311 = vcmp.ge.f32.partialorder %v825, 0.0
      %vm1312 = vcmp.ge.f32.partialorder %v828, 0.0
      %vm1313 = vcmp.ge.f32.partialorder %v833, 0.0
      %vm1314 = vcmp.ge.f32.partialorder %v836, 0.0
      %vm1315 = vcmp.ge.f32.partialorder %v841, 0.0
      %vm1316 = vcmp.ge.f32.partialorder %v844, 0.0
      %vm1317 = vcmp.ge.f32.partialorder %v849, 0.0
      %vm1318 = vcmp.ge.f32.partialorder %v852, 0.0
      %vm1319 = vcmp.ge.f32.partialorder %v857, 0.0
      %vm1320 = vcmp.ge.f32.partialorder %v860, 0.0
      %vm1321 = vcmp.ge.f32.partialorder %v865, 0.0
      %vm1322 = vcmp.ge.f32.partialorder %v868, 0.0
      %vm1323 = vcmp.ge.f32.partialorder %v873, 0.0
      %vm1324 = vcmp.ge.f32.partialorder %v876, 0.0
      %vm1325 = vcmp.ge.f32.partialorder %v881, 0.0
      %vm1326 = vcmp.ge.f32.partialorder %v884, 0.0
      %vm1327 = vcmp.ge.f32.partialorder %v889, 0.0
      %vm1328 = vcmp.ge.f32.partialorder %v892, 0.0
      %vm1329 = vcmp.ge.f32.partialorder %v897, 0.0
      %vm1330 = vcmp.ge.f32.partialorder %v900, 0.0
      %vm1331 = vcmp.ge.f32.partialorder %v905, 0.0
      %vm1332 = vcmp.ge.f32.partialorder %v908, 0.0
      %vm1333 = vcmp.ge.f32.partialorder %v913, 0.0
      %vm1334 = vcmp.ge.f32.partialorder %v916, 0.0
      %vm1335 = vcmp.ge.f32.partialorder %v921, 0.0
      %vm1336 = vcmp.ge.f32.partialorder %v924, 0.0
      %vm1337 = vcmp.ge.f32.partialorder %v929, 0.0
      %vm1338 = vcmp.ge.f32.partialorder %v932, 0.0
      %vm1339 = vcmp.ge.f32.partialorder %v937, 0.0
      %vm1340 = vcmp.ge.f32.partialorder %v940, 0.0
      %vm1341 = vcmp.ge.f32.partialorder %v945, 0.0
      %vm1342 = vcmp.ge.f32.partialorder %v948, 0.0
      %vm1343 = vcmp.ge.f32.partialorder %v953, 0.0
      %vm1344 = vcmp.ge.f32.partialorder %v956, 0.0
      %vm1345 = vcmp.ge.f32.partialorder %v961, 0.0
      %vm1346 = vcmp.ge.f32.partialorder %v964, 0.0
      %vm1347 = vcmp.ge.f32.partialorder %v969, 0.0
      %vm1348 = vcmp.ge.f32.partialorder %v972, 0.0
      %vm1349 = vcmp.ge.f32.partialorder %v977, 0.0
      %vm1350 = vcmp.ge.f32.partialorder %v980, 0.0
      %vm1351 = vcmp.ge.f32.partialorder %v985, 0.0
      %vm1352 = vcmp.ge.f32.partialorder %v988, 0.0
      %vm1353 = vcmp.ge.f32.partialorder %v993, 0.0
      %vm1354 = vcmp.ge.f32.partialorder %v996, 0.0
      %vm1355 = vcmp.ge.f32.partialorder %v1001, 0.0
      %vm1356 = vcmp.ge.f32.partialorder %v1004, 0.0
      %vm1357 = vcmp.ge.f32.partialorder %v1009, 0.0
      %vm1358 = vcmp.ge.f32.partialorder %v1012, 0.0
      %vm1359 = vcmp.ge.f32.partialorder %v1017, 0.0
      %vm1360 = vcmp.ge.f32.partialorder %v1020, 0.0
      %vm1361 = vcmp.ge.f32.partialorder %v1025, 0.0
      %vm1362 = vcmp.ge.f32.partialorder %v1028, 0.0
      %vm1363 = vcmp.ge.f32.partialorder %v1033, 0.0
      %vm1364 = vcmp.ge.f32.partialorder %v1036, 0.0
      %vm1365 = vcmp.ge.f32.partialorder %v1041, 0.0
      %vm1366 = vcmp.ge.f32.partialorder %v1044, 0.0
      %vm1367 = vcmp.ge.f32.partialorder %v1049, 0.0
      %vm1368 = vcmp.ge.f32.partialorder %v1052, 0.0
      %vm1369 = vcmp.ge.f32.partialorder %v1057, 0.0
      %vm1370 = vcmp.ge.f32.partialorder %v1060, 0.0
      %vm1371 = vcmp.ge.f32.partialorder %v1065, 0.0
      %vm1372 = vcmp.ge.f32.partialorder %v1068, 0.0
      %vm1373 = vcmp.ge.f32.partialorder %v1073, 0.0
      %vm1374 = vcmp.ge.f32.partialorder %v1076, 0.0
      %vm1375 = vcmp.ge.f32.partialorder %v1081, 0.0
      %vm1376 = vcmp.ge.f32.partialorder %v1084, 0.0
      %vm1377 = vcmp.ge.f32.partialorder %v1089, 0.0
      %vm1378 = vcmp.ge.f32.partialorder %v1092, 0.0
      %vm1379 = vcmp.ge.f32.partialorder %v1097, 0.0
      %vm1380 = vcmp.ge.f32.partialorder %v1100, 0.0
      %vm1381 = vcmp.ge.f32.partialorder %v1105, 0.0
      %vm1382 = vcmp.ge.f32.partialorder %v1108, 0.0
      %vm1383 = vcmp.ge.f32.partialorder %v1113, 0.0
      %vm1384 = vcmp.ge.f32.partialorder %v1116, 0.0
      %vm1385 = vcmp.ge.f32.partialorder %v1121, 0.0
      %vm1386 = vcmp.ge.f32.partialorder %v1124, 0.0
      %vm1387 = vcmp.ge.f32.partialorder %v1129, 0.0
      %vm1388 = vcmp.ge.f32.partialorder %v1132, 0.0
      %vm1389 = vcmp.ge.f32.partialorder %v1137, 0.0
      %vm1390 = vcmp.ge.f32.partialorder %v1140, 0.0
      %vm1391 = vcmp.ge.f32.partialorder %v1145, 0.0
      %vm1392 = vcmp.ge.f32.partialorder %v1148, 0.0
      %vm1393 = vcmp.ge.f32.partialorder %v1153, 0.0
      %vm1394 = vcmp.ge.f32.partialorder %v1156, 0.0
      %vm1395 = vcmp.ge.f32.partialorder %v1161, 0.0
      %vm1396 = vcmp.ge.f32.partialorder %v1164, 0.0
      %vm1397 = vcmp.ge.f32.partialorder %v1169, 0.0
      %vm1398 = vcmp.ge.f32.partialorder %v1172, 0.0
      %vm1399 = vcmp.ge.f32.partialorder %v1177, 0.0
      %vm1400 = vcmp.ge.f32.partialorder %v1180, 0.0
      %vm1401 = vcmp.ge.f32.partialorder %v1185, 0.0
      %vm1402 = vcmp.ge.f32.partialorder %v1188, 0.0
      %vm1403 = vcmp.ge.f32.partialorder %v1193, 0.0
      %vm1404 = vcmp.ge.f32.partialorder %v1196, 0.0
      %vm1405 = vcmp.ge.f32.partialorder %v1201, 0.0
      %vm1406 = vcmp.ge.f32.partialorder %v1204, 0.0
      %vm1407 = vcmp.ge.f32.partialorder %v1209, 0.0
      %vm1408 = vcmp.ge.f32.partialorder %v1212, 0.0
      %vm1409 = vcmp.ge.f32.partialorder %v1217, 0.0
      %vm1410 = vcmp.ge.f32.partialorder %v1220, 0.0
      %vm1411 = vcmp.ge.f32.partialorder %v1225, 0.0
      %vm1412 = vcmp.ge.f32.partialorder %v1228, 0.0
      %vm1413 = vcmp.ge.f32.partialorder %v1233, 0.0
      %vm1414 = vcmp.ge.f32.partialorder %v1236, 0.0
      %vm1415 = vcmp.ge.f32.partialorder %v1241, 0.0
      %vm1416 = vcmp.ge.f32.partialorder %v1244, 0.0
      %vm1417 = vcmp.ge.f32.partialorder %v1249, 0.0
      %vm1418 = vcmp.ge.f32.partialorder %v1252, 0.0
      %vm1419 = vcmp.ge.f32.partialorder %v1257, 0.0
      %vm1420 = vcmp.ge.f32.partialorder %v1260, 0.0
      %vm1421 = vcmp.ge.f32.partialorder %v1265, 0.0
      %vm1422 = vcmp.ge.f32.partialorder %v1268, 0.0
      %vm1423 = vcmp.ge.f32.partialorder %v1273, 0.0
      %vm1424 = vcmp.ge.f32.partialorder %v1276, 0.0
      %vm1425 = vcmp.ge.f32.partialorder %v1281, 0.0
      %vm1426 = vcmp.ge.f32.partialorder %v1284, 0.0
      %vm1427 = vcmp.ge.f32.partialorder %v1289, 0.0
      %vm1428 = vcmp.ge.f32.partialorder %v1292, 0.0
      %vm1429 = vcmp.ge.f32.partialorder %v1297, 0.0
      %vm1430 = vcmp.ge.f32.partialorder %v1300, 0.0
      %v1431 = vmul.f32 %v793, 0.2
      %v1432 = vmul.f32 %v796, 0.2
      %v1433 = vmul.f32 %v801, 0.2
      %v1434 = vmul.f32 %v804, 0.2
      %v1435 = vmul.f32 %v809, 0.2
      %v1436 = vmul.f32 %v812, 0.2
      %v1437 = vmul.f32 %v817, 0.2
      %v1438 = vmul.f32 %v820, 0.2
      %v1439 = vmul.f32 %v825, 0.2
      %v1440 = vmul.f32 %v828, 0.2
      %v1441 = vmul.f32 %v833, 0.2
      %v1442 = vmul.f32 %v836, 0.2
      %v1443 = vmul.f32 %v841, 0.2
      %v1444 = vmul.f32 %v844, 0.2
      %v1445 = vmul.f32 %v849, 0.2
      %v1446 = vmul.f32 %v852, 0.2
      %v1447 = vmul.f32 %v857, 0.2
      %v1448 = vmul.f32 %v860, 0.2
      %v1449 = vmul.f32 %v865, 0.2
      %v1450 = vmul.f32 %v868, 0.2
      %v1451 = vmul.f32 %v873, 0.2
      %v1452 = vmul.f32 %v876, 0.2
      %v1453 = vmul.f32 %v881, 0.2
      %v1454 = vmul.f32 %v884, 0.2
      %v1455 = vmul.f32 %v889, 0.2
      %v1456 = vmul.f32 %v892, 0.2
      %v1457 = vmul.f32 %v897, 0.2
      %v1458 = vmul.f32 %v900, 0.2
      %v1459 = vmul.f32 %v905, 0.2
      %v1460 = vmul.f32 %v908, 0.2
      %v1461 = vmul.f32 %v913, 0.2
      %v1462 = vmul.f32 %v916, 0.2
      %v1463 = vmul.f32 %v921, 0.2
      %v1464 = vmul.f32 %v924, 0.2
      %v1465 = vmul.f32 %v929, 0.2
      %v1466 = vmul.f32 %v932, 0.2
      %v1467 = vmul.f32 %v937, 0.2
      %v1468 = vmul.f32 %v940, 0.2
      %v1469 = vmul.f32 %v945, 0.2
      %v1470 = vmul.f32 %v948, 0.2
      %v1471 = vmul.f32 %v953, 0.2
      %v1472 = vmul.f32 %v956, 0.2
      %v1473 = vmul.f32 %v961, 0.2
      %v1474 = vmul.f32 %v964, 0.2
      %v1475 = vmul.f32 %v969, 0.2
      %v1476 = vmul.f32 %v972, 0.2
      %v1477 = vmul.f32 %v977, 0.2
      %v1478 = vmul.f32 %v980, 0.2
      %v1479 = vmul.f32 %v985, 0.2
      %v1480 = vmul.f32 %v988, 0.2
      %v1481 = vmul.f32 %v993, 0.2
      %v1482 = vmul.f32 %v996, 0.2
      %v1483 = vmul.f32 %v1001, 0.2
      %v1484 = vmul.f32 %v1004, 0.2
      %v1485 = vmul.f32 %v1009, 0.2
      %v1486 = vmul.f32 %v1012, 0.2
      %v1487 = vmul.f32 %v1017, 0.2
      %v1488 = vmul.f32 %v1020, 0.2
      %v1489 = vmul.f32 %v1025, 0.2
      %v1490 = vmul.f32 %v1028, 0.2
      %v1491 = vmul.f32 %v1033, 0.2
      %v1492 = vmul.f32 %v1036, 0.2
      %v1493 = vmul.f32 %v1041, 0.2
      %v1494 = vmul.f32 %v1044, 0.2
      %v1495 = vmul.f32 %v1049, 0.2
      %v1496 = vmul.f32 %v1052, 0.2
      %v1497 = vmul.f32 %v1057, 0.2
      %v1498 = vmul.f32 %v1060, 0.2
      %v1499 = vmul.f32 %v1065, 0.2
      %v1500 = vmul.f32 %v1068, 0.2
      %v1501 = vmul.f32 %v1073, 0.2
      %v1502 = vmul.f32 %v1076, 0.2
      %v1503 = vmul.f32 %v1081, 0.2
      %v1504 = vmul.f32 %v1084, 0.2
      %v1505 = vmul.f32 %v1089, 0.2
      %v1506 = vmul.f32 %v1092, 0.2
      %v1507 = vmul.f32 %v1097, 0.2
      %v1508 = vmul.f32 %v1100, 0.2
      %v1509 = vmul.f32 %v1105, 0.2
      %v1510 = vmul.f32 %v1108, 0.2
      %v1511 = vmul.f32 %v1113, 0.2
      %v1512 = vmul.f32 %v1116, 0.2
      %v1513 = vmul.f32 %v1121, 0.2
      %v1514 = vmul.f32 %v1124, 0.2
      %v1515 = vmul.f32 %v1129, 0.2
      %v1516 = vmul.f32 %v1132, 0.2
      %v1517 = vmul.f32 %v1137, 0.2
      %v1518 = vmul.f32 %v1140, 0.2
      %v1519 = vmul.f32 %v1145, 0.2
      %v1520 = vmul.f32 %v1148, 0.2
      %v1521 = vmul.f32 %v1153, 0.2
      %v1522 = vmul.f32 %v1156, 0.2
      %v1523 = vmul.f32 %v1161, 0.2
      %v1524 = vmul.f32 %v1164, 0.2
      %v1525 = vmul.f32 %v1169, 0.2
      %v1526 = vmul.f32 %v1172, 0.2
      %v1527 = vmul.f32 %v1177, 0.2
      %v1528 = vmul.f32 %v1180, 0.2
      %v1529 = vmul.f32 %v1185, 0.2
      %v1530 = vmul.f32 %v1188, 0.2
      %v1531 = vmul.f32 %v1193, 0.2
      %v1532 = vmul.f32 %v1196, 0.2
      %v1533 = vmul.f32 %v1201, 0.2
      %v1534 = vmul.f32 %v1204, 0.2
      %v1535 = vmul.f32 %v1209, 0.2
      %v1536 = vmul.f32 %v1212, 0.2
      %v1537 = vmul.f32 %v1217, 0.2
      %v1538 = vmul.f32 %v1220, 0.2
      %v1539 = vmul.f32 %v1225, 0.2
      %v1540 = vmul.f32 %v1228, 0.2
      %v1541 = vmul.f32 %v1233, 0.2
      %v1542 = vmul.f32 %v1236, 0.2
      %v1543 = vmul.f32 %v1241, 0.2
      %v1544 = vmul.f32 %v1244, 0.2
      %v1545 = vmul.f32 %v1249, 0.2
      %v1546 = vmul.f32 %v1252, 0.2
      %v1547 = vmul.f32 %v1257, 0.2
      %v1548 = vmul.f32 %v1260, 0.2
      %v1549 = vmul.f32 %v1265, 0.2
      %v1550 = vmul.f32 %v1268, 0.2
      %v1551 = vmul.f32 %v1273, 0.2
      %v1552 = vmul.f32 %v1276, 0.2
      %v1553 = vmul.f32 %v1281, 0.2
      %v1554 = vmul.f32 %v1284, 0.2
      %v1555 = vmul.f32 %v1289, 0.2
      %v1556 = vmul.f32 %v1292, 0.2
      %v1557 = vmul.f32 %v1297, 0.2
      %v1558 = vmul.f32 %v1300, 0.2
      %v1559 = vsel %vm1303, %v793, %v1431
      %v1560 = vsel %vm1304, %v796, %v1432
      %v1561 = vsel %vm1305, %v801, %v1433
      %v1562 = vsel %vm1306, %v804, %v1434
      %v1563 = vsel %vm1307, %v809, %v1435
      %v1564 = vsel %vm1308, %v812, %v1436
      %v1565 = vsel %vm1309, %v817, %v1437
      %v1566 = vsel %vm1310, %v820, %v1438
      %v1567 = vsel %vm1311, %v825, %v1439
      %v1568 = vsel %vm1312, %v828, %v1440
      %v1569 = vsel %vm1313, %v833, %v1441
      %v1570 = vsel %vm1314, %v836, %v1442
      %v1571 = vsel %vm1315, %v841, %v1443
      %v1572 = vsel %vm1316, %v844, %v1444
      %v1573 = vsel %vm1317, %v849, %v1445
      %v1574 = vsel %vm1318, %v852, %v1446
      %v1575 = vsel %vm1319, %v857, %v1447
      %v1576 = vsel %vm1320, %v860, %v1448
      %v1577 = vsel %vm1321, %v865, %v1449
      %v1578 = vsel %vm1322, %v868, %v1450
      %v1579 = vsel %vm1323, %v873, %v1451
      %v1580 = vsel %vm1324, %v876, %v1452
      %v1581 = vsel %vm1325, %v881, %v1453
      %v1582 = vsel %vm1326, %v884, %v1454
      %v1583 = vsel %vm1327, %v889, %v1455
      %v1584 = vsel %vm1328, %v892, %v1456
      %v1585 = vsel %vm1329, %v897, %v1457
      %v1586 = vsel %vm1330, %v900, %v1458
      %v1587 = vsel %vm1331, %v905, %v1459
      %v1588 = vsel %vm1332, %v908, %v1460
      %v1589 = vsel %vm1333, %v913, %v1461
      %v1590 = vsel %vm1334, %v916, %v1462
      %v1591 = vsel %vm1335, %v921, %v1463
      %v1592 = vsel %vm1336, %v924, %v1464
      %v1593 = vsel %vm1337, %v929, %v1465
      %v1594 = vsel %vm1338, %v932, %v1466
      %v1595 = vsel %vm1339, %v937, %v1467
      %v1596 = vsel %vm1340, %v940, %v1468
      %v1597 = vsel %vm1341, %v945, %v1469
      %v1598 = vsel %vm1342, %v948, %v1470
      %v1599 = vsel %vm1343, %v953, %v1471
      %v1600 = vsel %vm1344, %v956, %v1472
      %v1601 = vsel %vm1345, %v961, %v1473
      %v1602 = vsel %vm1346, %v964, %v1474
      %v1603 = vsel %vm1347, %v969, %v1475
      %v1604 = vsel %vm1348, %v972, %v1476
      %v1605 = vsel %vm1349, %v977, %v1477
      %v1606 = vsel %vm1350, %v980, %v1478
      %v1607 = vsel %vm1351, %v985, %v1479
      %v1608 = vsel %vm1352, %v988, %v1480
      %v1609 = vsel %vm1353, %v993, %v1481
      %v1610 = vsel %vm1354, %v996, %v1482
      %v1611 = vsel %vm1355, %v1001, %v1483
      %v1612 = vsel %vm1356, %v1004, %v1484
      %v1613 = vsel %vm1357, %v1009, %v1485
      %v1614 = vsel %vm1358, %v1012, %v1486
      %v1615 = vsel %vm1359, %v1017, %v1487
      %v1616 = vsel %vm1360, %v1020, %v1488
      %v1617 = vsel %vm1361, %v1025, %v1489
      %v1618 = vsel %vm1362, %v1028, %v1490
      %v1619 = vsel %vm1363, %v1033, %v1491
      %v1620 = vsel %vm1364, %v1036, %v1492
      %v1621 = vsel %vm1365, %v1041, %v1493
      %v1622 = vsel %vm1366, %v1044, %v1494
      %v1623 = vsel %vm1367, %v1049, %v1495
      %v1624 = vsel %vm1368, %v1052, %v1496
      %v1625 = vsel %vm1369, %v1057, %v1497
      %v1626 = vsel %vm1370, %v1060, %v1498
      %v1627 = vsel %vm1371, %v1065, %v1499
      %v1628 = vsel %vm1372, %v1068, %v1500
      %v1629 = vsel %vm1373, %v1073, %v1501
      %v1630 = vsel %vm1374, %v1076, %v1502
      %v1631 = vsel %vm1375, %v1081, %v1503
      %v1632 = vsel %vm1376, %v1084, %v1504
      %v1633 = vsel %vm1377, %v1089, %v1505
      %v1634 = vsel %vm1378, %v1092, %v1506
      %v1635 = vsel %vm1379, %v1097, %v1507
      %v1636 = vsel %vm1380, %v1100, %v1508
      %v1637 = vsel %vm1381, %v1105, %v1509
      %v1638 = vsel %vm1382, %v1108, %v1510
      %v1639 = vsel %vm1383, %v1113, %v1511
      %v1640 = vsel %vm1384, %v1116, %v1512
      %v1641 = vsel %vm1385, %v1121, %v1513
      %v1642 = vsel %vm1386, %v1124, %v1514
      %v1643 = vsel %vm1387, %v1129, %v1515
      %v1644 = vsel %vm1388, %v1132, %v1516
      %v1645 = vsel %vm1389, %v1137, %v1517
      %v1646 = vsel %vm1390, %v1140, %v1518
      %v1647 = vsel %vm1391, %v1145, %v1519
      %v1648 = vsel %vm1392, %v1148, %v1520
      %v1649 = vsel %vm1393, %v1153, %v1521
      %v1650 = vsel %vm1394, %v1156, %v1522
      %v1651 = vsel %vm1395, %v1161, %v1523
      %v1652 = vsel %vm1396, %v1164, %v1524
      %v1653 = vsel %vm1397, %v1169, %v1525
      %v1654 = vsel %vm1398, %v1172, %v1526
      %v1655 = vsel %vm1399, %v1177, %v1527
      %v1656 = vsel %vm1400, %v1180, %v1528
      %v1657 = vsel %vm1401, %v1185, %v1529
      %v1658 = vsel %vm1402, %v1188, %v1530
      %v1659 = vsel %vm1403, %v1193, %v1531
      %v1660 = vsel %vm1404, %v1196, %v1532
      %v1661 = vsel %vm1405, %v1201, %v1533
      %v1662 = vsel %vm1406, %v1204, %v1534
      %v1663 = vsel %vm1407, %v1209, %v1535
      %v1664 = vsel %vm1408, %v1212, %v1536
      %v1665 = vsel %vm1409, %v1217, %v1537
      %v1666 = vsel %vm1410, %v1220, %v1538
      %v1667 = vsel %vm1411, %v1225, %v1539
      %v1668 = vsel %vm1412, %v1228, %v1540
      %v1669 = vsel %vm1413, %v1233, %v1541
      %v1670 = vsel %vm1414, %v1236, %v1542
      %v1671 = vsel %vm1415, %v1241, %v1543
      %v1672 = vsel %vm1416, %v1244, %v1544
      %v1673 = vsel %vm1417, %v1249, %v1545
      %v1674 = vsel %vm1418, %v1252, %v1546
      %v1675 = vsel %vm1419, %v1257, %v1547
      %v1676 = vsel %vm1420, %v1260, %v1548
      %v1677 = vsel %vm1421, %v1265, %v1549
      %v1678 = vsel %vm1422, %v1268, %v1550
      %v1679 = vsel %vm1423, %v1273, %v1551
      %v1680 = vsel %vm1424, %v1276, %v1552
      %v1681 = vsel %vm1425, %v1281, %v1553
      %v1682 = vsel %vm1426, %v1284, %v1554
      %v1683 = vsel %vm1427, %v1289, %v1555
      %v1684 = vsel %vm1428, %v1292, %v1556
      %v1685 = vsel %vm1429, %v1297, %v1557
      %v1686 = vsel %vm1430, %v1300, %v1558
      %v1687 = vpack.c.bf16 %v1560, %v1559
      %v1688 = vpack.c.bf16 %v1562, %v1561
      %v1689 = vpack.c.bf16 %v1564, %v1563
      %v1690 = vpack.c.bf16 %v1566, %v1565
      %v1691 = vpack.c.bf16 %v1568, %v1567
      %v1692 = vpack.c.bf16 %v1570, %v1569
      %v1693 = vpack.c.bf16 %v1572, %v1571
      %v1694 = vpack.c.bf16 %v1574, %v1573
      %v1695 = vpack.c.bf16 %v1576, %v1575
      %v1696 = vpack.c.bf16 %v1578, %v1577
      %v1697 = vpack.c.bf16 %v1580, %v1579
      %v1698 = vpack.c.bf16 %v1582, %v1581
      %v1699 = vpack.c.bf16 %v1584, %v1583
      %v1700 = vpack.c.bf16 %v1586, %v1585
      %v1701 = vpack.c.bf16 %v1588, %v1587
      %v1702 = vpack.c.bf16 %v1590, %v1589
      %v1703 = vpack.c.bf16 %v1592, %v1591
      %v1704 = vpack.c.bf16 %v1594, %v1593
      %v1705 = vpack.c.bf16 %v1596, %v1595
      %v1706 = vpack.c.bf16 %v1598, %v1597
      %v1707 = vpack.c.bf16 %v1600, %v1599
      %v1708 = vpack.c.bf16 %v1602, %v1601
      %v1709 = vpack.c.bf16 %v1604, %v1603
      %v1710 = vpack.c.bf16 %v1606, %v1605
      %v1711 = vpack.c.bf16 %v1608, %v1607
      %v1712 = vpack.c.bf16 %v1610, %v1609
      %v1713 = vpack.c.bf16 %v1612, %v1611
      %v1714 = vpack.c.bf16 %v1614, %v1613
      %v1715 = vpack.c.bf16 %v1616, %v1615
      %v1716 = vpack.c.bf16 %v1618, %v1617
      %v1717 = vpack.c.bf16 %v1620, %v1619
      %v1718 = vpack.c.bf16 %v1622, %v1621
      %v1719 = vpack.c.bf16 %v1624, %v1623
      %v1720 = vpack.c.bf16 %v1626, %v1625
      %v1721 = vpack.c.bf16 %v1628, %v1627
      %v1722 = vpack.c.bf16 %v1630, %v1629
      %v1723 = vpack.c.bf16 %v1632, %v1631
      %v1724 = vpack.c.bf16 %v1634, %v1633
      %v1725 = vpack.c.bf16 %v1636, %v1635
      %v1726 = vpack.c.bf16 %v1638, %v1637
      %v1727 = vpack.c.bf16 %v1640, %v1639
      %v1728 = vpack.c.bf16 %v1642, %v1641
      %v1729 = vpack.c.bf16 %v1644, %v1643
      %v1730 = vpack.c.bf16 %v1646, %v1645
      %v1731 = vpack.c.bf16 %v1648, %v1647
      %v1732 = vpack.c.bf16 %v1650, %v1649
      %v1733 = vpack.c.bf16 %v1652, %v1651
      %v1734 = vpack.c.bf16 %v1654, %v1653
      %v1735 = vpack.c.bf16 %v1656, %v1655
      %v1736 = vpack.c.bf16 %v1658, %v1657
      %v1737 = vpack.c.bf16 %v1660, %v1659
      %v1738 = vpack.c.bf16 %v1662, %v1661
      %v1739 = vpack.c.bf16 %v1664, %v1663
      %v1740 = vpack.c.bf16 %v1666, %v1665
      %v1741 = vpack.c.bf16 %v1668, %v1667
      %v1742 = vpack.c.bf16 %v1670, %v1669
      %v1743 = vpack.c.bf16 %v1672, %v1671
      %v1744 = vpack.c.bf16 %v1674, %v1673
      %v1745 = vpack.c.bf16 %v1676, %v1675
      %v1746 = vpack.c.bf16 %v1678, %v1677
      %v1747 = vpack.c.bf16 %v1680, %v1679
      %v1748 = vpack.c.bf16 %v1682, %v1681
      %v1749 = vpack.c.bf16 %v1684, %v1683
      %v1750 = vpack.c.bf16 %v1686, %v1685
      %v1815 = vunpack.c.l.b16 %v1687
      %v1816 = vunpack.c.h.b16 %v1687
      %v1817 = vunpack.c.l.b16 %v1688
      %v1818 = vunpack.c.h.b16 %v1688
      %v1819 = vunpack.c.l.b16 %v1689
      %v1820 = vunpack.c.h.b16 %v1689
      %v1821 = vunpack.c.l.b16 %v1690
      %v1822 = vunpack.c.h.b16 %v1690
      %v1823 = vunpack.c.l.b16 %v1691
      %v1824 = vunpack.c.h.b16 %v1691
      %v1825 = vunpack.c.l.b16 %v1692
      %v1826 = vunpack.c.h.b16 %v1692
      %v1827 = vunpack.c.l.b16 %v1693
      %v1828 = vunpack.c.h.b16 %v1693
      %v1829 = vunpack.c.l.b16 %v1694
      %v1830 = vunpack.c.h.b16 %v1694
      %v1831 = vunpack.c.l.b16 %v1695
      %v1832 = vunpack.c.h.b16 %v1695
      %v1833 = vunpack.c.l.b16 %v1696
      %v1834 = vunpack.c.h.b16 %v1696
      %v1835 = vunpack.c.l.b16 %v1697
      %v1836 = vunpack.c.h.b16 %v1697
      %v1837 = vunpack.c.l.b16 %v1698
      %v1838 = vunpack.c.h.b16 %v1698
      %v1839 = vunpack.c.l.b16 %v1699
      %v1840 = vunpack.c.h.b16 %v1699
      %v1841 = vunpack.c.l.b16 %v1700
      %v1842 = vunpack.c.h.b16 %v1700
      %v1843 = vunpack.c.l.b16 %v1701
      %v1844 = vunpack.c.h.b16 %v1701
      %v1845 = vunpack.c.l.b16 %v1702
      %v1846 = vunpack.c.h.b16 %v1702
      %v1847 = vunpack.c.l.b16 %v1703
      %v1848 = vunpack.c.h.b16 %v1703
      %v1849 = vunpack.c.l.b16 %v1704
      %v1850 = vunpack.c.h.b16 %v1704
      %v1851 = vunpack.c.l.b16 %v1705
      %v1852 = vunpack.c.h.b16 %v1705
      %v1853 = vunpack.c.l.b16 %v1706
      %v1854 = vunpack.c.h.b16 %v1706
      %v1855 = vunpack.c.l.b16 %v1707
      %v1856 = vunpack.c.h.b16 %v1707
      %v1857 = vunpack.c.l.b16 %v1708
      %v1858 = vunpack.c.h.b16 %v1708
      %v1859 = vunpack.c.l.b16 %v1709
      %v1860 = vunpack.c.h.b16 %v1709
      %v1861 = vunpack.c.l.b16 %v1710
      %v1862 = vunpack.c.h.b16 %v1710
      %v1863 = vunpack.c.l.b16 %v1711
      %v1864 = vunpack.c.h.b16 %v1711
      %v1865 = vunpack.c.l.b16 %v1712
      %v1866 = vunpack.c.h.b16 %v1712
      %v1867 = vunpack.c.l.b16 %v1713
      %v1868 = vunpack.c.h.b16 %v1713
      %v1869 = vunpack.c.l.b16 %v1714
      %v1870 = vunpack.c.h.b16 %v1714
      %v1871 = vunpack.c.l.b16 %v1715
      %v1872 = vunpack.c.h.b16 %v1715
      %v1873 = vunpack.c.l.b16 %v1716
      %v1874 = vunpack.c.h.b16 %v1716
      %v1875 = vunpack.c.l.b16 %v1717
      %v1876 = vunpack.c.h.b16 %v1717
      %v1877 = vunpack.c.l.b16 %v1718
      %v1878 = vunpack.c.h.b16 %v1718
      %v1879 = vunpack.c.l.b16 %v1719
      %v1880 = vunpack.c.h.b16 %v1719
      %v1881 = vunpack.c.l.b16 %v1720
      %v1882 = vunpack.c.h.b16 %v1720
      %v1883 = vunpack.c.l.b16 %v1721
      %v1884 = vunpack.c.h.b16 %v1721
      %v1885 = vunpack.c.l.b16 %v1722
      %v1886 = vunpack.c.h.b16 %v1722
      %v1887 = vunpack.c.l.b16 %v1723
      %v1888 = vunpack.c.h.b16 %v1723
      %v1889 = vunpack.c.l.b16 %v1724
      %v1890 = vunpack.c.h.b16 %v1724
      %v1891 = vunpack.c.l.b16 %v1725
      %v1892 = vunpack.c.h.b16 %v1725
      %v1893 = vunpack.c.l.b16 %v1726
      %v1894 = vunpack.c.h.b16 %v1726
      %v1895 = vunpack.c.l.b16 %v1727
      %v1896 = vunpack.c.h.b16 %v1727
      %v1897 = vunpack.c.l.b16 %v1728
      %v1898 = vunpack.c.h.b16 %v1728
      %v1899 = vunpack.c.l.b16 %v1729
      %v1900 = vunpack.c.h.b16 %v1729
      %v1901 = vunpack.c.l.b16 %v1730
      %v1902 = vunpack.c.h.b16 %v1730
      %v1903 = vunpack.c.l.b16 %v1731
      %v1904 = vunpack.c.h.b16 %v1731
      %v1905 = vunpack.c.l.b16 %v1732
      %v1906 = vunpack.c.h.b16 %v1732
      %v1907 = vunpack.c.l.b16 %v1733
      %v1908 = vunpack.c.h.b16 %v1733
      %v1909 = vunpack.c.l.b16 %v1734
      %v1910 = vunpack.c.h.b16 %v1734
      %v1911 = vunpack.c.l.b16 %v1735
      %v1912 = vunpack.c.h.b16 %v1735
      %v1913 = vunpack.c.l.b16 %v1736
      %v1914 = vunpack.c.h.b16 %v1736
      %v1915 = vunpack.c.l.b16 %v1737
      %v1916 = vunpack.c.h.b16 %v1737
      %v1917 = vunpack.c.l.b16 %v1738
      %v1918 = vunpack.c.h.b16 %v1738
      %v1919 = vunpack.c.l.b16 %v1739
      %v1920 = vunpack.c.h.b16 %v1739
      %v1921 = vunpack.c.l.b16 %v1740
      %v1922 = vunpack.c.h.b16 %v1740
      %v1923 = vunpack.c.l.b16 %v1741
      %v1924 = vunpack.c.h.b16 %v1741
      %v1925 = vunpack.c.l.b16 %v1742
      %v1926 = vunpack.c.h.b16 %v1742
      %v1927 = vunpack.c.l.b16 %v1743
      %v1928 = vunpack.c.h.b16 %v1743
      %v1929 = vunpack.c.l.b16 %v1744
      %v1930 = vunpack.c.h.b16 %v1744
      %v1931 = vunpack.c.l.b16 %v1745
      %v1932 = vunpack.c.h.b16 %v1745
      %v1933 = vunpack.c.l.b16 %v1746
      %v1934 = vunpack.c.h.b16 %v1746
      %v1935 = vunpack.c.l.b16 %v1747
      %v1936 = vunpack.c.h.b16 %v1747
      %v1937 = vunpack.c.l.b16 %v1748
      %v1938 = vunpack.c.h.b16 %v1748
      %v1939 = vunpack.c.l.b16 %v1749
      %v1940 = vunpack.c.h.b16 %v1749
      %v1941 = vunpack.c.l.b16 %v1750
      %v1942 = vunpack.c.h.b16 %v1750
      %v1943 = vpack.c.b16 %v1815, %v1815
      %v1944 = vpack.c.b16 %v1816, %v1816
      %v1945 = vpack.c.b16 %v1817, %v1817
      %v1946 = vpack.c.b16 %v1818, %v1818
      %v1947 = vpack.c.b16 %v1819, %v1819
      %v1948 = vpack.c.b16 %v1820, %v1820
      %v1949 = vpack.c.b16 %v1821, %v1821
      %v1950 = vpack.c.b16 %v1822, %v1822
      %v1951 = vpack.c.b16 %v1823, %v1823
      %v1952 = vpack.c.b16 %v1824, %v1824
      %v1953 = vpack.c.b16 %v1825, %v1825
      %v1954 = vpack.c.b16 %v1826, %v1826
      %v1955 = vpack.c.b16 %v1827, %v1827
      %v1956 = vpack.c.b16 %v1828, %v1828
      %v1957 = vpack.c.b16 %v1829, %v1829
      %v1958 = vpack.c.b16 %v1830, %v1830
      %v1959 = vpack.c.b16 %v1831, %v1831
      %v1960 = vpack.c.b16 %v1832, %v1832
      %v1961 = vpack.c.b16 %v1833, %v1833
      %v1962 = vpack.c.b16 %v1834, %v1834
      %v1963 = vpack.c.b16 %v1835, %v1835
      %v1964 = vpack.c.b16 %v1836, %v1836
      %v1965 = vpack.c.b16 %v1837, %v1837
      %v1966 = vpack.c.b16 %v1838, %v1838
      %v1967 = vpack.c.b16 %v1839, %v1839
      %v1968 = vpack.c.b16 %v1840, %v1840
      %v1969 = vpack.c.b16 %v1841, %v1841
      %v1970 = vpack.c.b16 %v1842, %v1842
      %v1971 = vpack.c.b16 %v1843, %v1843
      %v1972 = vpack.c.b16 %v1844, %v1844
      %v1973 = vpack.c.b16 %v1845, %v1845
      %v1974 = vpack.c.b16 %v1846, %v1846
      %v1975 = vpack.c.b16 %v1847, %v1847
      %v1976 = vpack.c.b16 %v1848, %v1848
      %v1977 = vpack.c.b16 %v1849, %v1849
      %v1978 = vpack.c.b16 %v1850, %v1850
      %v1979 = vpack.c.b16 %v1851, %v1851
      %v1980 = vpack.c.b16 %v1852, %v1852
      %v1981 = vpack.c.b16 %v1853, %v1853
      %v1982 = vpack.c.b16 %v1854, %v1854
      %v1983 = vpack.c.b16 %v1855, %v1855
      %v1984 = vpack.c.b16 %v1856, %v1856
      %v1985 = vpack.c.b16 %v1857, %v1857
      %v1986 = vpack.c.b16 %v1858, %v1858
      %v1987 = vpack.c.b16 %v1859, %v1859
      %v1988 = vpack.c.b16 %v1860, %v1860
      %v1989 = vpack.c.b16 %v1861, %v1861
      %v1990 = vpack.c.b16 %v1862, %v1862
      %v1991 = vpack.c.b16 %v1863, %v1863
      %v1992 = vpack.c.b16 %v1864, %v1864
      %v1993 = vpack.c.b16 %v1865, %v1865
      %v1994 = vpack.c.b16 %v1866, %v1866
      %v1995 = vpack.c.b16 %v1867, %v1867
      %v1996 = vpack.c.b16 %v1868, %v1868
      %v1997 = vpack.c.b16 %v1869, %v1869
      %v1998 = vpack.c.b16 %v1870, %v1870
      %v1999 = vpack.c.b16 %v1871, %v1871
      %v2000 = vpack.c.b16 %v1872, %v1872
      %v2001 = vpack.c.b16 %v1873, %v1873
      %v2002 = vpack.c.b16 %v1874, %v1874
      %v2003 = vpack.c.b16 %v1875, %v1875
      %v2004 = vpack.c.b16 %v1876, %v1876
      %v2005 = vpack.c.b16 %v1877, %v1877
      %v2006 = vpack.c.b16 %v1878, %v1878
      %v2007 = vpack.c.b16 %v1879, %v1879
      %v2008 = vpack.c.b16 %v1880, %v1880
      %v2009 = vpack.c.b16 %v1881, %v1881
      %v2010 = vpack.c.b16 %v1882, %v1882
      %v2011 = vpack.c.b16 %v1883, %v1883
      %v2012 = vpack.c.b16 %v1884, %v1884
      %v2013 = vpack.c.b16 %v1885, %v1885
      %v2014 = vpack.c.b16 %v1886, %v1886
      %v2015 = vpack.c.b16 %v1887, %v1887
      %v2016 = vpack.c.b16 %v1888, %v1888
      %v2017 = vpack.c.b16 %v1889, %v1889
      %v2018 = vpack.c.b16 %v1890, %v1890
      %v2019 = vpack.c.b16 %v1891, %v1891
      %v2020 = vpack.c.b16 %v1892, %v1892
      %v2021 = vpack.c.b16 %v1893, %v1893
      %v2022 = vpack.c.b16 %v1894, %v1894
      %v2023 = vpack.c.b16 %v1895, %v1895
      %v2024 = vpack.c.b16 %v1896, %v1896
      %v2025 = vpack.c.b16 %v1897, %v1897
      %v2026 = vpack.c.b16 %v1898, %v1898
      %v2027 = vpack.c.b16 %v1899, %v1899
      %v2028 = vpack.c.b16 %v1900, %v1900
      %v2029 = vpack.c.b16 %v1901, %v1901
      %v2030 = vpack.c.b16 %v1902, %v1902
      %v2031 = vpack.c.b16 %v1903, %v1903
      %v2032 = vpack.c.b16 %v1904, %v1904
      %v2033 = vpack.c.b16 %v1905, %v1905
      %v2034 = vpack.c.b16 %v1906, %v1906
      %v2035 = vpack.c.b16 %v1907, %v1907
      %v2036 = vpack.c.b16 %v1908, %v1908
      %v2037 = vpack.c.b16 %v1909, %v1909
      %v2038 = vpack.c.b16 %v1910, %v1910
      %v2039 = vpack.c.b16 %v1911, %v1911
      %v2040 = vpack.c.b16 %v1912, %v1912
      %v2041 = vpack.c.b16 %v1913, %v1913
      %v2042 = vpack.c.b16 %v1914, %v1914
      %v2043 = vpack.c.b16 %v1915, %v1915
      %v2044 = vpack.c.b16 %v1916, %v1916
      %v2045 = vpack.c.b16 %v1917, %v1917
      %v2046 = vpack.c.b16 %v1918, %v1918
      %v2047 = vpack.c.b16 %v1919, %v1919
      %v2048 = vpack.c.b16 %v1920, %v1920
      %v2049 = vpack.c.b16 %v1921, %v1921
      %v2050 = vpack.c.b16 %v1922, %v1922
      %v2051 = vpack.c.b16 %v1923, %v1923
      %v2052 = vpack.c.b16 %v1924, %v1924
      %v2053 = vpack.c.b16 %v1925, %v1925
      %v2054 = vpack.c.b16 %v1926, %v1926
      %v2055 = vpack.c.b16 %v1927, %v1927
      %v2056 = vpack.c.b16 %v1928, %v1928
      %v2057 = vpack.c.b16 %v1929, %v1929
      %v2058 = vpack.c.b16 %v1930, %v1930
      %v2059 = vpack.c.b16 %v1931, %v1931
      %v2060 = vpack.c.b16 %v1932, %v1932
      %v2061 = vpack.c.b16 %v1933, %v1933
      %v2062 = vpack.c.b16 %v1934, %v1934
      %v2063 = vpack.c.b16 %v1935, %v1935
      %v2064 = vpack.c.b16 %v1936, %v1936
      %v2065 = vpack.c.b16 %v1937, %v1937
      %v2066 = vpack.c.b16 %v1938, %v1938
      %v2067 = vpack.c.b16 %v1939, %v1939
      %v2068 = vpack.c.b16 %v1940, %v1940
      %v2069 = vpack.c.b16 %v1941, %v1941
      %v2070 = vpack.c.b16 %v1942, %v1942
      %2199 = vst [vmem:[%s172] sm:$0xf] %v1943
      %2200 = vst [vmem:[%s172 + $0x4] sm:$0xf] %v1944
      %2201 = vst [vmem:[%s172 + $0x8] sm:$0xf] %v1945
      %2202 = vst [vmem:[%s172 + $0xc] sm:$0xf] %v1946
      %2203 = vst [vmem:[%s172 + $0x10] sm:$0xf] %v1947
      %2204 = vst [vmem:[%s172 + $0x14] sm:$0xf] %v1948
      %2205 = vst [vmem:[%s172 + $0x18] sm:$0xf] %v1949
      %2206 = vst [vmem:[%s172 + $0x1c] sm:$0xf] %v1950
      %2207 = vst [vmem:[%s172 + $0x20] sm:$0xf] %v1951
      %2208 = vst [vmem:[%s172 + $0x24] sm:$0xf] %v1952
      %2209 = vst [vmem:[%s172 + $0x28] sm:$0xf] %v1953
      %2210 = vst [vmem:[%s172 + $0x2c] sm:$0xf] %v1954
      %2211 = vst [vmem:[%s172 + $0x30] sm:$0xf] %v1955
      %2212 = vst [vmem:[%s172 + $0x34] sm:$0xf] %v1956
      %2213 = vst [vmem:[%s172 + $0x38] sm:$0xf] %v1957
      %2214 = vst [vmem:[%s172 + $0x3c] sm:$0xf] %v1958
      %2215 = vst [vmem:[%s172 + $0x40] sm:$0xf] %v1959
      %2216 = vst [vmem:[%s172 + $0x44] sm:$0xf] %v1960
      %2217 = vst [vmem:[%s172 + $0x48] sm:$0xf] %v1961
      %2218 = vst [vmem:[%s172 + $0x4c] sm:$0xf] %v1962
      %2219 = vst [vmem:[%s172 + $0x50] sm:$0xf] %v1963
      %2220 = vst [vmem:[%s172 + $0x54] sm:$0xf] %v1964
      %2221 = vst [vmem:[%s172 + $0x58] sm:$0xf] %v1965
      %2222 = vst [vmem:[%s172 + $0x5c] sm:$0xf] %v1966
      %2223 = vst [vmem:[%s172 + $0x60] sm:$0xf] %v1967
      %2224 = vst [vmem:[%s172 + $0x64] sm:$0xf] %v1968
      %2225 = vst [vmem:[%s172 + $0x68] sm:$0xf] %v1969
      %2226 = vst [vmem:[%s172 + $0x6c] sm:$0xf] %v1970
      %2227 = vst [vmem:[%s172 + $0x70] sm:$0xf] %v1971
      %2228 = vst [vmem:[%s172 + $0x74] sm:$0xf] %v1972
      %2229 = vst [vmem:[%s172 + $0x78] sm:$0xf] %v1973
      %2230 = vst [vmem:[%s172 + $0x7c] sm:$0xf] %v1974
      %2231 = vst [vmem:[%s172 + $0x80] sm:$0xf] %v1975
      %2232 = vst [vmem:[%s172 + $0x84] sm:$0xf] %v1976
      %2233 = vst [vmem:[%s172 + $0x88] sm:$0xf] %v1977
      %2234 = vst [vmem:[%s172 + $0x8c] sm:$0xf] %v1978
      %2235 = vst [vmem:[%s172 + $0x90] sm:$0xf] %v1979
      %2236 = vst [vmem:[%s172 + $0x94] sm:$0xf] %v1980
      %2237 = vst [vmem:[%s172 + $0x98] sm:$0xf] %v1981
      %2238 = vst [vmem:[%s172 + $0x9c] sm:$0xf] %v1982
      %2239 = vst [vmem:[%s172 + $0xa0] sm:$0xf] %v1983
      %2240 = vst [vmem:[%s172 + $0xa4] sm:$0xf] %v1984
      %2241 = vst [vmem:[%s172 + $0xa8] sm:$0xf] %v1985
      %2242 = vst [vmem:[%s172 + $0xac] sm:$0xf] %v1986
      %2243 = vst [vmem:[%s172 + $0xb0] sm:$0xf] %v1987
      %2244 = vst [vmem:[%s172 + $0xb4] sm:$0xf] %v1988
      %2245 = vst [vmem:[%s172 + $0xb8] sm:$0xf] %v1989
      %2246 = vst [vmem:[%s172 + $0xbc] sm:$0xf] %v1990
      %2247 = vst [vmem:[%s172 + $0xc0] sm:$0xf] %v1991
      %2248 = vst [vmem:[%s172 + $0xc4] sm:$0xf] %v1992
      %2249 = vst [vmem:[%s172 + $0xc8] sm:$0xf] %v1993
      %2250 = vst [vmem:[%s172 + $0xcc] sm:$0xf] %v1994
      %2251 = vst [vmem:[%s172 + $0xd0] sm:$0xf] %v1995
      %2252 = vst [vmem:[%s172 + $0xd4] sm:$0xf] %v1996
      %2253 = vst [vmem:[%s172 + $0xd8] sm:$0xf] %v1997
      %2254 = vst [vmem:[%s172 + $0xdc] sm:$0xf] %v1998
      %2255 = vst [vmem:[%s172 + $0xe0] sm:$0xf] %v1999
      %2256 = vst [vmem:[%s172 + $0xe4] sm:$0xf] %v2000
      %2257 = vst [vmem:[%s172 + $0xe8] sm:$0xf] %v2001
      %2258 = vst [vmem:[%s172 + $0xec] sm:$0xf] %v2002
      %2259 = vst [vmem:[%s172 + $0xf0] sm:$0xf] %v2003
      %2260 = vst [vmem:[%s172 + $0xf4] sm:$0xf] %v2004
      %2261 = vst [vmem:[%s172 + $0xf8] sm:$0xf] %v2005
      %2262 = vst [vmem:[%s172 + $0xfc] sm:$0xf] %v2006
      %2263 = vst [vmem:[%s172 + $0x100] sm:$0xf] %v2007
      %2264 = vst [vmem:[%s172 + $0x104] sm:$0xf] %v2008
      %2265 = vst [vmem:[%s172 + $0x108] sm:$0xf] %v2009
      %2266 = vst [vmem:[%s172 + $0x10c] sm:$0xf] %v2010
      %2267 = vst [vmem:[%s172 + $0x110] sm:$0xf] %v2011
      %2268 = vst [vmem:[%s172 + $0x114] sm:$0xf] %v2012
      %2269 = vst [vmem:[%s172 + $0x118] sm:$0xf] %v2013
      %2270 = vst [vmem:[%s172 + $0x11c] sm:$0xf] %v2014
      %2271 = vst [vmem:[%s172 + $0x120] sm:$0xf] %v2015
      %2272 = vst [vmem:[%s172 + $0x124] sm:$0xf] %v2016
      %2273 = vst [vmem:[%s172 + $0x128] sm:$0xf] %v2017
      %2274 = vst [vmem:[%s172 + $0x12c] sm:$0xf] %v2018
      %2275 = vst [vmem:[%s172 + $0x130] sm:$0xf] %v2019
      %2276 = vst [vmem:[%s172 + $0x134] sm:$0xf] %v2020
      %2277 = vst [vmem:[%s172 + $0x138] sm:$0xf] %v2021
      %2278 = vst [vmem:[%s172 + $0x13c] sm:$0xf] %v2022
      %2279 = vst [vmem:[%s172 + $0x140] sm:$0xf] %v2023
      %2280 = vst [vmem:[%s172 + $0x144] sm:$0xf] %v2024
      %2281 = vst [vmem:[%s172 + $0x148] sm:$0xf] %v2025
      %2282 = vst [vmem:[%s172 + $0x14c] sm:$0xf] %v2026
      %2283 = vst [vmem:[%s172 + $0x150] sm:$0xf] %v2027
      %2284 = vst [vmem:[%s172 + $0x154] sm:$0xf] %v2028
      %2285 = vst [vmem:[%s172 + $0x158] sm:$0xf] %v2029
      %2286 = vst [vmem:[%s172 + $0x15c] sm:$0xf] %v2030
      %2287 = vst [vmem:[%s172 + $0x160] sm:$0xf] %v2031
      %2288 = vst [vmem:[%s172 + $0x164] sm:$0xf] %v2032
      %2289 = vst [vmem:[%s172 + $0x168] sm:$0xf] %v2033
      %2290 = vst [vmem:[%s172 + $0x16c] sm:$0xf] %v2034
      %2291 = vst [vmem:[%s172 + $0x170] sm:$0xf] %v2035
      %2292 = vst [vmem:[%s172 + $0x174] sm:$0xf] %v2036
      %2293 = vst [vmem:[%s172 + $0x178] sm:$0xf] %v2037
      %2294 = vst [vmem:[%s172 + $0x17c] sm:$0xf] %v2038
      %2295 = vst [vmem:[%s172 + $0x180] sm:$0xf] %v2039
      %2296 = vst [vmem:[%s172 + $0x184] sm:$0xf] %v2040
      %2297 = vst [vmem:[%s172 + $0x188] sm:$0xf] %v2041
      %2298 = vst [vmem:[%s172 + $0x18c] sm:$0xf] %v2042
      %2299 = vst [vmem:[%s172 + $0x190] sm:$0xf] %v2043
      %2300 = vst [vmem:[%s172 + $0x194] sm:$0xf] %v2044
      %2301 = vst [vmem:[%s172 + $0x198] sm:$0xf] %v2045
      %2302 = vst [vmem:[%s172 + $0x19c] sm:$0xf] %v2046
      %2303 = vst [vmem:[%s172 + $0x1a0] sm:$0xf] %v2047
      %2304 = vst [vmem:[%s172 + $0x1a4] sm:$0xf] %v2048
      %2305 = vst [vmem:[%s172 + $0x1a8] sm:$0xf] %v2049
      %2306 = vst [vmem:[%s172 + $0x1ac] sm:$0xf] %v2050
      %2307 = vst [vmem:[%s172 + $0x1b0] sm:$0xf] %v2051
      %2308 = vst [vmem:[%s172 + $0x1b4] sm:$0xf] %v2052
      %2309 = vst [vmem:[%s172 + $0x1b8] sm:$0xf] %v2053
      %2310 = vst [vmem:[%s172 + $0x1bc] sm:$0xf] %v2054
      %2311 = vst [vmem:[%s172 + $0x1c0] sm:$0xf] %v2055
      %2312 = vst [vmem:[%s172 + $0x1c4] sm:$0xf] %v2056
      %2313 = vst [vmem:[%s172 + $0x1c8] sm:$0xf] %v2057
      %2314 = vst [vmem:[%s172 + $0x1cc] sm:$0xf] %v2058
      %2315 = vst [vmem:[%s172 + $0x1d0] sm:$0xf] %v2059
      %2316 = vst [vmem:[%s172 + $0x1d4] sm:$0xf] %v2060
      %2317 = vst [vmem:[%s172 + $0x1d8] sm:$0xf] %v2061
      %2318 = vst [vmem:[%s172 + $0x1dc] sm:$0xf] %v2062
      %2319 = vst [vmem:[%s172 + $0x1e0] sm:$0xf] %v2063
      %2320 = vst [vmem:[%s172 + $0x1e4] sm:$0xf] %v2064
      %2321 = vst [vmem:[%s172 + $0x1e8] sm:$0xf] %v2065
      %2322 = vst [vmem:[%s172 + $0x1ec] sm:$0xf] %v2066
      %2323 = vst [vmem:[%s172 + $0x1f0] sm:$0xf] %v2067
      %2324 = vst [vmem:[%s172 + $0x1f4] sm:$0xf] %v2068
      %2325 = vst [vmem:[%s172 + $0x1f8] sm:$0xf] %v2069
      %2326 = vst [vmem:[%s172 + $0x1fc] sm:$0xf] %v2070
      %s2327 = smul.u32 128, %s14
      %p2328 = scmp.lt.s32.totalorder %s2327, 255
      %s2329 = scalar_select %p2328, %s2327, 255
      %s2330 = smul.addr %s2329, 4
      %s2331 = scalar_lea.vmem %s3, %s2330
      // Predicated region
      $region33: #{discriminator_forward.4} parent=31 // pred_check
        %p2332 = pneg %p100
      $region34: #{discriminator_forward.4} parent=31 // pred_check_branch
        %2334 = sbr.rel (%p2332) target = $region36
      $region35: #{discriminator_forward.4} parent=31 // pred_region
        %s2335 = smul.u32 128, %s14
      $region36: #{discriminator_forward.4} parent=31 // pred_fallthru
        _
    $region32: #{discriminator_forward.4} parent=5 // pred_fallthru
      _
    %p2336 = scmp.le.s32.totalorder 2, %s9
    // Predicated region
    $region37: #{discriminator_forward.4} parent=5 // pred_check
      %p2337 = pneg %p2336
    $region38: #{discriminator_forward.4} parent=5 // pred_check_branch
      %2339 = sbr.rel (%p2337) target = $region40
    $region39: #{discriminator_forward.4} parent=5 // pred_region
      %s2340 = ssub.s32 %s9, 2
      // Predicated region
      $region41: #{discriminator_forward.4} parent=39 // pred_check
        %p2341 = pneg %p106
      $region42: #{discriminator_forward.4} parent=39 // pred_check_branch
        %2343 = sbr.rel (%p2341) target = $region44
      $region43: #{discriminator_forward.4} parent=39 // pred_region
        %s2344 = smul.u32 128, %s15
        %p2345 = scmp.lt.s32.totalorder %s2344, 255
        %s2346 = scalar_select %p2345, %s2344, 255
        %s2347 = smul.addr %s2346, 4
        %s2348 = scalar_lea.vmem %s3, %s2347
      $region44: #{discriminator_forward.4} parent=39 // pred_fallthru
        _
    $region40: #{discriminator_forward.4} parent=5 // pred_fallthru
      _
  $region6: #{discriminator_forward.4} parent=0 // loop_footer
    %s13 = sadd.s32 1, %s9
  $region7: #{discriminator_forward.4} parent=0 // loop_footer_branch
    %8 = sbr.rel target = $region3
  $region8: #{discriminator_forward.4} parent=0 // loop_exit
    _

// kernel: discriminator_forward.5
$region0: #{discriminator_forward.5}
  #allocation0 [shape = 'u32[]', space=smem, size = 0x4, offset = 0x4, fixed_abs, tag = 'smem constant byte address 0x4 - core index']
  #allocation1 [shape = 'u32[144,128]{1,0:T(1,128)}', space=vmem, size = 0x12000, scoped, tag = 'internal scratch']
  %s0 = inlined_call_operand.vmem [shape: bf16[512,128], index: 0, kind: input, shape index: {}]
  %s1 = inlined_call_operand.vmem [shape: bf16[128,128], index: 1, kind: input, shape index: {}]
  %s2 = inlined_call_operand.vmem [shape: f32[1,128], index: 2, kind: input, shape index: {}]
  %s3 = inlined_call_operand.vmem [shape: f32[1,128], index: 3, kind: input, shape index: {}]
  %s4 = inlined_call_operand.vmem [shape: bf16[512,128], index: 4, kind: output, shape index: {}]
  %s5 = sld [smem:[#allocation0]]
  $region26: #{discriminator_forward.5} parent=0
    _
  %s7 = ssub.s32 1, %s5
  %s8 = scalar_select 0, %s7, %s5
  // Predicated region
  $region2: #{discriminator_forward.5} parent=0 // pred_check
    _
  $region3: #{discriminator_forward.5} parent=0 // pred_check_branch
    %10 = sbr.rel (0) target = $region5
  $region4: #{discriminator_forward.5} parent=0 // pred_region
    _
  $region5: #{discriminator_forward.5} parent=0 // pred_fallthru
    _
  // Predicated region
  $region6: #{discriminator_forward.5} parent=0 // pred_check
    _
  $region7: #{discriminator_forward.5} parent=0 // pred_check_branch
    %12 = sbr.rel (0) target = $region9
  $region8: #{discriminator_forward.5} parent=0 // pred_region
    _
  $region9: #{discriminator_forward.5} parent=0 // pred_fallthru
    _
  // Predicated region
  $region10: #{discriminator_forward.5} parent=0 // pred_check
    _
  $region11: #{discriminator_forward.5} parent=0 // pred_check_branch
    %14 = sbr.rel (0) target = $region13
  $region12: #{discriminator_forward.5} parent=0 // pred_region
    _
  $region13: #{discriminator_forward.5} parent=0 // pred_fallthru
    _
  // Predicated region
  $region14: #{discriminator_forward.5} parent=0 // pred_check
    _
  $region15: #{discriminator_forward.5} parent=0 // pred_check_branch
    %16 = sbr.rel (0) target = $region17
  $region16: #{discriminator_forward.5} parent=0 // pred_region
    _
  $region17: #{discriminator_forward.5} parent=0 // pred_fallthru
    _
  %v18 = vld [vmem:[%s0] sm:$0xf]
  %v19 = vld [vmem:[%s0 + $0x4] sm:$0xf]
  %v20 = vld [vmem:[%s0 + $0x8] sm:$0xf]
  %v21 = vld [vmem:[%s0 + $0xc] sm:$0xf]
  %v22 = vld [vmem:[%s0 + $0x10] sm:$0xf]
  %v23 = vld [vmem:[%s0 + $0x14] sm:$0xf]
  %v24 = vld [vmem:[%s0 + $0x18] sm:$0xf]
  %v25 = vld [vmem:[%s0 + $0x1c] sm:$0xf]
  %v26 = vld [vmem:[%s0 + $0x20] sm:$0xf]
  %v27 = vld [vmem:[%s0 + $0x24] sm:$0xf]
  %v28 = vld [vmem:[%s0 + $0x28] sm:$0xf]
  %v29 = vld [vmem:[%s0 + $0x2c] sm:$0xf]
  %v30 = vld [vmem:[%s0 + $0x30] sm:$0xf]
  %v31 = vld [vmem:[%s0 + $0x34] sm:$0xf]
  %v32 = vld [vmem:[%s0 + $0x38] sm:$0xf]
  %v33 = vld [vmem:[%s0 + $0x3c] sm:$0xf]
  %v34 = vld [vmem:[%s0 + $0x40] sm:$0xf]
  %v35 = vld [vmem:[%s0 + $0x44] sm:$0xf]
  %v36 = vld [vmem:[%s0 + $0x48] sm:$0xf]
  %v37 = vld [vmem:[%s0 + $0x4c] sm:$0xf]
  %v38 = vld [vmem:[%s0 + $0x50] sm:$0xf]
  %v39 = vld [vmem:[%s0 + $0x54] sm:$0xf]
  %v40 = vld [vmem:[%s0 + $0x58] sm:$0xf]
  %v41 = vld [vmem:[%s0 + $0x5c] sm:$0xf]
  %v42 = vld [vmem:[%s0 + $0x60] sm:$0xf]
  %v43 = vld [vmem:[%s0 + $0x64] sm:$0xf]
  %v44 = vld [vmem:[%s0 + $0x68] sm:$0xf]
  %v45 = vld [vmem:[%s0 + $0x6c] sm:$0xf]
  %v46 = vld [vmem:[%s0 + $0x70] sm:$0xf]
  %v47 = vld [vmem:[%s0 + $0x74] sm:$0xf]
  %v48 = vld [vmem:[%s0 + $0x78] sm:$0xf]
  %v49 = vld [vmem:[%s0 + $0x7c] sm:$0xf]
  %v50 = vld [vmem:[%s0 + $0x80] sm:$0xf]
  %v51 = vld [vmem:[%s0 + $0x84] sm:$0xf]
  %v52 = vld [vmem:[%s0 + $0x88] sm:$0xf]
  %v53 = vld [vmem:[%s0 + $0x8c] sm:$0xf]
  %v54 = vld [vmem:[%s0 + $0x90] sm:$0xf]
  %v55 = vld [vmem:[%s0 + $0x94] sm:$0xf]
  %v56 = vld [vmem:[%s0 + $0x98] sm:$0xf]
  %v57 = vld [vmem:[%s0 + $0x9c] sm:$0xf]
  %v58 = vld [vmem:[%s0 + $0xa0] sm:$0xf]
  %v59 = vld [vmem:[%s0 + $0xa4] sm:$0xf]
  %v60 = vld [vmem:[%s0 + $0xa8] sm:$0xf]
  %v61 = vld [vmem:[%s0 + $0xac] sm:$0xf]
  %v62 = vld [vmem:[%s0 + $0xb0] sm:$0xf]
  %v63 = vld [vmem:[%s0 + $0xb4] sm:$0xf]
  %v64 = vld [vmem:[%s0 + $0xb8] sm:$0xf]
  %v65 = vld [vmem:[%s0 + $0xbc] sm:$0xf]
  %v66 = vld [vmem:[%s0 + $0xc0] sm:$0xf]
  %v67 = vld [vmem:[%s0 + $0xc4] sm:$0xf]
  %v68 = vld [vmem:[%s0 + $0xc8] sm:$0xf]
  %v69 = vld [vmem:[%s0 + $0xcc] sm:$0xf]
  %v70 = vld [vmem:[%s0 + $0xd0] sm:$0xf]
  %v71 = vld [vmem:[%s0 + $0xd4] sm:$0xf]
  %v72 = vld [vmem:[%s0 + $0xd8] sm:$0xf]
  %v73 = vld [vmem:[%s0 + $0xdc] sm:$0xf]
  %v74 = vld [vmem:[%s0 + $0xe0] sm:$0xf]
  %v75 = vld [vmem:[%s0 + $0xe4] sm:$0xf]
  %v76 = vld [vmem:[%s0 + $0xe8] sm:$0xf]
  %v77 = vld [vmem:[%s0 + $0xec] sm:$0xf]
  %v78 = vld [vmem:[%s0 + $0xf0] sm:$0xf]
  %v79 = vld [vmem:[%s0 + $0xf4] sm:$0xf]
  %v80 = vld [vmem:[%s0 + $0xf8] sm:$0xf]
  %v81 = vld [vmem:[%s0 + $0xfc] sm:$0xf]
  %v82 = vld [vmem:[%s1] sm:$0xf]
  %v83 = vld [vmem:[%s1 + $0x4] sm:$0xf]
  %v84 = vld [vmem:[%s1 + $0x8] sm:$0xf]
  %v85 = vld [vmem:[%s1 + $0xc] sm:$0xf]
  %v86 = vld [vmem:[%s1 + $0x10] sm:$0xf]
  %v87 = vld [vmem:[%s1 + $0x14] sm:$0xf]
  %v88 = vld [vmem:[%s1 + $0x18] sm:$0xf]
  %v89 = vld [vmem:[%s1 + $0x1c] sm:$0xf]
  %v90 = vld [vmem:[%s1 + $0x20] sm:$0xf]
  %v91 = vld [vmem:[%s1 + $0x24] sm:$0xf]
  %v92 = vld [vmem:[%s1 + $0x28] sm:$0xf]
  %v93 = vld [vmem:[%s1 + $0x2c] sm:$0xf]
  %v94 = vld [vmem:[%s1 + $0x30] sm:$0xf]
  %v95 = vld [vmem:[%s1 + $0x34] sm:$0xf]
  %v96 = vld [vmem:[%s1 + $0x38] sm:$0xf]
  %v97 = vld [vmem:[%s1 + $0x3c] sm:$0xf]
  %v162 = vunpack.c.l.b16 %v18
  %v163 = vunpack.c.l.b16 %v19
  %v164 = vunpack.c.l.b16 %v20
  %v165 = vunpack.c.l.b16 %v21
  %v166 = vunpack.c.l.b16 %v22
  %v167 = vunpack.c.l.b16 %v23
  %v168 = vunpack.c.l.b16 %v24
  %v169 = vunpack.c.l.b16 %v25
  %v170 = vunpack.c.l.b16 %v26
  %v171 = vunpack.c.l.b16 %v27
  %v172 = vunpack.c.l.b16 %v28
  %v173 = vunpack.c.l.b16 %v29
  %v174 = vunpack.c.l.b16 %v30
  %v175 = vunpack.c.l.b16 %v31
  %v176 = vunpack.c.l.b16 %v32
  %v177 = vunpack.c.l.b16 %v33
  %v178 = vunpack.c.l.b16 %v34
  %v179 = vunpack.c.l.b16 %v35
  %v180 = vunpack.c.l.b16 %v36
  %v181 = vunpack.c.l.b16 %v37
  %v182 = vunpack.c.l.b16 %v38
  %v183 = vunpack.c.l.b16 %v39
  %v184 = vunpack.c.l.b16 %v40
  %v185 = vunpack.c.l.b16 %v41
  %v186 = vunpack.c.l.b16 %v42
  %v187 = vunpack.c.l.b16 %v43
  %v188 = vunpack.c.l.b16 %v44
  %v189 = vunpack.c.l.b16 %v45
  %v190 = vunpack.c.l.b16 %v46
  %v191 = vunpack.c.l.b16 %v47
  %v192 = vunpack.c.l.b16 %v48
  %v193 = vunpack.c.l.b16 %v49
  %v194 = vunpack.c.l.b16 %v50
  %v195 = vunpack.c.l.b16 %v51
  %v196 = vunpack.c.l.b16 %v52
  %v197 = vunpack.c.l.b16 %v53
  %v198 = vunpack.c.l.b16 %v54
  %v199 = vunpack.c.l.b16 %v55
  %v200 = vunpack.c.l.b16 %v56
  %v201 = vunpack.c.l.b16 %v57
  %v202 = vunpack.c.l.b16 %v58
  %v203 = vunpack.c.l.b16 %v59
  %v204 = vunpack.c.l.b16 %v60
  %v205 = vunpack.c.l.b16 %v61
  %v206 = vunpack.c.l.b16 %v62
  %v207 = vunpack.c.l.b16 %v63
  %v208 = vunpack.c.l.b16 %v64
  %v209 = vunpack.c.l.b16 %v65
  %v210 = vunpack.c.l.b16 %v66
  %v211 = vunpack.c.l.b16 %v67
  %v212 = vunpack.c.l.b16 %v68
  %v213 = vunpack.c.l.b16 %v69
  %v214 = vunpack.c.l.b16 %v70
  %v215 = vunpack.c.l.b16 %v71
  %v216 = vunpack.c.l.b16 %v72
  %v217 = vunpack.c.l.b16 %v73
  %v218 = vunpack.c.l.b16 %v74
  %v219 = vunpack.c.l.b16 %v75
  %v220 = vunpack.c.l.b16 %v76
  %v221 = vunpack.c.l.b16 %v77
  %v222 = vunpack.c.l.b16 %v78
  %v223 = vunpack.c.l.b16 %v79
  %v224 = vunpack.c.l.b16 %v80
  %v225 = vunpack.c.l.b16 %v81
  %v226 = vpack.c.b16 %v163, %v162
  %v227 = vpack.c.b16 %v165, %v164
  %v228 = vpack.c.b16 %v167, %v166
  %v229 = vpack.c.b16 %v169, %v168
  %v230 = vpack.c.b16 %v171, %v170
  %v231 = vpack.c.b16 %v173, %v172
  %v232 = vpack.c.b16 %v175, %v174
  %v233 = vpack.c.b16 %v177, %v176
  %v234 = vpack.c.b16 %v179, %v178
  %v235 = vpack.c.b16 %v181, %v180
  %v236 = vpack.c.b16 %v183, %v182
  %v237 = vpack.c.b16 %v185, %v184
  %v238 = vpack.c.b16 %v187, %v186
  %v239 = vpack.c.b16 %v189, %v188
  %v240 = vpack.c.b16 %v191, %v190
  %v241 = vpack.c.b16 %v193, %v192
  %v242 = vpack.c.b16 %v195, %v194
  %v243 = vpack.c.b16 %v197, %v196
  %v244 = vpack.c.b16 %v199, %v198
  %v245 = vpack.c.b16 %v201, %v200
  %v246 = vpack.c.b16 %v203, %v202
  %v247 = vpack.c.b16 %v205, %v204
  %v248 = vpack.c.b16 %v207, %v206
  %v249 = vpack.c.b16 %v209, %v208
  %v250 = vpack.c.b16 %v211, %v210
  %v251 = vpack.c.b16 %v213, %v212
  %v252 = vpack.c.b16 %v215, %v214
  %v253 = vpack.c.b16 %v217, %v216
  %v254 = vpack.c.b16 %v219, %v218
  %v255 = vpack.c.b16 %v221, %v220
  %v256 = vpack.c.b16 %v223, %v222
  %v257 = vpack.c.b16 %v225, %v224
  %v306 = vunpack.c.l.b16 %v82
  %v307 = vunpack.c.l.b16 %v83
  %v308 = vunpack.c.l.b16 %v84
  %v309 = vunpack.c.l.b16 %v85
  %v310 = vunpack.c.l.b16 %v86
  %v311 = vunpack.c.l.b16 %v87
  %v312 = vunpack.c.l.b16 %v88
  %v313 = vunpack.c.l.b16 %v89
  %v314 = vunpack.c.l.b16 %v90
  %v315 = vunpack.c.l.b16 %v91
  %v316 = vunpack.c.l.b16 %v92
  %v317 = vunpack.c.l.b16 %v93
  %v318 = vunpack.c.l.b16 %v94
  %v319 = vunpack.c.l.b16 %v95
  %v320 = vunpack.c.l.b16 %v96
  %v321 = vunpack.c.l.b16 %v97
  %v322 = vpack.c.b16 %v307, %v306
  %v323 = vpack.c.b16 %v309, %v308
  %v324 = vpack.c.b16 %v311, %v310
  %v325 = vpack.c.b16 %v313, %v312
  %v326 = vpack.c.b16 %v315, %v314
  %v327 = vpack.c.b16 %v317, %v316
  %v328 = vpack.c.b16 %v319, %v318
  %v329 = vpack.c.b16 %v321, %v320
  %338 = vmatprep.subr.bf16.mxu0 0
  %339 = vmatpush1.bf16.msra.mxu0 %v322
  %340 = vmatprep.subr.bf16.mxu0 0
  %341 = vmatpush1.bf16.msra.mxu0 %v323
  %342 = vmatprep.subr.bf16.mxu0 0
  %343 = vmatpush1.bf16.msra.mxu0 %v324
  %344 = vmatprep.subr.bf16.mxu0 0
  %345 = vmatpush1.bf16.msra.mxu0 %v325
  %346 = vmatprep.subr.bf16.mxu0 0
  %347 = vmatpush1.bf16.msra.mxu0 %v326
  %348 = vmatprep.subr.bf16.mxu0 0
  %349 = vmatpush1.bf16.msra.mxu0 %v327
  %350 = vmatprep.subr.bf16.mxu0 0
  %351 = vmatpush1.bf16.msra.mxu0 %v328
  %352 = vmatprep.subr.bf16.mxu0 0
  %353 = vmatpush1.bf16.msra.mxu0 %v329
  %354 = vmatprep.subr.bf16.mxu0 0
  %355 = vmatpush1.bf16.msra.mxu0 0
  %356 = vmatprep.subr.bf16.mxu0 0
  %357 = vmatpush1.bf16.msra.mxu0 0
  %358 = vmatprep.subr.bf16.mxu0 0
  %359 = vmatpush1.bf16.msra.mxu0 0
  %360 = vmatprep.subr.bf16.mxu0 0
  %361 = vmatpush1.bf16.msra.mxu0 0
  %362 = vmatprep.subr.bf16.mxu0 0
  %363 = vmatpush1.bf16.msra.mxu0 0
  %364 = vmatprep.subr.bf16.mxu0 0
  %365 = vmatpush1.bf16.msra.mxu0 0
  %366 = vmatprep.subr.bf16.mxu0 0
  %367 = vmatpush1.bf16.msra.mxu0 0
  %368 = vmatprep.subr.bf16.mxu0 0
  %369 = vmatpush1.bf16.msra.mxu0 0
  %370 = vmatprep.mubr.bf16.mxu0 0
  %371 = vmatmul.mubr.bf16.gmra.mrb[0].mxu0 %v226
  %v372 = vpop.f32.mrb[0].mxu0
  %v373 = vadd.f32 0.0, %v372
  %v374 = vpop.f32.mrb[0].mxu0
  %v375 = vpop.f32.mrb[0].mxu0
  %v376 = vadd.f32 0.0, %v375
  %v377 = vpop.f32.mrb[0].mxu0
  %378 = vmatprep.mubr.bf16.mxu0 0
  %379 = vmatmul.mubr.bf16.gmra.mrb[0].mxu0 %v227
  %v380 = vpop.f32.mrb[0].mxu0
  %v381 = vadd.f32 0.0, %v380
  %v382 = vpop.f32.mrb[0].mxu0
  %v383 = vpop.f32.mrb[0].mxu0
  %v384 = vadd.f32 0.0, %v383
  %v385 = vpop.f32.mrb[0].mxu0
  %386 = vmatprep.mubr.bf16.mxu0 0
  %387 = vmatmul.mubr.bf16.gmra.mrb[0].mxu0 %v228
  %v388 = vpop.f32.mrb[0].mxu0
  %v389 = vadd.f32 0.0, %v388
  %v390 = vpop.f32.mrb[0].mxu0
  %v391 = vpop.f32.mrb[0].mxu0
  %v392 = vadd.f32 0.0, %v391
  %v393 = vpop.f32.mrb[0].mxu0
  %394 = vmatprep.mubr.bf16.mxu0 0
  %395 = vmatmul.mubr.bf16.gmra.mrb[0].mxu0 %v229
  %v396 = vpop.f32.mrb[0].mxu0
  %v397 = vadd.f32 0.0, %v396
  %v398 = vpop.f32.mrb[0].mxu0
  %v399 = vpop.f32.mrb[0].mxu0
  %v400 = vadd.f32 0.0, %v399
  %v401 = vpop.f32.mrb[0].mxu0
  %402 = vmatprep.mubr.bf16.mxu0 0
  %403 = vmatmul.mubr.bf16.gmra.mrb[0].mxu0 %v230
  %v404 = vpop.f32.mrb[0].mxu0
  %v405 = vadd.f32 0.0, %v404
  %v406 = vpop.f32.mrb[0].mxu0
  %v407 = vpop.f32.mrb[0].mxu0
  %v408 = vadd.f32 0.0, %v407
  %v409 = vpop.f32.mrb[0].mxu0
  %410 = vmatprep.mubr.bf16.mxu0 0
  %411 = vmatmul.mubr.bf16.gmra.mrb[0].mxu0 %v231
  %v412 = vpop.f32.mrb[0].mxu0
  %v413 = vadd.f32 0.0, %v412
  %v414 = vpop.f32.mrb[0].mxu0
  %v415 = vpop.f32.mrb[0].mxu0
  %v416 = vadd.f32 0.0, %v415
  %v417 = vpop.f32.mrb[0].mxu0
  %418 = vmatprep.mubr.bf16.mxu0 0
  %419 = vmatmul.mubr.bf16.gmra.mrb[0].mxu0 %v232
  %v420 = vpop.f32.mrb[0].mxu0
  %v421 = vadd.f32 0.0, %v420
  %v422 = vpop.f32.mrb[0].mxu0
  %v423 = vpop.f32.mrb[0].mxu0
  %v424 = vadd.f32 0.0, %v423
  %v425 = vpop.f32.mrb[0].mxu0
  %426 = vmatprep.mubr.bf16.mxu0 0
  %427 = vmatmul.mubr.bf16.gmra.mrb[0].mxu0 %v233
  %v428 = vpop.f32.mrb[0].mxu0
  %v429 = vadd.f32 0.0, %v428
  %v430 = vpop.f32.mrb[0].mxu0
  %v431 = vpop.f32.mrb[0].mxu0
  %v432 = vadd.f32 0.0, %v431
  %v433 = vpop.f32.mrb[0].mxu0
  %434 = vmatprep.mubr.bf16.mxu0 0
  %435 = vmatmul.mubr.bf16.gmra.mrb[0].mxu0 %v234
  %v436 = vpop.f32.mrb[0].mxu0
  %v437 = vadd.f32 0.0, %v436
  %v438 = vpop.f32.mrb[0].mxu0
  %v439 = vpop.f32.mrb[0].mxu0
  %v440 = vadd.f32 0.0, %v439
  %v441 = vpop.f32.mrb[0].mxu0
  %442 = vmatprep.mubr.bf16.mxu0 0
  %443 = vmatmul.mubr.bf16.gmra.mrb[0].mxu0 %v235
  %v444 = vpop.f32.mrb[0].mxu0
  %v445 = vadd.f32 0.0, %v444
  %v446 = vpop.f32.mrb[0].mxu0
  %v447 = vpop.f32.mrb[0].mxu0
  %v448 = vadd.f32 0.0, %v447
  %v449 = vpop.f32.mrb[0].mxu0
  %450 = vmatprep.mubr.bf16.mxu0 0
  %451 = vmatmul.mubr.bf16.gmra.mrb[0].mxu0 %v236
  %v452 = vpop.f32.mrb[0].mxu0
  %v453 = vadd.f32 0.0, %v452
  %v454 = vpop.f32.mrb[0].mxu0
  %v455 = vpop.f32.mrb[0].mxu0
  %v456 = vadd.f32 0.0, %v455
  %v457 = vpop.f32.mrb[0].mxu0
  %458 = vmatprep.mubr.bf16.mxu0 0
  %459 = vmatmul.mubr.bf16.gmra.mrb[0].mxu0 %v237
  %v460 = vpop.f32.mrb[0].mxu0
  %v461 = vadd.f32 0.0, %v460
  %v462 = vpop.f32.mrb[0].mxu0
  %v463 = vpop.f32.mrb[0].mxu0
  %v464 = vadd.f32 0.0, %v463
  %v465 = vpop.f32.mrb[0].mxu0
  %466 = vmatprep.mubr.bf16.mxu0 0
  %467 = vmatmul.mubr.bf16.gmra.mrb[0].mxu0 %v238
  %v468 = vpop.f32.mrb[0].mxu0
  %v469 = vadd.f32 0.0, %v468
  %v470 = vpop.f32.mrb[0].mxu0
  %v471 = vpop.f32.mrb[0].mxu0
  %v472 = vadd.f32 0.0, %v471
  %v473 = vpop.f32.mrb[0].mxu0
  %474 = vmatprep.mubr.bf16.mxu0 0
  %475 = vmatmul.mubr.bf16.gmra.mrb[0].mxu0 %v239
  %v476 = vpop.f32.mrb[0].mxu0
  %v477 = vadd.f32 0.0, %v476
  %v478 = vpop.f32.mrb[0].mxu0
  %v479 = vpop.f32.mrb[0].mxu0
  %v480 = vadd.f32 0.0, %v479
  %v481 = vpop.f32.mrb[0].mxu0
  %482 = vmatprep.mubr.bf16.mxu0 0
  %483 = vmatmul.mubr.bf16.gmra.mrb[0].mxu0 %v240
  %v484 = vpop.f32.mrb[0].mxu0
  %v485 = vadd.f32 0.0, %v484
  %v486 = vpop.f32.mrb[0].mxu0
  %v487 = vpop.f32.mrb[0].mxu0
  %v488 = vadd.f32 0.0, %v487
  %v489 = vpop.f32.mrb[0].mxu0
  %490 = vmatprep.mubr.bf16.mxu0 0
  %491 = vmatmul.mubr.bf16.gmra.mrb[0].mxu0 %v241
  %v492 = vpop.f32.mrb[0].mxu0
  %v493 = vadd.f32 0.0, %v492
  %v494 = vpop.f32.mrb[0].mxu0
  %v495 = vpop.f32.mrb[0].mxu0
  %v496 = vadd.f32 0.0, %v495
  %v497 = vpop.f32.mrb[0].mxu0
  %498 = vmatprep.mubr.bf16.mxu0 0
  %499 = vmatmul.mubr.bf16.gmra.mrb[0].mxu0 %v242
  %v500 = vpop.f32.mrb[0].mxu0
  %v501 = vadd.f32 0.0, %v500
  %v502 = vpop.f32.mrb[0].mxu0
  %v503 = vpop.f32.mrb[0].mxu0
  %v504 = vadd.f32 0.0, %v503
  %v505 = vpop.f32.mrb[0].mxu0
  %506 = vmatprep.mubr.bf16.mxu0 0
  %507 = vmatmul.mubr.bf16.gmra.mrb[0].mxu0 %v243
  %v508 = vpop.f32.mrb[0].mxu0
  %v509 = vadd.f32 0.0, %v508
  %v510 = vpop.f32.mrb[0].mxu0
  %v511 = vpop.f32.mrb[0].mxu0
  %v512 = vadd.f32 0.0, %v511
  %v513 = vpop.f32.mrb[0].mxu0
  %514 = vmatprep.mubr.bf16.mxu0 0
  %515 = vmatmul.mubr.bf16.gmra.mrb[0].mxu0 %v244
  %v516 = vpop.f32.mrb[0].mxu0
  %v517 = vadd.f32 0.0, %v516
  %v518 = vpop.f32.mrb[0].mxu0
  %v519 = vpop.f32.mrb[0].mxu0
  %v520 = vadd.f32 0.0, %v519
  %v521 = vpop.f32.mrb[0].mxu0
  %522 = vmatprep.mubr.bf16.mxu0 0
  %523 = vmatmul.mubr.bf16.gmra.mrb[0].mxu0 %v245
  %v524 = vpop.f32.mrb[0].mxu0
  %v525 = vadd.f32 0.0, %v524
  %v526 = vpop.f32.mrb[0].mxu0
  %v527 = vpop.f32.mrb[0].mxu0
  %v528 = vadd.f32 0.0, %v527
  %v529 = vpop.f32.mrb[0].mxu0
  %530 = vmatprep.mubr.bf16.mxu0 0
  %531 = vmatmul.mubr.bf16.gmra.mrb[0].mxu0 %v246
  %v532 = vpop.f32.mrb[0].mxu0
  %v533 = vadd.f32 0.0, %v532
  %v534 = vpop.f32.mrb[0].mxu0
  %v535 = vpop.f32.mrb[0].mxu0
  %v536 = vadd.f32 0.0, %v535
  %v537 = vpop.f32.mrb[0].mxu0
  %538 = vmatprep.mubr.bf16.mxu0 0
  %539 = vmatmul.mubr.bf16.gmra.mrb[0].mxu0 %v247
  %v540 = vpop.f32.mrb[0].mxu0
  %v541 = vadd.f32 0.0, %v540
  %v542 = vpop.f32.mrb[0].mxu0
  %v543 = vpop.f32.mrb[0].mxu0
  %v544 = vadd.f32 0.0, %v543
  %v545 = vpop.f32.mrb[0].mxu0
  %546 = vmatprep.mubr.bf16.mxu0 0
  %547 = vmatmul.mubr.bf16.gmra.mrb[0].mxu0 %v248
  %v548 = vpop.f32.mrb[0].mxu0
  %v549 = vadd.f32 0.0, %v548
  %v550 = vpop.f32.mrb[0].mxu0
  %v551 = vpop.f32.mrb[0].mxu0
  %v552 = vadd.f32 0.0, %v551
  %v553 = vpop.f32.mrb[0].mxu0
  %554 = vmatprep.mubr.bf16.mxu0 0
  %555 = vmatmul.mubr.bf16.gmra.mrb[0].mxu0 %v249
  %v556 = vpop.f32.mrb[0].mxu0
  %v557 = vadd.f32 0.0, %v556
  %v558 = vpop.f32.mrb[0].mxu0
  %v559 = vpop.f32.mrb[0].mxu0
  %v560 = vadd.f32 0.0, %v559
  %v561 = vpop.f32.mrb[0].mxu0
  %562 = vmatprep.mubr.bf16.mxu0 0
  %563 = vmatmul.mubr.bf16.gmra.mrb[0].mxu0 %v250
  %v564 = vpop.f32.mrb[0].mxu0
  %v565 = vadd.f32 0.0, %v564
  %v566 = vpop.f32.mrb[0].mxu0
  %v567 = vpop.f32.mrb[0].mxu0
  %v568 = vadd.f32 0.0, %v567
  %v569 = vpop.f32.mrb[0].mxu0
  %570 = vmatprep.mubr.bf16.mxu0 0
  %571 = vmatmul.mubr.bf16.gmra.mrb[0].mxu0 %v251
  %v572 = vpop.f32.mrb[0].mxu0
  %v573 = vadd.f32 0.0, %v572
  %v574 = vpop.f32.mrb[0].mxu0
  %v575 = vpop.f32.mrb[0].mxu0
  %v576 = vadd.f32 0.0, %v575
  %v577 = vpop.f32.mrb[0].mxu0
  %578 = vmatprep.mubr.bf16.mxu0 0
  %579 = vmatmul.mubr.bf16.gmra.mrb[0].mxu0 %v252
  %v580 = vpop.f32.mrb[0].mxu0
  %v581 = vadd.f32 0.0, %v580
  %v582 = vpop.f32.mrb[0].mxu0
  %v583 = vpop.f32.mrb[0].mxu0
  %v584 = vadd.f32 0.0, %v583
  %v585 = vpop.f32.mrb[0].mxu0
  %586 = vmatprep.mubr.bf16.mxu0 0
  %587 = vmatmul.mubr.bf16.gmra.mrb[0].mxu0 %v253
  %v588 = vpop.f32.mrb[0].mxu0
  %v589 = vadd.f32 0.0, %v588
  %v590 = vpop.f32.mrb[0].mxu0
  %v591 = vpop.f32.mrb[0].mxu0
  %v592 = vadd.f32 0.0, %v591
  %v593 = vpop.f32.mrb[0].mxu0
  %594 = vmatprep.mubr.bf16.mxu0 0
  %595 = vmatmul.mubr.bf16.gmra.mrb[0].mxu0 %v254
  %v596 = vpop.f32.mrb[0].mxu0
  %v597 = vadd.f32 0.0, %v596
  %v598 = vpop.f32.mrb[0].mxu0
  %v599 = vpop.f32.mrb[0].mxu0
  %v600 = vadd.f32 0.0, %v599
  %v601 = vpop.f32.mrb[0].mxu0
  %602 = vmatprep.mubr.bf16.mxu0 0
  %603 = vmatmul.mubr.bf16.gmra.mrb[0].mxu0 %v255
  %v604 = vpop.f32.mrb[0].mxu0
  %v605 = vadd.f32 0.0, %v604
  %v606 = vpop.f32.mrb[0].mxu0
  %v607 = vpop.f32.mrb[0].mxu0
  %v608 = vadd.f32 0.0, %v607
  %v609 = vpop.f32.mrb[0].mxu0
  %610 = vmatprep.mubr.bf16.mxu0 0
  %611 = vmatmul.mubr.bf16.gmra.mrb[0].mxu0 %v256
  %v612 = vpop.f32.mrb[0].mxu0
  %v613 = vadd.f32 0.0, %v612
  %v614 = vpop.f32.mrb[0].mxu0
  %v615 = vpop.f32.mrb[0].mxu0
  %v616 = vadd.f32 0.0, %v615
  %v617 = vpop.f32.mrb[0].mxu0
  %618 = vmatprep.mubr.bf16.mxu0 0
  %619 = vmatmul.mubr.bf16.gmra.mrb[0].mxu0 %v257
  %v620 = vpop.f32.mrb[0].mxu0
  %v621 = vadd.f32 0.0, %v620
  %v622 = vpop.f32.mrb[0].mxu0
  %v623 = vpop.f32.mrb[0].mxu0
  %v624 = vadd.f32 0.0, %v623
  %v625 = vpop.f32.mrb[0].mxu0
  %626 = vdwg.mxu0
  %v627 = vadd.f32 %v373, %v376
  %v628 = vadd.f32 %v627, %v381
  %v629 = vadd.f32 %v628, %v384
  %v630 = vadd.f32 %v629, %v389
  %v631 = vadd.f32 %v630, %v392
  %v632 = vadd.f32 %v631, %v397
  %v633 = vadd.f32 %v632, %v400
  %v634 = vadd.f32 %v633, %v405
  %v635 = vadd.f32 %v634, %v408
  %v636 = vadd.f32 %v635, %v413
  %v637 = vadd.f32 %v636, %v416
  %v638 = vadd.f32 %v637, %v421
  %v639 = vadd.f32 %v638, %v424
  %v640 = vadd.f32 %v639, %v429
  %v641 = vadd.f32 %v640, %v432
  %v642 = vadd.f32 %v641, %v437
  %v643 = vadd.f32 %v642, %v440
  %v644 = vadd.f32 %v643, %v445
  %v645 = vadd.f32 %v644, %v448
  %v646 = vadd.f32 %v645, %v453
  %v647 = vadd.f32 %v646, %v456
  %v648 = vadd.f32 %v647, %v461
  %v649 = vadd.f32 %v648, %v464
  %v650 = vadd.f32 %v649, %v469
  %v651 = vadd.f32 %v650, %v472
  %v652 = vadd.f32 %v651, %v477
  %v653 = vadd.f32 %v652, %v480
  %v654 = vadd.f32 %v653, %v485
  %v655 = vadd.f32 %v654, %v488
  %v656 = vadd.f32 %v655, %v493
  %v657 = vadd.f32 %v656, %v496
  %v658 = vadd.f32 %v657, %v501
  %v659 = vadd.f32 %v658, %v504
  %v660 = vadd.f32 %v659, %v509
  %v661 = vadd.f32 %v660, %v512
  %v662 = vadd.f32 %v661, %v517
  %v663 = vadd.f32 %v662, %v520
  %v664 = vadd.f32 %v663, %v525
  %v665 = vadd.f32 %v664, %v528
  %v666 = vadd.f32 %v665, %v533
  %v667 = vadd.f32 %v666, %v536
  %v668 = vadd.f32 %v667, %v541
  %v669 = vadd.f32 %v668, %v544
  %v670 = vadd.f32 %v669, %v549
  %v671 = vadd.f32 %v670, %v552
  %v672 = vadd.f32 %v671, %v557
  %v673 = vadd.f32 %v672, %v560
  %v674 = vadd.f32 %v673, %v565
  %v675 = vadd.f32 %v674, %v568
  %v676 = vadd.f32 %v675, %v573
  %v677 = vadd.f32 %v676, %v576
  %v678 = vadd.f32 %v677, %v581
  %v679 = vadd.f32 %v678, %v584
  %v680 = vadd.f32 %v679, %v589
  %v681 = vadd.f32 %v680, %v592
  %v682 = vadd.f32 %v681, %v597
  %v683 = vadd.f32 %v682, %v600
  %v684 = vadd.f32 %v683, %v605
  %v685 = vadd.f32 %v684, %v608
  %v686 = vadd.f32 %v685, %v613
  %v687 = vadd.f32 %v686, %v616
  %v688 = vadd.f32 %v687, %v621
  %v689 = vadd.f32 %v688, %v624
  %v690 = vrot.slane %v689, 4
  %v691 = vadd.f32 %v689, %v690
  %v692 = vrot.slane %v691, 2
  %v693 = vadd.f32 %v691, %v692
  %v694 = vrot.slane %v693, 1
  %v695 = vadd.f32 %v693, %v694
  %v696 = vmul.f32 %v373, %v373
  %v697 = vmul.f32 %v376, %v376
  %v698 = vmul.f32 %v381, %v381
  %v699 = vmul.f32 %v384, %v384
  %v700 = vmul.f32 %v389, %v389
  %v701 = vmul.f32 %v392, %v392
  %v702 = vmul.f32 %v397, %v397
  %v703 = vmul.f32 %v400, %v400
  %v704 = vmul.f32 %v405, %v405
  %v705 = vmul.f32 %v408, %v408
  %v706 = vmul.f32 %v413, %v413
  %v707 = vmul.f32 %v416, %v416
  %v708 = vmul.f32 %v421, %v421
  %v709 = vmul.f32 %v424, %v424
  %v710 = vmul.f32 %v429, %v429
  %v711 = vmul.f32 %v432, %v432
  %v712 = vmul.f32 %v437, %v437
  %v713 = vmul.f32 %v440, %v440
  %v714 = vmul.f32 %v445, %v445
  %v715 = vmul.f32 %v448, %v448
  %v716 = vmul.f32 %v453, %v453
  %v717 = vmul.f32 %v456, %v456
  %v718 = vmul.f32 %v461, %v461
  %v719 = vmul.f32 %v464, %v464
  %v720 = vmul.f32 %v469, %v469
  %v721 = vmul.f32 %v472, %v472
  %v722 = vmul.f32 %v477, %v477
  %v723 = vmul.f32 %v480, %v480
  %v724 = vmul.f32 %v485, %v485
  %v725 = vmul.f32 %v488, %v488
  %v726 = vmul.f32 %v493, %v493
  %v727 = vmul.f32 %v496, %v496
  %v728 = vmul.f32 %v501, %v501
  %v729 = vmul.f32 %v504, %v504
  %v730 = vmul.f32 %v509, %v509
  %v731 = vmul.f32 %v512, %v512
  %v732 = vmul.f32 %v517, %v517
  %v733 = vmul.f32 %v520, %v520
  %v734 = vmul.f32 %v525, %v525
  %v735 = vmul.f32 %v528, %v528
  %v736 = vmul.f32 %v533, %v533
  %v737 = vmul.f32 %v536, %v536
  %v738 = vmul.f32 %v541, %v541
  %v739 = vmul.f32 %v544, %v544
  %v740 = vmul.f32 %v549, %v549
  %v741 = vmul.f32 %v552, %v552
  %v742 = vmul.f32 %v557, %v557
  %v743 = vmul.f32 %v560, %v560
  %v744 = vmul.f32 %v565, %v565
  %v745 = vmul.f32 %v568, %v568
  %v746 = vmul.f32 %v573, %v573
  %v747 = vmul.f32 %v576, %v576
  %v748 = vmul.f32 %v581, %v581
  %v749 = vmul.f32 %v584, %v584
  %v750 = vmul.f32 %v589, %v589
  %v751 = vmul.f32 %v592, %v592
  %v752 = vmul.f32 %v597, %v597
  %v753 = vmul.f32 %v600, %v600
  %v754 = vmul.f32 %v605, %v605
  %v755 = vmul.f32 %v608, %v608
  %v756 = vmul.f32 %v613, %v613
  %v757 = vmul.f32 %v616, %v616
  %v758 = vmul.f32 %v621, %v621
  %v759 = vmul.f32 %v624, %v624
  %v760 = vadd.f32 %v696, %v697
  %v761 = vadd.f32 %v760, %v698
  %v762 = vadd.f32 %v761, %v699
  %v763 = vadd.f32 %v762, %v700
  %v764 = vadd.f32 %v763, %v701
  %v765 = vadd.f32 %v764, %v702
  %v766 = vadd.f32 %v765, %v703
  %v767 = vadd.f32 %v766, %v704
  %v768 = vadd.f32 %v767, %v705
  %v769 = vadd.f32 %v768, %v706
  %v770 = vadd.f32 %v769, %v707
  %v771 = vadd.f32 %v770, %v708
  %v772 = vadd.f32 %v771, %v709
  %v773 = vadd.f32 %v772, %v710
  %v774 = vadd.f32 %v773, %v711
  %v775 = vadd.f32 %v774, %v712
  %v776 = vadd.f32 %v775, %v713
  %v777 = vadd.f32 %v776, %v714
  %v778 = vadd.f32 %v777, %v715
  %v779 = vadd.f32 %v778, %v716
  %v780 = vadd.f32 %v779, %v717
  %v781 = vadd.f32 %v780, %v718
  %v782 = vadd.f32 %v781, %v719
  %v783 = vadd.f32 %v782, %v720
  %v784 = vadd.f32 %v783, %v721
  %v785 = vadd.f32 %v784, %v722
  %v786 = vadd.f32 %v785, %v723
  %v787 = vadd.f32 %v786, %v724
  %v788 = vadd.f32 %v787, %v725
  %v789 = vadd.f32 %v788, %v726
  %v790 = vadd.f32 %v789, %v727
  %v791 = vadd.f32 %v790, %v728
  %v792 = vadd.f32 %v791, %v729
  %v793 = vadd.f32 %v792, %v730
  %v794 = vadd.f32 %v793, %v731
  %v795 = vadd.f32 %v794, %v732
  %v796 = vadd.f32 %v795, %v733
  %v797 = vadd.f32 %v796, %v734
  %v798 = vadd.f32 %v797, %v735
  %v799 = vadd.f32 %v798, %v736
  %v800 = vadd.f32 %v799, %v737
  %v801 = vadd.f32 %v800, %v738
  %v802 = vadd.f32 %v801, %v739
  %v803 = vadd.f32 %v802, %v740
  %v804 = vadd.f32 %v803, %v741
  %v805 = vadd.f32 %v804, %v742
  %v806 = vadd.f32 %v805, %v743
  %v807 = vadd.f32 %v806, %v744
  %v808 = vadd.f32 %v807, %v745
  %v809 = vadd.f32 %v808, %v746
  %v810 = vadd.f32 %v809, %v747
  %v811 = vadd.f32 %v810, %v748
  %v812 = vadd.f32 %v811, %v749
  %v813 = vadd.f32 %v812, %v750
  %v814 = vadd.f32 %v813, %v751
  %v815 = vadd.f32 %v814, %v752
  %v816 = vadd.f32 %v815, %v753
  %v817 = vadd.f32 %v816, %v754
  %v818 = vadd.f32 %v817, %v755
  %v819 = vadd.f32 %v818, %v756
  %v820 = vadd.f32 %v819, %v757
  %v821 = vadd.f32 %v820, %v758
  %v822 = vadd.f32 %v821, %v759
  %v823 = vrot.slane %v822, 4
  %v824 = vadd.f32 %v822, %v823
  %v825 = vrot.slane %v824, 2
  %v826 = vadd.f32 %v824, %v825
  %v827 = vrot.slane %v826, 1
  %v828 = vadd.f32 %v826, %v827
  %v829 = vmul.f32 %v695, 0.001953125
  %v830 = vmul.f32 %v828, 0.001953125
  %v831 = vmul.f32 %v829, %v829
  %v832 = vsub.f32 %v830, %v831
  %v833 = vmax.f32 %v832, 0.0
  %v834 = vld [vmem:[%s2] sm:$0x1]
  %v835 = vadd.f32 %v833, 1e-05
  %v836 = vrsqrt.pop %v835
  %v837 = vmul.f32 %v834, %v836
  %v838 = vld [vmem:[%s3] sm:$0x1]
  %v839 = vmul.f32 %v829, %v837
  %v840 = vsub.f32 %v838, %v839
  %v842 = vlaneseq
  %v843 = vshrl.u32 %v842, 7
  %v844 = vsub.s32 0, %v843
  %v845 = vrot.slane %v837, %v844
  %v847 = vmul.f32 %v373, %v845
  %v848 = vmul.f32 %v376, %v845
  %v849 = vmul.f32 %v381, %v845
  %v850 = vmul.f32 %v384, %v845
  %v851 = vmul.f32 %v389, %v845
  %v852 = vmul.f32 %v392, %v845
  %v853 = vmul.f32 %v397, %v845
  %v854 = vmul.f32 %v400, %v845
  %v855 = vmul.f32 %v405, %v845
  %v856 = vmul.f32 %v408, %v845
  %v857 = vmul.f32 %v413, %v845
  %v858 = vmul.f32 %v416, %v845
  %v859 = vmul.f32 %v421, %v845
  %v860 = vmul.f32 %v424, %v845
  %v861 = vmul.f32 %v429, %v845
  %v862 = vmul.f32 %v432, %v845
  %v863 = vmul.f32 %v437, %v845
  %v864 = vmul.f32 %v440, %v845
  %v865 = vmul.f32 %v445, %v845
  %v866 = vmul.f32 %v448, %v845
  %v867 = vmul.f32 %v453, %v845
  %v868 = vmul.f32 %v456, %v845
  %v869 = vmul.f32 %v461, %v845
  %v870 = vmul.f32 %v464, %v845
  %v871 = vmul.f32 %v469, %v845
  %v872 = vmul.f32 %v472, %v845
  %v873 = vmul.f32 %v477, %v845
  %v874 = vmul.f32 %v480, %v845
  %v875 = vmul.f32 %v485, %v845
  %v876 = vmul.f32 %v488, %v845
  %v877 = vmul.f32 %v493, %v845
  %v878 = vmul.f32 %v496, %v845
  %v879 = vmul.f32 %v501, %v845
  %v880 = vmul.f32 %v504, %v845
  %v881 = vmul.f32 %v509, %v845
  %v882 = vmul.f32 %v512, %v845
  %v883 = vmul.f32 %v517, %v845
  %v884 = vmul.f32 %v520, %v845
  %v885 = vmul.f32 %v525, %v845
  %v886 = vmul.f32 %v528, %v845
  %v887 = vmul.f32 %v533, %v845
  %v888 = vmul.f32 %v536, %v845
  %v889 = vmul.f32 %v541, %v845
  %v890 = vmul.f32 %v544, %v845
  %v891 = vmul.f32 %v549, %v845
  %v892 = vmul.f32 %v552, %v845
  %v893 = vmul.f32 %v557, %v845
  %v894 = vmul.f32 %v560, %v845
  %v895 = vmul.f32 %v565, %v845
  %v896 = vmul.f32 %v568, %v845
  %v897 = vmul.f32 %v573, %v845
  %v898 = vmul.f32 %v576, %v845
  %v899 = vmul.f32 %v581, %v845
  %v900 = vmul.f32 %v584, %v845
  %v901 = vmul.f32 %v589, %v845
  %v902 = vmul.f32 %v592, %v845
  %v903 = vmul.f32 %v597, %v845
  %v904 = vmul.f32 %v600, %v845
  %v905 = vmul.f32 %v605, %v845
  %v906 = vmul.f32 %v608, %v845
  %v907 = vmul.f32 %v613, %v845
  %v908 = vmul.f32 %v616, %v845
  %v909 = vmul.f32 %v621, %v845
  %v910 = vmul.f32 %v624, %v845
  %v912 = vlaneseq
  %v913 = vshrl.u32 %v912, 7
  %v914 = vsub.s32 0, %v913
  %v915 = vrot.slane %v840, %v914
  %v917 = vadd.f32 %v847, %v915
  %v918 = vadd.f32 %v848, %v915
  %v919 = vadd.f32 %v849, %v915
  %v920 = vadd.f32 %v850, %v915
  %v921 = vadd.f32 %v851, %v915
  %v922 = vadd.f32 %v852, %v915
  %v923 = vadd.f32 %v853, %v915
  %v924 = vadd.f32 %v854, %v915
  %v925 = vadd.f32 %v855, %v915
  %v926 = vadd.f32 %v856, %v915
  %v927 = vadd.f32 %v857, %v915
  %v928 = vadd.f32 %v858, %v915
  %v929 = vadd.f32 %v859, %v915
  %v930 = vadd.f32 %v860, %v915
  %v931 = vadd.f32 %v861, %v915
  %v932 = vadd.f32 %v862, %v915
  %v933 = vadd.f32 %v863, %v915
  %v934 = vadd.f32 %v864, %v915
  %v935 = vadd.f32 %v865, %v915
  %v936 = vadd.f32 %v866, %v915
  %v937 = vadd.f32 %v867, %v915
  %v938 = vadd.f32 %v868, %v915
  %v939 = vadd.f32 %v869, %v915
  %v940 = vadd.f32 %v870, %v915
  %v941 = vadd.f32 %v871, %v915
  %v942 = vadd.f32 %v872, %v915
  %v943 = vadd.f32 %v873, %v915
  %v944 = vadd.f32 %v874, %v915
  %v945 = vadd.f32 %v875, %v915
  %v946 = vadd.f32 %v876, %v915
  %v947 = vadd.f32 %v877, %v915
  %v948 = vadd.f32 %v878, %v915
  %v949 = vadd.f32 %v879, %v915
  %v950 = vadd.f32 %v880, %v915
  %v951 = vadd.f32 %v881, %v915
  %v952 = vadd.f32 %v882, %v915
  %v953 = vadd.f32 %v883, %v915
  %v954 = vadd.f32 %v884, %v915
  %v955 = vadd.f32 %v885, %v915
  %v956 = vadd.f32 %v886, %v915
  %v957 = vadd.f32 %v887, %v915
  %v958 = vadd.f32 %v888, %v915
  %v959 = vadd.f32 %v889, %v915
  %v960 = vadd.f32 %v890, %v915
  %v961 = vadd.f32 %v891, %v915
  %v962 = vadd.f32 %v892, %v915
  %v963 = vadd.f32 %v893, %v915
  %v964 = vadd.f32 %v894, %v915
  %v965 = vadd.f32 %v895, %v915
  %v966 = vadd.f32 %v896, %v915
  %v967 = vadd.f32 %v897, %v915
  %v968 = vadd.f32 %v898, %v915
  %v969 = vadd.f32 %v899, %v915
  %v970 = vadd.f32 %v900, %v915
  %v971 = vadd.f32 %v901, %v915
  %v972 = vadd.f32 %v902, %v915
  %v973 = vadd.f32 %v903, %v915
  %v974 = vadd.f32 %v904, %v915
  %v975 = vadd.f32 %v905, %v915
  %v976 = vadd.f32 %v906, %v915
  %v977 = vadd.f32 %v907, %v915
  %v978 = vadd.f32 %v908, %v915
  %v979 = vadd.f32 %v909, %v915
  %v980 = vadd.f32 %v910, %v915
  %vm981 = vcmp.ge.f32.partialorder %v917, 0.0
  %vm982 = vcmp.ge.f32.partialorder %v918, 0.0
  %vm983 = vcmp.ge.f32.partialorder %v919, 0.0
  %vm984 = vcmp.ge.f32.partialorder %v920, 0.0
  %vm985 = vcmp.ge.f32.partialorder %v921, 0.0
  %vm986 = vcmp.ge.f32.partialorder %v922, 0.0
  %vm987 = vcmp.ge.f32.partialorder %v923, 0.0
  %vm988 = vcmp.ge.f32.partialorder %v924, 0.0
  %vm989 = vcmp.ge.f32.partialorder %v925, 0.0
  %vm990 = vcmp.ge.f32.partialorder %v926, 0.0
  %vm991 = vcmp.ge.f32.partialorder %v927, 0.0
  %vm992 = vcmp.ge.f32.partialorder %v928, 0.0
  %vm993 = vcmp.ge.f32.partialorder %v929, 0.0
  %vm994 = vcmp.ge.f32.partialorder %v930, 0.0
  %vm995 = vcmp.ge.f32.partialorder %v931, 0.0
  %vm996 = vcmp.ge.f32.partialorder %v932, 0.0
  %vm997 = vcmp.ge.f32.partialorder %v933, 0.0
  %vm998 = vcmp.ge.f32.partialorder %v934, 0.0
  %vm999 = vcmp.ge.f32.partialorder %v935, 0.0
  %vm1000 = vcmp.ge.f32.partialorder %v936, 0.0
  %vm1001 = vcmp.ge.f32.partialorder %v937, 0.0
  %vm1002 = vcmp.ge.f32.partialorder %v938, 0.0
  %vm1003 = vcmp.ge.f32.partialorder %v939, 0.0
  %vm1004 = vcmp.ge.f32.partialorder %v940, 0.0
  %vm1005 = vcmp.ge.f32.partialorder %v941, 0.0
  %vm1006 = vcmp.ge.f32.partialorder %v942, 0.0
  %vm1007 = vcmp.ge.f32.partialorder %v943, 0.0
  %vm1008 = vcmp.ge.f32.partialorder %v944, 0.0
  %vm1009 = vcmp.ge.f32.partialorder %v945, 0.0
  %vm1010 = vcmp.ge.f32.partialorder %v946, 0.0
  %vm1011 = vcmp.ge.f32.partialorder %v947, 0.0
  %vm1012 = vcmp.ge.f32.partialorder %v948, 0.0
  %vm1013 = vcmp.ge.f32.partialorder %v949, 0.0
  %vm1014 = vcmp.ge.f32.partialorder %v950, 0.0
  %vm1015 = vcmp.ge.f32.partialorder %v951, 0.0
  %vm1016 = vcmp.ge.f32.partialorder %v952, 0.0
  %vm1017 = vcmp.ge.f32.partialorder %v953, 0.0
  %vm1018 = vcmp.ge.f32.partialorder %v954, 0.0
  %vm1019 = vcmp.ge.f32.partialorder %v955, 0.0
  %vm1020 = vcmp.ge.f32.partialorder %v956, 0.0
  %vm1021 = vcmp.ge.f32.partialorder %v957, 0.0
  %vm1022 = vcmp.ge.f32.partialorder %v958, 0.0
  %vm1023 = vcmp.ge.f32.partialorder %v959, 0.0
  %vm1024 = vcmp.ge.f32.partialorder %v960, 0.0
  %vm1025 = vcmp.ge.f32.partialorder %v961, 0.0
  %vm1026 = vcmp.ge.f32.partialorder %v962, 0.0
  %vm1027 = vcmp.ge.f32.partialorder %v963, 0.0
  %vm1028 = vcmp.ge.f32.partialorder %v964, 0.0
  %vm1029 = vcmp.ge.f32.partialorder %v965, 0.0
  %vm1030 = vcmp.ge.f32.partialorder %v966, 0.0
  %vm1031 = vcmp.ge.f32.partialorder %v967, 0.0
  %vm1032 = vcmp.ge.f32.partialorder %v968, 0.0
  %vm1033 = vcmp.ge.f32.partialorder %v969, 0.0
  %vm1034 = vcmp.ge.f32.partialorder %v970, 0.0
  %vm1035 = vcmp.ge.f32.partialorder %v971, 0.0
  %vm1036 = vcmp.ge.f32.partialorder %v972, 0.0
  %vm1037 = vcmp.ge.f32.partialorder %v973, 0.0
  %vm1038 = vcmp.ge.f32.partialorder %v974, 0.0
  %vm1039 = vcmp.ge.f32.partialorder %v975, 0.0
  %vm1040 = vcmp.ge.f32.partialorder %v976, 0.0
  %vm1041 = vcmp.ge.f32.partialorder %v977, 0.0
  %vm1042 = vcmp.ge.f32.partialorder %v978, 0.0
  %vm1043 = vcmp.ge.f32.partialorder %v979, 0.0
  %vm1044 = vcmp.ge.f32.partialorder %v980, 0.0
  %v1045 = vmul.f32 %v917, 0.2
  %v1046 = vmul.f32 %v918, 0.2
  %v1047 = vmul.f32 %v919, 0.2
  %v1048 = vmul.f32 %v920, 0.2
  %v1049 = vmul.f32 %v921, 0.2
  %v1050 = vmul.f32 %v922, 0.2
  %v1051 = vmul.f32 %v923, 0.2
  %v1052 = vmul.f32 %v924, 0.2
  %v1053 = vmul.f32 %v925, 0.2
  %v1054 = vmul.f32 %v926, 0.2
  %v1055 = vmul.f32 %v927, 0.2
  %v1056 = vmul.f32 %v928, 0.2
  %v1057 = vmul.f32 %v929, 0.2
  %v1058 = vmul.f32 %v930, 0.2
  %v1059 = vmul.f32 %v931, 0.2
  %v1060 = vmul.f32 %v932, 0.2
  %v1061 = vmul.f32 %v933, 0.2
  %v1062 = vmul.f32 %v934, 0.2
  %v1063 = vmul.f32 %v935, 0.2
  %v1064 = vmul.f32 %v936, 0.2
  %v1065 = vmul.f32 %v937, 0.2
  %v1066 = vmul.f32 %v938, 0.2
  %v1067 = vmul.f32 %v939, 0.2
  %v1068 = vmul.f32 %v940, 0.2
  %v1069 = vmul.f32 %v941, 0.2
  %v1070 = vmul.f32 %v942, 0.2
  %v1071 = vmul.f32 %v943, 0.2
  %v1072 = vmul.f32 %v944, 0.2
  %v1073 = vmul.f32 %v945, 0.2
  %v1074 = vmul.f32 %v946, 0.2
  %v1075 = vmul.f32 %v947, 0.2
  %v1076 = vmul.f32 %v948, 0.2
  %v1077 = vmul.f32 %v949, 0.2
  %v1078 = vmul.f32 %v950, 0.2
  %v1079 = vmul.f32 %v951, 0.2
  %v1080 = vmul.f32 %v952, 0.2
  %v1081 = vmul.f32 %v953, 0.2
  %v1082 = vmul.f32 %v954, 0.2
  %v1083 = vmul.f32 %v955, 0.2
  %v1084 = vmul.f32 %v956, 0.2
  %v1085 = vmul.f32 %v957, 0.2
  %v1086 = vmul.f32 %v958, 0.2
  %v1087 = vmul.f32 %v959, 0.2
  %v1088 = vmul.f32 %v960, 0.2
  %v1089 = vmul.f32 %v961, 0.2
  %v1090 = vmul.f32 %v962, 0.2
  %v1091 = vmul.f32 %v963, 0.2
  %v1092 = vmul.f32 %v964, 0.2
  %v1093 = vmul.f32 %v965, 0.2
  %v1094 = vmul.f32 %v966, 0.2
  %v1095 = vmul.f32 %v967, 0.2
  %v1096 = vmul.f32 %v968, 0.2
  %v1097 = vmul.f32 %v969, 0.2
  %v1098 = vmul.f32 %v970, 0.2
  %v1099 = vmul.f32 %v971, 0.2
  %v1100 = vmul.f32 %v972, 0.2
  %v1101 = vmul.f32 %v973, 0.2
  %v1102 = vmul.f32 %v974, 0.2
  %v1103 = vmul.f32 %v975, 0.2
  %v1104 = vmul.f32 %v976, 0.2
  %v1105 = vmul.f32 %v977, 0.2
  %v1106 = vmul.f32 %v978, 0.2
  %v1107 = vmul.f32 %v979, 0.2
  %v1108 = vmul.f32 %v980, 0.2
  %v1109 = vsel %vm981, %v917, %v1045
  %v1110 = vsel %vm982, %v918, %v1046
  %v1111 = vsel %vm983, %v919, %v1047
  %v1112 = vsel %vm984, %v920, %v1048
  %v1113 = vsel %vm985, %v921, %v1049
  %v1114 = vsel %vm986, %v922, %v1050
  %v1115 = vsel %vm987, %v923, %v1051
  %v1116 = vsel %vm988, %v924, %v1052
  %v1117 = vsel %vm989, %v925, %v1053
  %v1118 = vsel %vm990, %v926, %v1054
  %v1119 = vsel %vm991, %v927, %v1055
  %v1120 = vsel %vm992, %v928, %v1056
  %v1121 = vsel %vm993, %v929, %v1057
  %v1122 = vsel %vm994, %v930, %v1058
  %v1123 = vsel %vm995, %v931, %v1059
  %v1124 = vsel %vm996, %v932, %v1060
  %v1125 = vsel %vm997, %v933, %v1061
  %v1126 = vsel %vm998, %v934, %v1062
  %v1127 = vsel %vm999, %v935, %v1063
  %v1128 = vsel %vm1000, %v936, %v1064
  %v1129 = vsel %vm1001, %v937, %v1065
  %v1130 = vsel %vm1002, %v938, %v1066
  %v1131 = vsel %vm1003, %v939, %v1067
  %v1132 = vsel %vm1004, %v940, %v1068
  %v1133 = vsel %vm1005, %v941, %v1069
  %v1134 = vsel %vm1006, %v942, %v1070
  %v1135 = vsel %vm1007, %v943, %v1071
  %v1136 = vsel %vm1008, %v944, %v1072
  %v1137 = vsel %vm1009, %v945, %v1073
  %v1138 = vsel %vm1010, %v946, %v1074
  %v1139 = vsel %vm1011, %v947, %v1075
  %v1140 = vsel %vm1012, %v948, %v1076
  %v1141 = vsel %vm1013, %v949, %v1077
  %v1142 = vsel %vm1014, %v950, %v1078
  %v1143 = vsel %vm1015, %v951, %v1079
  %v1144 = vsel %vm1016, %v952, %v1080
  %v1145 = vsel %vm1017, %v953, %v1081
  %v1146 = vsel %vm1018, %v954, %v1082
  %v1147 = vsel %vm1019, %v955, %v1083
  %v1148 = vsel %vm1020, %v956, %v1084
  %v1149 = vsel %vm1021, %v957, %v1085
  %v1150 = vsel %vm1022, %v958, %v1086
  %v1151 = vsel %vm1023, %v959, %v1087
  %v1152 = vsel %vm1024, %v960, %v1088
  %v1153 = vsel %vm1025, %v961, %v1089
  %v1154 = vsel %vm1026, %v962, %v1090
  %v1155 = vsel %vm1027, %v963, %v1091
  %v1156 = vsel %vm1028, %v964, %v1092
  %v1157 = vsel %vm1029, %v965, %v1093
  %v1158 = vsel %vm1030, %v966, %v1094
  %v1159 = vsel %vm1031, %v967, %v1095
  %v1160 = vsel %vm1032, %v968, %v1096
  %v1161 = vsel %vm1033, %v969, %v1097
  %v1162 = vsel %vm1034, %v970, %v1098
  %v1163 = vsel %vm1035, %v971, %v1099
  %v1164 = vsel %vm1036, %v972, %v1100
  %v1165 = vsel %vm1037, %v973, %v1101
  %v1166 = vsel %vm1038, %v974, %v1102
  %v1167 = vsel %vm1039, %v975, %v1103
  %v1168 = vsel %vm1040, %v976, %v1104
  %v1169 = vsel %vm1041, %v977, %v1105
  %v1170 = vsel %vm1042, %v978, %v1106
  %v1171 = vsel %vm1043, %v979, %v1107
  %v1172 = vsel %vm1044, %v980, %v1108
  %v1173 = vpack.c.bf16 %v1110, %v1109
  %v1174 = vpack.c.bf16 %v1112, %v1111
  %v1175 = vpack.c.bf16 %v1114, %v1113
  %v1176 = vpack.c.bf16 %v1116, %v1115
  %v1177 = vpack.c.bf16 %v1118, %v1117
  %v1178 = vpack.c.bf16 %v1120, %v1119
  %v1179 = vpack.c.bf16 %v1122, %v1121
  %v1180 = vpack.c.bf16 %v1124, %v1123
  %v1181 = vpack.c.bf16 %v1126, %v1125
  %v1182 = vpack.c.bf16 %v1128, %v1127
  %v1183 = vpack.c.bf16 %v1130, %v1129
  %v1184 = vpack.c.bf16 %v1132, %v1131
  %v1185 = vpack.c.bf16 %v1134, %v1133
  %v1186 = vpack.c.bf16 %v1136, %v1135
  %v1187 = vpack.c.bf16 %v1138, %v1137
  %v1188 = vpack.c.bf16 %v1140, %v1139
  %v1189 = vpack.c.bf16 %v1142, %v1141
  %v1190 = vpack.c.bf16 %v1144, %v1143
  %v1191 = vpack.c.bf16 %v1146, %v1145
  %v1192 = vpack.c.bf16 %v1148, %v1147
  %v1193 = vpack.c.bf16 %v1150, %v1149
  %v1194 = vpack.c.bf16 %v1152, %v1151
  %v1195 = vpack.c.bf16 %v1154, %v1153
  %v1196 = vpack.c.bf16 %v1156, %v1155
  %v1197 = vpack.c.bf16 %v1158, %v1157
  %v1198 = vpack.c.bf16 %v1160, %v1159
  %v1199 = vpack.c.bf16 %v1162, %v1161
  %v1200 = vpack.c.bf16 %v1164, %v1163
  %v1201 = vpack.c.bf16 %v1166, %v1165
  %v1202 = vpack.c.bf16 %v1168, %v1167
  %v1203 = vpack.c.bf16 %v1170, %v1169
  %v1204 = vpack.c.bf16 %v1172, %v1171
  %v1237 = vunpack.c.l.b16 %v1173
  %v1238 = vunpack.c.h.b16 %v1173
  %v1239 = vunpack.c.l.b16 %v1174
  %v1240 = vunpack.c.h.b16 %v1174
  %v1241 = vunpack.c.l.b16 %v1175
  %v1242 = vunpack.c.h.b16 %v1175
  %v1243 = vunpack.c.l.b16 %v1176
  %v1244 = vunpack.c.h.b16 %v1176
  %v1245 = vunpack.c.l.b16 %v1177
  %v1246 = vunpack.c.h.b16 %v1177
  %v1247 = vunpack.c.l.b16 %v1178
  %v1248 = vunpack.c.h.b16 %v1178
  %v1249 = vunpack.c.l.b16 %v1179
  %v1250 = vunpack.c.h.b16 %v1179
  %v1251 = vunpack.c.l.b16 %v1180
  %v1252 = vunpack.c.h.b16 %v1180
  %v1253 = vunpack.c.l.b16 %v1181
  %v1254 = vunpack.c.h.b16 %v1181
  %v1255 = vunpack.c.l.b16 %v1182
  %v1256 = vunpack.c.h.b16 %v1182
  %v1257 = vunpack.c.l.b16 %v1183
  %v1258 = vunpack.c.h.b16 %v1183
  %v1259 = vunpack.c.l.b16 %v1184
  %v1260 = vunpack.c.h.b16 %v1184
  %v1261 = vunpack.c.l.b16 %v1185
  %v1262 = vunpack.c.h.b16 %v1185
  %v1263 = vunpack.c.l.b16 %v1186
  %v1264 = vunpack.c.h.b16 %v1186
  %v1265 = vunpack.c.l.b16 %v1187
  %v1266 = vunpack.c.h.b16 %v1187
  %v1267 = vunpack.c.l.b16 %v1188
  %v1268 = vunpack.c.h.b16 %v1188
  %v1269 = vunpack.c.l.b16 %v1189
  %v1270 = vunpack.c.h.b16 %v1189
  %v1271 = vunpack.c.l.b16 %v1190
  %v1272 = vunpack.c.h.b16 %v1190
  %v1273 = vunpack.c.l.b16 %v1191
  %v1274 = vunpack.c.h.b16 %v1191
  %v1275 = vunpack.c.l.b16 %v1192
  %v1276 = vunpack.c.h.b16 %v1192
  %v1277 = vunpack.c.l.b16 %v1193
  %v1278 = vunpack.c.h.b16 %v1193
  %v1279 = vunpack.c.l.b16 %v1194
  %v1280 = vunpack.c.h.b16 %v1194
  %v1281 = vunpack.c.l.b16 %v1195
  %v1282 = vunpack.c.h.b16 %v1195
  %v1283 = vunpack.c.l.b16 %v1196
  %v1284 = vunpack.c.h.b16 %v1196
  %v1285 = vunpack.c.l.b16 %v1197
  %v1286 = vunpack.c.h.b16 %v1197
  %v1287 = vunpack.c.l.b16 %v1198
  %v1288 = vunpack.c.h.b16 %v1198
  %v1289 = vunpack.c.l.b16 %v1199
  %v1290 = vunpack.c.h.b16 %v1199
  %v1291 = vunpack.c.l.b16 %v1200
  %v1292 = vunpack.c.h.b16 %v1200
  %v1293 = vunpack.c.l.b16 %v1201
  %v1294 = vunpack.c.h.b16 %v1201
  %v1295 = vunpack.c.l.b16 %v1202
  %v1296 = vunpack.c.h.b16 %v1202
  %v1297 = vunpack.c.l.b16 %v1203
  %v1298 = vunpack.c.h.b16 %v1203
  %v1299 = vunpack.c.l.b16 %v1204
  %v1300 = vunpack.c.h.b16 %v1204
  %v1301 = vpack.c.b16 %v1237, %v1237
  %v1302 = vpack.c.b16 %v1238, %v1238
  %v1303 = vpack.c.b16 %v1239, %v1239
  %v1304 = vpack.c.b16 %v1240, %v1240
  %v1305 = vpack.c.b16 %v1241, %v1241
  %v1306 = vpack.c.b16 %v1242, %v1242
  %v1307 = vpack.c.b16 %v1243, %v1243
  %v1308 = vpack.c.b16 %v1244, %v1244
  %v1309 = vpack.c.b16 %v1245, %v1245
  %v1310 = vpack.c.b16 %v1246, %v1246
  %v1311 = vpack.c.b16 %v1247, %v1247
  %v1312 = vpack.c.b16 %v1248, %v1248
  %v1313 = vpack.c.b16 %v1249, %v1249
  %v1314 = vpack.c.b16 %v1250, %v1250
  %v1315 = vpack.c.b16 %v1251, %v1251
  %v1316 = vpack.c.b16 %v1252, %v1252
  %v1317 = vpack.c.b16 %v1253, %v1253
  %v1318 = vpack.c.b16 %v1254, %v1254
  %v1319 = vpack.c.b16 %v1255, %v1255
  %v1320 = vpack.c.b16 %v1256, %v1256
  %v1321 = vpack.c.b16 %v1257, %v1257
  %v1322 = vpack.c.b16 %v1258, %v1258
  %v1323 = vpack.c.b16 %v1259, %v1259
  %v1324 = vpack.c.b16 %v1260, %v1260
  %v1325 = vpack.c.b16 %v1261, %v1261
  %v1326 = vpack.c.b16 %v1262, %v1262
  %v1327 = vpack.c.b16 %v1263, %v1263
  %v1328 = vpack.c.b16 %v1264, %v1264
  %v1329 = vpack.c.b16 %v1265, %v1265
  %v1330 = vpack.c.b16 %v1266, %v1266
  %v1331 = vpack.c.b16 %v1267, %v1267
  %v1332 = vpack.c.b16 %v1268, %v1268
  %v1333 = vpack.c.b16 %v1269, %v1269
  %v1334 = vpack.c.b16 %v1270, %v1270
  %v1335 = vpack.c.b16 %v1271, %v1271
  %v1336 = vpack.c.b16 %v1272, %v1272
  %v1337 = vpack.c.b16 %v1273, %v1273
  %v1338 = vpack.c.b16 %v1274, %v1274
  %v1339 = vpack.c.b16 %v1275, %v1275
  %v1340 = vpack.c.b16 %v1276, %v1276
  %v1341 = vpack.c.b16 %v1277, %v1277
  %v1342 = vpack.c.b16 %v1278, %v1278
  %v1343 = vpack.c.b16 %v1279, %v1279
  %v1344 = vpack.c.b16 %v1280, %v1280
  %v1345 = vpack.c.b16 %v1281, %v1281
  %v1346 = vpack.c.b16 %v1282, %v1282
  %v1347 = vpack.c.b16 %v1283, %v1283
  %v1348 = vpack.c.b16 %v1284, %v1284
  %v1349 = vpack.c.b16 %v1285, %v1285
  %v1350 = vpack.c.b16 %v1286, %v1286
  %v1351 = vpack.c.b16 %v1287, %v1287
  %v1352 = vpack.c.b16 %v1288, %v1288
  %v1353 = vpack.c.b16 %v1289, %v1289
  %v1354 = vpack.c.b16 %v1290, %v1290
  %v1355 = vpack.c.b16 %v1291, %v1291
  %v1356 = vpack.c.b16 %v1292, %v1292
  %v1357 = vpack.c.b16 %v1293, %v1293
  %v1358 = vpack.c.b16 %v1294, %v1294
  %v1359 = vpack.c.b16 %v1295, %v1295
  %v1360 = vpack.c.b16 %v1296, %v1296
  %v1361 = vpack.c.b16 %v1297, %v1297
  %v1362 = vpack.c.b16 %v1298, %v1298
  %v1363 = vpack.c.b16 %v1299, %v1299
  %v1364 = vpack.c.b16 %v1300, %v1300
  %1429 = vst [vmem:[%s4] sm:$0xf] %v1301
  %1430 = vst [vmem:[%s4 + $0x4] sm:$0xf] %v1302
  %1431 = vst [vmem:[%s4 + $0x8] sm:$0xf] %v1303
  %1432 = vst [vmem:[%s4 + $0xc] sm:$0xf] %v1304
  %1433 = vst [vmem:[%s4 + $0x10] sm:$0xf] %v1305
  %1434 = vst [vmem:[%s4 + $0x14] sm:$0xf] %v1306
  %1435 = vst [vmem:[%s4 + $0x18] sm:$0xf] %v1307
  %1436 = vst [vmem:[%s4 + $0x1c] sm:$0xf] %v1308
  %1437 = vst [vmem:[%s4 + $0x20] sm:$0xf] %v1309
  %1438 = vst [vmem:[%s4 + $0x24] sm:$0xf] %v1310
  %1439 = vst [vmem:[%s4 + $0x28] sm:$0xf] %v1311
  %1440 = vst [vmem:[%s4 + $0x2c] sm:$0xf] %v1312
  %1441 = vst [vmem:[%s4 + $0x30] sm:$0xf] %v1313
  %1442 = vst [vmem:[%s4 + $0x34] sm:$0xf] %v1314
  %1443 = vst [vmem:[%s4 + $0x38] sm:$0xf] %v1315
  %1444 = vst [vmem:[%s4 + $0x3c] sm:$0xf] %v1316
  %1445 = vst [vmem:[%s4 + $0x40] sm:$0xf] %v1317
  %1446 = vst [vmem:[%s4 + $0x44] sm:$0xf] %v1318
  %1447 = vst [vmem:[%s4 + $0x48] sm:$0xf] %v1319
  %1448 = vst [vmem:[%s4 + $0x4c] sm:$0xf] %v1320
  %1449 = vst [vmem:[%s4 + $0x50] sm:$0xf] %v1321
  %1450 = vst [vmem:[%s4 + $0x54] sm:$0xf] %v1322
  %1451 = vst [vmem:[%s4 + $0x58] sm:$0xf] %v1323
  %1452 = vst [vmem:[%s4 + $0x5c] sm:$0xf] %v1324
  %1453 = vst [vmem:[%s4 + $0x60] sm:$0xf] %v1325
  %1454 = vst [vmem:[%s4 + $0x64] sm:$0xf] %v1326
  %1455 = vst [vmem:[%s4 + $0x68] sm:$0xf] %v1327
  %1456 = vst [vmem:[%s4 + $0x6c] sm:$0xf] %v1328
  %1457 = vst [vmem:[%s4 + $0x70] sm:$0xf] %v1329
  %1458 = vst [vmem:[%s4 + $0x74] sm:$0xf] %v1330
  %1459 = vst [vmem:[%s4 + $0x78] sm:$0xf] %v1331
  %1460 = vst [vmem:[%s4 + $0x7c] sm:$0xf] %v1332
  %1461 = vst [vmem:[%s4 + $0x80] sm:$0xf] %v1333
  %1462 = vst [vmem:[%s4 + $0x84] sm:$0xf] %v1334
  %1463 = vst [vmem:[%s4 + $0x88] sm:$0xf] %v1335
  %1464 = vst [vmem:[%s4 + $0x8c] sm:$0xf] %v1336
  %1465 = vst [vmem:[%s4 + $0x90] sm:$0xf] %v1337
  %1466 = vst [vmem:[%s4 + $0x94] sm:$0xf] %v1338
  %1467 = vst [vmem:[%s4 + $0x98] sm:$0xf] %v1339
  %1468 = vst [vmem:[%s4 + $0x9c] sm:$0xf] %v1340
  %1469 = vst [vmem:[%s4 + $0xa0] sm:$0xf] %v1341
  %1470 = vst [vmem:[%s4 + $0xa4] sm:$0xf] %v1342
  %1471 = vst [vmem:[%s4 + $0xa8] sm:$0xf] %v1343
  %1472 = vst [vmem:[%s4 + $0xac] sm:$0xf] %v1344
  %1473 = vst [vmem:[%s4 + $0xb0] sm:$0xf] %v1345
  %1474 = vst [vmem:[%s4 + $0xb4] sm:$0xf] %v1346
  %1475 = vst [vmem:[%s4 + $0xb8] sm:$0xf] %v1347
  %1476 = vst [vmem:[%s4 + $0xbc] sm:$0xf] %v1348
  %1477 = vst [vmem:[%s4 + $0xc0] sm:$0xf] %v1349
  %1478 = vst [vmem:[%s4 + $0xc4] sm:$0xf] %v1350
  %1479 = vst [vmem:[%s4 + $0xc8] sm:$0xf] %v1351
  %1480 = vst [vmem:[%s4 + $0xcc] sm:$0xf] %v1352
  %1481 = vst [vmem:[%s4 + $0xd0] sm:$0xf] %v1353
  %1482 = vst [vmem:[%s4 + $0xd4] sm:$0xf] %v1354
  %1483 = vst [vmem:[%s4 + $0xd8] sm:$0xf] %v1355
  %1484 = vst [vmem:[%s4 + $0xdc] sm:$0xf] %v1356
  %1485 = vst [vmem:[%s4 + $0xe0] sm:$0xf] %v1357
  %1486 = vst [vmem:[%s4 + $0xe4] sm:$0xf] %v1358
  %1487 = vst [vmem:[%s4 + $0xe8] sm:$0xf] %v1359
  %1488 = vst [vmem:[%s4 + $0xec] sm:$0xf] %v1360
  %1489 = vst [vmem:[%s4 + $0xf0] sm:$0xf] %v1361
  %1490 = vst [vmem:[%s4 + $0xf4] sm:$0xf] %v1362
  %1491 = vst [vmem:[%s4 + $0xf8] sm:$0xf] %v1363
  %1492 = vst [vmem:[%s4 + $0xfc] sm:$0xf] %v1364
  // Predicated region
  $region18: #{discriminator_forward.5} parent=0 // pred_check
    _
  $region19: #{discriminator_forward.5} parent=0 // pred_check_branch
    %1494 = sbr.rel (0) target = $region21
  $region20: #{discriminator_forward.5} parent=0 // pred_region
    _
  $region21: #{discriminator_forward.5} parent=0 // pred_fallthru
    _
  // Predicated region
  $region22: #{discriminator_forward.5} parent=0 // pred_check
    _
  $region23: #{discriminator_forward.5} parent=0 // pred_check_branch
    %1496 = sbr.rel (0) target = $region25
  $region24: #{discriminator_forward.5} parent=0 // pred_region
    _
  $region25: #{discriminator_forward.5} parent=0 // pred_fallthru
    _

// kernel: discriminator_forward.6
$region0: #{discriminator_forward.6}
  #allocation0 [shape = 'u32[]', space=smem, size = 0x4, offset = 0x4, fixed_abs, tag = 'smem constant byte address 0x4 - core index']
  #allocation1 [shape = 'u32[144,128]{1,0:T(1,128)}', space=vmem, size = 0x12000, scoped, tag = 'internal scratch']
  %s0 = inlined_call_operand.vmem [shape: bf16[128,256], index: 0, kind: input, shape index: {}]
  %s1 = inlined_call_operand.vmem [shape: bf16[256,128], index: 1, kind: input, shape index: {}]
  %s2 = inlined_call_operand.vmem [shape: f32[1,128], index: 2, kind: input, shape index: {}]
  %s3 = inlined_call_operand.vmem [shape: f32[1,128], index: 3, kind: input, shape index: {}]
  %s4 = inlined_call_operand.vmem [shape: bf16[128,128], index: 4, kind: output, shape index: {}]
  %s5 = sld [smem:[#allocation0]]
  $region26: #{discriminator_forward.6} parent=0
    _
  %s7 = ssub.s32 1, %s5
  %s8 = scalar_select 0, %s7, %s5
  // Predicated region
  $region2: #{discriminator_forward.6} parent=0 // pred_check
    _
  $region3: #{discriminator_forward.6} parent=0 // pred_check_branch
    %10 = sbr.rel (0) target = $region5
  $region4: #{discriminator_forward.6} parent=0 // pred_region
    _
  $region5: #{discriminator_forward.6} parent=0 // pred_fallthru
    _
  // Predicated region
  $region6: #{discriminator_forward.6} parent=0 // pred_check
    _
  $region7: #{discriminator_forward.6} parent=0 // pred_check_branch
    %12 = sbr.rel (0) target = $region9
  $region8: #{discriminator_forward.6} parent=0 // pred_region
    _
  $region9: #{discriminator_forward.6} parent=0 // pred_fallthru
    _
  // Predicated region
  $region10: #{discriminator_forward.6} parent=0 // pred_check
    _
  $region11: #{discriminator_forward.6} parent=0 // pred_check_branch
    %14 = sbr.rel (0) target = $region13
  $region12: #{discriminator_forward.6} parent=0 // pred_region
    _
  $region13: #{discriminator_forward.6} parent=0 // pred_fallthru
    _
  // Predicated region
  $region14: #{discriminator_forward.6} parent=0 // pred_check
    _
  $region15: #{discriminator_forward.6} parent=0 // pred_check_branch
    %16 = sbr.rel (0) target = $region17
  $region16: #{discriminator_forward.6} parent=0 // pred_region
    _
  $region17: #{discriminator_forward.6} parent=0 // pred_fallthru
    _
  %v18 = vld [vmem:[%s0] sm:$0xff]
  %v19 = vld [vmem:[%s0 + $0x8] sm:$0xff]
  %v20 = vld [vmem:[%s0 + $0x10] sm:$0xff]
  %v21 = vld [vmem:[%s0 + $0x18] sm:$0xff]
  %v22 = vld [vmem:[%s0 + $0x20] sm:$0xff]
  %v23 = vld [vmem:[%s0 + $0x28] sm:$0xff]
  %v24 = vld [vmem:[%s0 + $0x30] sm:$0xff]
  %v25 = vld [vmem:[%s0 + $0x38] sm:$0xff]
  %v26 = vld [vmem:[%s0 + $0x40] sm:$0xff]
  %v27 = vld [vmem:[%s0 + $0x48] sm:$0xff]
  %v28 = vld [vmem:[%s0 + $0x50] sm:$0xff]
  %v29 = vld [vmem:[%s0 + $0x58] sm:$0xff]
  %v30 = vld [vmem:[%s0 + $0x60] sm:$0xff]
  %v31 = vld [vmem:[%s0 + $0x68] sm:$0xff]
  %v32 = vld [vmem:[%s0 + $0x70] sm:$0xff]
  %v33 = vld [vmem:[%s0 + $0x78] sm:$0xff]
  %v34 = vld [vmem:[%s1] sm:$0xf]
  %v35 = vld [vmem:[%s1 + $0x4] sm:$0xf]
  %v36 = vld [vmem:[%s1 + $0x8] sm:$0xf]
  %v37 = vld [vmem:[%s1 + $0xc] sm:$0xf]
  %v38 = vld [vmem:[%s1 + $0x10] sm:$0xf]
  %v39 = vld [vmem:[%s1 + $0x14] sm:$0xf]
  %v40 = vld [vmem:[%s1 + $0x18] sm:$0xf]
  %v41 = vld [vmem:[%s1 + $0x1c] sm:$0xf]
  %v42 = vld [vmem:[%s1 + $0x20] sm:$0xf]
  %v43 = vld [vmem:[%s1 + $0x24] sm:$0xf]
  %v44 = vld [vmem:[%s1 + $0x28] sm:$0xf]
  %v45 = vld [vmem:[%s1 + $0x2c] sm:$0xf]
  %v46 = vld [vmem:[%s1 + $0x30] sm:$0xf]
  %v47 = vld [vmem:[%s1 + $0x34] sm:$0xf]
  %v48 = vld [vmem:[%s1 + $0x38] sm:$0xf]
  %v49 = vld [vmem:[%s1 + $0x3c] sm:$0xf]
  %v50 = vld [vmem:[%s1 + $0x40] sm:$0xf]
  %v51 = vld [vmem:[%s1 + $0x44] sm:$0xf]
  %v52 = vld [vmem:[%s1 + $0x48] sm:$0xf]
  %v53 = vld [vmem:[%s1 + $0x4c] sm:$0xf]
  %v54 = vld [vmem:[%s1 + $0x50] sm:$0xf]
  %v55 = vld [vmem:[%s1 + $0x54] sm:$0xf]
  %v56 = vld [vmem:[%s1 + $0x58] sm:$0xf]
  %v57 = vld [vmem:[%s1 + $0x5c] sm:$0xf]
  %v58 = vld [vmem:[%s1 + $0x60] sm:$0xf]
  %v59 = vld [vmem:[%s1 + $0x64] sm:$0xf]
  %v60 = vld [vmem:[%s1 + $0x68] sm:$0xf]
  %v61 = vld [vmem:[%s1 + $0x6c] sm:$0xf]
  %v62 = vld [vmem:[%s1 + $0x70] sm:$0xf]
  %v63 = vld [vmem:[%s1 + $0x74] sm:$0xf]
  %v64 = vld [vmem:[%s1 + $0x78] sm:$0xf]
  %v65 = vld [vmem:[%s1 + $0x7c] sm:$0xf]
  %v82 = vunpack.c.l.b16 %v18
  %v83 = vunpack.c.h.b16 %v18
  %v84 = vunpack.c.l.b16 %v19
  %v85 = vunpack.c.h.b16 %v19
  %v86 = vunpack.c.l.b16 %v20
  %v87 = vunpack.c.h.b16 %v20
  %v88 = vunpack.c.l.b16 %v21
  %v89 = vunpack.c.h.b16 %v21
  %v90 = vunpack.c.l.b16 %v22
  %v91 = vunpack.c.h.b16 %v22
  %v92 = vunpack.c.l.b16 %v23
  %v93 = vunpack.c.h.b16 %v23
  %v94 = vunpack.c.l.b16 %v24
  %v95 = vunpack.c.h.b16 %v24
  %v96 = vunpack.c.l.b16 %v25
  %v97 = vunpack.c.h.b16 %v25
  %v98 = vunpack.c.l.b16 %v26
  %v99 = vunpack.c.h.b16 %v26
  %v100 = vunpack.c.l.b16 %v27
  %v101 = vunpack.c.h.b16 %v27
  %v102 = vunpack.c.l.b16 %v28
  %v103 = vunpack.c.h.b16 %v28
  %v104 = vunpack.c.l.b16 %v29
  %v105 = vunpack.c.h.b16 %v29
  %v106 = vunpack.c.l.b16 %v30
  %v107 = vunpack.c.h.b16 %v30
  %v108 = vunpack.c.l.b16 %v31
  %v109 = vunpack.c.h.b16 %v31
  %v110 = vunpack.c.l.b16 %v32
  %v111 = vunpack.c.h.b16 %v32
  %v112 = vunpack.c.l.b16 %v33
  %v113 = vunpack.c.h.b16 %v33
  %v114 = vpack.c.b16 %v84, %v82
  %v115 = vpack.c.b16 %v85, %v83
  %v116 = vpack.c.b16 %v88, %v86
  %v117 = vpack.c.b16 %v89, %v87
  %v118 = vpack.c.b16 %v92, %v90
  %v119 = vpack.c.b16 %v93, %v91
  %v120 = vpack.c.b16 %v96, %v94
  %v121 = vpack.c.b16 %v97, %v95
  %v122 = vpack.c.b16 %v100, %v98
  %v123 = vpack.c.b16 %v101, %v99
  %v124 = vpack.c.b16 %v104, %v102
  %v125 = vpack.c.b16 %v105, %v103
  %v126 = vpack.c.b16 %v108, %v106
  %v127 = vpack.c.b16 %v109, %v107
  %v128 = vpack.c.b16 %v112, %v110
  %v129 = vpack.c.b16 %v113, %v111
  %v178 = vunpack.c.l.b16 %v34
  %v179 = vunpack.c.l.b16 %v35
  %v180 = vunpack.c.l.b16 %v36
  %v181 = vunpack.c.l.b16 %v37
  %v182 = vunpack.c.l.b16 %v38
  %v183 = vunpack.c.l.b16 %v39
  %v184 = vunpack.c.l.b16 %v40
  %v185 = vunpack.c.l.b16 %v41
  %v186 = vunpack.c.l.b16 %v42
  %v187 = vunpack.c.l.b16 %v43
  %v188 = vunpack.c.l.b16 %v44
  %v189 = vunpack.c.l.b16 %v45
  %v190 = vunpack.c.l.b16 %v46
  %v191 = vunpack.c.l.b16 %v47
  %v192 = vunpack.c.l.b16 %v48
  %v193 = vunpack.c.l.b16 %v49
  %v194 = vunpack.c.l.b16 %v50
  %v195 = vunpack.c.l.b16 %v51
  %v196 = vunpack.c.l.b16 %v52
  %v197 = vunpack.c.l.b16 %v53
  %v198 = vunpack.c.l.b16 %v54
  %v199 = vunpack.c.l.b16 %v55
  %v200 = vunpack.c.l.b16 %v56
  %v201 = vunpack.c.l.b16 %v57
  %v202 = vunpack.c.l.b16 %v58
  %v203 = vunpack.c.l.b16 %v59
  %v204 = vunpack.c.l.b16 %v60
  %v205 = vunpack.c.l.b16 %v61
  %v206 = vunpack.c.l.b16 %v62
  %v207 = vunpack.c.l.b16 %v63
  %v208 = vunpack.c.l.b16 %v64
  %v209 = vunpack.c.l.b16 %v65
  %v210 = vpack.c.b16 %v179, %v178
  %v211 = vpack.c.b16 %v181, %v180
  %v212 = vpack.c.b16 %v183, %v182
  %v213 = vpack.c.b16 %v185, %v184
  %v214 = vpack.c.b16 %v187, %v186
  %v215 = vpack.c.b16 %v189, %v188
  %v216 = vpack.c.b16 %v191, %v190
  %v217 = vpack.c.b16 %v193, %v192
  %v218 = vpack.c.b16 %v195, %v194
  %v219 = vpack.c.b16 %v197, %v196
  %v220 = vpack.c.b16 %v199, %v198
  %v221 = vpack.c.b16 %v201, %v200
  %v222 = vpack.c.b16 %v203, %v202
  %v223 = vpack.c.b16 %v205, %v204
  %v224 = vpack.c.b16 %v207, %v206
  %v225 = vpack.c.b16 %v209, %v208
  %242 = vmatprep.subr.bf16.mxu0 0
  %243 = vmatpush1.bf16.msra.mxu0 %v210
  %244 = vmatprep.subr.bf16.mxu0 0
  %245 = vmatpush1.bf16.msra.mxu0 %v211
  %246 = vmatprep.subr.bf16.mxu0 0
  %247 = vmatpush1.bf16.msra.mxu0 %v212
  %248 = vmatprep.subr.bf16.mxu0 0
  %249 = vmatpush1.bf16.msra.mxu0 %v213
  %250 = vmatprep.subr.bf16.mxu0 0
  %251 = vmatpush1.bf16.msra.mxu0 %v214
  %252 = vmatprep.subr.bf16.mxu0 0
  %253 = vmatpush1.bf16.msra.mxu0 %v215
  %254 = vmatprep.subr.bf16.mxu0 0
  %255 = vmatpush1.bf16.msra.mxu0 %v216
  %256 = vmatprep.subr.bf16.mxu0 0
  %257 = vmatpush1.bf16.msra.mxu0 %v217
  %258 = vmatprep.subr.bf16.mxu0 0
  %259 = vmatpush1.bf16.msra.mxu0 %v218
  %260 = vmatprep.subr.bf16.mxu0 0
  %261 = vmatpush1.bf16.msra.mxu0 %v219
  %262 = vmatprep.subr.bf16.mxu0 0
  %263 = vmatpush1.bf16.msra.mxu0 %v220
  %264 = vmatprep.subr.bf16.mxu0 0
  %265 = vmatpush1.bf16.msra.mxu0 %v221
  %266 = vmatprep.subr.bf16.mxu0 0
  %267 = vmatpush1.bf16.msra.mxu0 %v222
  %268 = vmatprep.subr.bf16.mxu0 0
  %269 = vmatpush1.bf16.msra.mxu0 %v223
  %270 = vmatprep.subr.bf16.mxu0 0
  %271 = vmatpush1.bf16.msra.mxu0 %v224
  %272 = vmatprep.subr.bf16.mxu0 0
  %273 = vmatpush1.bf16.msra.mxu0 %v225
  %274 = vmatprep.mubr.bf16.mxu0 %v115
  %275 = vmatmul.mubr.bf16.gmra.mrb[0].mxu0 %v114
  %v276 = vpop.f32.mrb[0].mxu0
  %v277 = vadd.f32 0.0, %v276
  %v278 = vpop.f32.mrb[0].mxu0
  %v279 = vpop.f32.mrb[0].mxu0
  %v280 = vadd.f32 0.0, %v279
  %v281 = vpop.f32.mrb[0].mxu0
  %282 = vmatprep.mubr.bf16.mxu0 %v117
  %283 = vmatmul.mubr.bf16.gmra.mrb[0].mxu0 %v116
  %v284 = vpop.f32.mrb[0].mxu0
  %v285 = vadd.f32 0.0, %v284
  %v286 = vpop.f32.mrb[0].mxu0
  %v287 = vpop.f32.mrb[0].mxu0
  %v288 = vadd.f32 0.0, %v287
  %v289 = vpop.f32.mrb[0].mxu0
  %290 = vmatprep.mubr.bf16.mxu0 %v119
  %291 = vmatmul.mubr.bf16.gmra.mrb[0].mxu0 %v118
  %v292 = vpop.f32.mrb[0].mxu0
  %v293 = vadd.f32 0.0, %v292
  %v294 = vpop.f32.mrb[0].mxu0
  %v295 = vpop.f32.mrb[0].mxu0
  %v296 = vadd.f32 0.0, %v295
  %v297 = vpop.f32.mrb[0].mxu0
  %298 = vmatprep.mubr.bf16.mxu0 %v121
  %299 = vmatmul.mubr.bf16.gmra.mrb[0].mxu0 %v120
  %v300 = vpop.f32.mrb[0].mxu0
  %v301 = vadd.f32 0.0, %v300
  %v302 = vpop.f32.mrb[0].mxu0
  %v303 = vpop.f32.mrb[0].mxu0
  %v304 = vadd.f32 0.0, %v303
  %v305 = vpop.f32.mrb[0].mxu0
  %306 = vmatprep.mubr.bf16.mxu0 %v123
  %307 = vmatmul.mubr.bf16.gmra.mrb[0].mxu0 %v122
  %v308 = vpop.f32.mrb[0].mxu0
  %v309 = vadd.f32 0.0, %v308
  %v310 = vpop.f32.mrb[0].mxu0
  %v311 = vpop.f32.mrb[0].mxu0
  %v312 = vadd.f32 0.0, %v311
  %v313 = vpop.f32.mrb[0].mxu0
  %314 = vmatprep.mubr.bf16.mxu0 %v125
  %315 = vmatmul.mubr.bf16.gmra.mrb[0].mxu0 %v124
  %v316 = vpop.f32.mrb[0].mxu0
  %v317 = vadd.f32 0.0, %v316
  %v318 = vpop.f32.mrb[0].mxu0
  %v319 = vpop.f32.mrb[0].mxu0
  %v320 = vadd.f32 0.0, %v319
  %v321 = vpop.f32.mrb[0].mxu0
  %322 = vmatprep.mubr.bf16.mxu0 %v127
  %323 = vmatmul.mubr.bf16.gmra.mrb[0].mxu0 %v126
  %v324 = vpop.f32.mrb[0].mxu0
  %v325 = vadd.f32 0.0, %v324
  %v326 = vpop.f32.mrb[0].mxu0
  %v327 = vpop.f32.mrb[0].mxu0
  %v328 = vadd.f32 0.0, %v327
  %v329 = vpop.f32.mrb[0].mxu0
  %330 = vmatprep.mubr.bf16.mxu0 %v129
  %331 = vmatmul.mubr.bf16.gmra.mrb[0].mxu0 %v128
  %v332 = vpop.f32.mrb[0].mxu0
  %v333 = vadd.f32 0.0, %v332
  %v334 = vpop.f32.mrb[0].mxu0
  %v335 = vpop.f32.mrb[0].mxu0
  %v336 = vadd.f32 0.0, %v335
  %v337 = vpop.f32.mrb[0].mxu0
  %338 = vdwg.mxu0
  %v339 = vadd.f32 %v277, %v280
  %v340 = vadd.f32 %v339, %v285
  %v341 = vadd.f32 %v340, %v288
  %v342 = vadd.f32 %v341, %v293
  %v343 = vadd.f32 %v342, %v296
  %v344 = vadd.f32 %v343, %v301
  %v345 = vadd.f32 %v344, %v304
  %v346 = vadd.f32 %v345, %v309
  %v347 = vadd.f32 %v346, %v312
  %v348 = vadd.f32 %v347, %v317
  %v349 = vadd.f32 %v348, %v320
  %v350 = vadd.f32 %v349, %v325
  %v351 = vadd.f32 %v350, %v328
  %v352 = vadd.f32 %v351, %v333
  %v353 = vadd.f32 %v352, %v336
  %v354 = vrot.slane %v353, 4
  %v355 = vadd.f32 %v353, %v354
  %v356 = vrot.slane %v355, 2
  %v357 = vadd.f32 %v355, %v356
  %v358 = vrot.slane %v357, 1
  %v359 = vadd.f32 %v357, %v358
  %v360 = vmul.f32 %v277, %v277
  %v361 = vmul.f32 %v280, %v280
  %v362 = vmul.f32 %v285, %v285
  %v363 = vmul.f32 %v288, %v288
  %v364 = vmul.f32 %v293, %v293
  %v365 = vmul.f32 %v296, %v296
  %v366 = vmul.f32 %v301, %v301
  %v367 = vmul.f32 %v304, %v304
  %v368 = vmul.f32 %v309, %v309
  %v369 = vmul.f32 %v312, %v312
  %v370 = vmul.f32 %v317, %v317
  %v371 = vmul.f32 %v320, %v320
  %v372 = vmul.f32 %v325, %v325
  %v373 = vmul.f32 %v328, %v328
  %v374 = vmul.f32 %v333, %v333
  %v375 = vmul.f32 %v336, %v336
  %v376 = vadd.f32 %v360, %v361
  %v377 = vadd.f32 %v376, %v362
  %v378 = vadd.f32 %v377, %v363
  %v379 = vadd.f32 %v378, %v364
  %v380 = vadd.f32 %v379, %v365
  %v381 = vadd.f32 %v380, %v366
  %v382 = vadd.f32 %v381, %v367
  %v383 = vadd.f32 %v382, %v368
  %v384 = vadd.f32 %v383, %v369
  %v385 = vadd.f32 %v384, %v370
  %v386 = vadd.f32 %v385, %v371
  %v387 = vadd.f32 %v386, %v372
  %v388 = vadd.f32 %v387, %v373
  %v389 = vadd.f32 %v388, %v374
  %v390 = vadd.f32 %v389, %v375
  %v391 = vrot.slane %v390, 4
  %v392 = vadd.f32 %v390, %v391
  %v393 = vrot.slane %v392, 2
  %v394 = vadd.f32 %v392, %v393
  %v395 = vrot.slane %v394, 1
  %v396 = vadd.f32 %v394, %v395
  %v397 = vmul.f32 %v359, 0.0078125
  %v398 = vmul.f32 %v396, 0.0078125
  %v399 = vmul.f32 %v397, %v397
  %v400 = vsub.f32 %v398, %v399
  %v401 = vmax.f32 %v400, 0.0
  %v402 = vld [vmem:[%s2] sm:$0x1]
  %v403 = vadd.f32 %v401, 1e-05
  %v404 = vrsqrt.pop %v403
  %v405 = vmul.f32 %v402, %v404
  %v406 = vld [vmem:[%s3] sm:$0x1]
  %v407 = vmul.f32 %v397, %v405
  %v408 = vsub.f32 %v406, %v407
  %v410 = vlaneseq
  %v411 = vshrl.u32 %v410, 7
  %v412 = vsub.s32 0, %v411
  %v413 = vrot.slane %v405, %v412
  %v415 = vmul.f32 %v277, %v413
  %v416 = vmul.f32 %v280, %v413
  %v417 = vmul.f32 %v285, %v413
  %v418 = vmul.f32 %v288, %v413
  %v419 = vmul.f32 %v293, %v413
  %v420 = vmul.f32 %v296, %v413
  %v421 = vmul.f32 %v301, %v413
  %v422 = vmul.f32 %v304, %v413
  %v423 = vmul.f32 %v309, %v413
  %v424 = vmul.f32 %v312, %v413
  %v425 = vmul.f32 %v317, %v413
  %v426 = vmul.f32 %v320, %v413
  %v427 = vmul.f32 %v325, %v413
  %v428 = vmul.f32 %v328, %v413
  %v429 = vmul.f32 %v333, %v413
  %v430 = vmul.f32 %v336, %v413
  %v432 = vlaneseq
  %v433 = vshrl.u32 %v432, 7
  %v434 = vsub.s32 0, %v433
  %v435 = vrot.slane %v408, %v434
  %v437 = vadd.f32 %v415, %v435
  %v438 = vadd.f32 %v416, %v435
  %v439 = vadd.f32 %v417, %v435
  %v440 = vadd.f32 %v418, %v435
  %v441 = vadd.f32 %v419, %v435
  %v442 = vadd.f32 %v420, %v435
  %v443 = vadd.f32 %v421, %v435
  %v444 = vadd.f32 %v422, %v435
  %v445 = vadd.f32 %v423, %v435
  %v446 = vadd.f32 %v424, %v435
  %v447 = vadd.f32 %v425, %v435
  %v448 = vadd.f32 %v426, %v435
  %v449 = vadd.f32 %v427, %v435
  %v450 = vadd.f32 %v428, %v435
  %v451 = vadd.f32 %v429, %v435
  %v452 = vadd.f32 %v430, %v435
  %vm453 = vcmp.ge.f32.partialorder %v437, 0.0
  %vm454 = vcmp.ge.f32.partialorder %v438, 0.0
  %vm455 = vcmp.ge.f32.partialorder %v439, 0.0
  %vm456 = vcmp.ge.f32.partialorder %v440, 0.0
  %vm457 = vcmp.ge.f32.partialorder %v441, 0.0
  %vm458 = vcmp.ge.f32.partialorder %v442, 0.0
  %vm459 = vcmp.ge.f32.partialorder %v443, 0.0
  %vm460 = vcmp.ge.f32.partialorder %v444, 0.0
  %vm461 = vcmp.ge.f32.partialorder %v445, 0.0
  %vm462 = vcmp.ge.f32.partialorder %v446, 0.0
  %vm463 = vcmp.ge.f32.partialorder %v447, 0.0
  %vm464 = vcmp.ge.f32.partialorder %v448, 0.0
  %vm465 = vcmp.ge.f32.partialorder %v449, 0.0
  %vm466 = vcmp.ge.f32.partialorder %v450, 0.0
  %vm467 = vcmp.ge.f32.partialorder %v451, 0.0
  %vm468 = vcmp.ge.f32.partialorder %v452, 0.0
  %v469 = vmul.f32 %v437, 0.2
  %v470 = vmul.f32 %v438, 0.2
  %v471 = vmul.f32 %v439, 0.2
  %v472 = vmul.f32 %v440, 0.2
  %v473 = vmul.f32 %v441, 0.2
  %v474 = vmul.f32 %v442, 0.2
  %v475 = vmul.f32 %v443, 0.2
  %v476 = vmul.f32 %v444, 0.2
  %v477 = vmul.f32 %v445, 0.2
  %v478 = vmul.f32 %v446, 0.2
  %v479 = vmul.f32 %v447, 0.2
  %v480 = vmul.f32 %v448, 0.2
  %v481 = vmul.f32 %v449, 0.2
  %v482 = vmul.f32 %v450, 0.2
  %v483 = vmul.f32 %v451, 0.2
  %v484 = vmul.f32 %v452, 0.2
  %v485 = vsel %vm453, %v437, %v469
  %v486 = vsel %vm454, %v438, %v470
  %v487 = vsel %vm455, %v439, %v471
  %v488 = vsel %vm456, %v440, %v472
  %v489 = vsel %vm457, %v441, %v473
  %v490 = vsel %vm458, %v442, %v474
  %v491 = vsel %vm459, %v443, %v475
  %v492 = vsel %vm460, %v444, %v476
  %v493 = vsel %vm461, %v445, %v477
  %v494 = vsel %vm462, %v446, %v478
  %v495 = vsel %vm463, %v447, %v479
  %v496 = vsel %vm464, %v448, %v480
  %v497 = vsel %vm465, %v449, %v481
  %v498 = vsel %vm466, %v450, %v482
  %v499 = vsel %vm467, %v451, %v483
  %v500 = vsel %vm468, %v452, %v484
  %v501 = vpack.c.bf16 %v486, %v485
  %v502 = vpack.c.bf16 %v488, %v487
  %v503 = vpack.c.bf16 %v490, %v489
  %v504 = vpack.c.bf16 %v492, %v491
  %v505 = vpack.c.bf16 %v494, %v493
  %v506 = vpack.c.bf16 %v496, %v495
  %v507 = vpack.c.bf16 %v498, %v497
  %v508 = vpack.c.bf16 %v500, %v499
  %v517 = vunpack.c.l.b16 %v501
  %v518 = vunpack.c.h.b16 %v501
  %v519 = vunpack.c.l.b16 %v502
  %v520 = vunpack.c.h.b16 %v502
  %v521 = vunpack.c.l.b16 %v503
  %v522 = vunpack.c.h.b16 %v503
  %v523 = vunpack.c.l.b16 %v504
  %v524 = vunpack.c.h.b16 %v504
  %v525 = vunpack.c.l.b16 %v505
  %v526 = vunpack.c.h.b16 %v505
  %v527 = vunpack.c.l.b16 %v506
  %v528 = vunpack.c.h.b16 %v506
  %v529 = vunpack.c.l.b16 %v507
  %v530 = vunpack.c.h.b16 %v507
  %v531 = vunpack.c.l.b16 %v508
  %v532 = vunpack.c.h.b16 %v508
  %v533 = vpack.c.b16 %v517, %v517
  %v534 = vpack.c.b16 %v518, %v518
  %v535 = vpack.c.b16 %v519, %v519
  %v536 = vpack.c.b16 %v520, %v520
  %v537 = vpack.c.b16 %v521, %v521
  %v538 = vpack.c.b16 %v522, %v522
  %v539 = vpack.c.b16 %v523, %v523
  %v540 = vpack.c.b16 %v524, %v524
  %v541 = vpack.c.b16 %v525, %v525
  %v542 = vpack.c.b16 %v526, %v526
  %v543 = vpack.c.b16 %v527, %v527
  %v544 = vpack.c.b16 %v528, %v528
  %v545 = vpack.c.b16 %v529, %v529
  %v546 = vpack.c.b16 %v530, %v530
  %v547 = vpack.c.b16 %v531, %v531
  %v548 = vpack.c.b16 %v532, %v532
  %565 = vst [vmem:[%s4] sm:$0xf] %v533
  %566 = vst [vmem:[%s4 + $0x4] sm:$0xf] %v534
  %567 = vst [vmem:[%s4 + $0x8] sm:$0xf] %v535
  %568 = vst [vmem:[%s4 + $0xc] sm:$0xf] %v536
  %569 = vst [vmem:[%s4 + $0x10] sm:$0xf] %v537
  %570 = vst [vmem:[%s4 + $0x14] sm:$0xf] %v538
  %571 = vst [vmem:[%s4 + $0x18] sm:$0xf] %v539
  %572 = vst [vmem:[%s4 + $0x1c] sm:$0xf] %v540
  %573 = vst [vmem:[%s4 + $0x20] sm:$0xf] %v541
  %574 = vst [vmem:[%s4 + $0x24] sm:$0xf] %v542
  %575 = vst [vmem:[%s4 + $0x28] sm:$0xf] %v543
  %576 = vst [vmem:[%s4 + $0x2c] sm:$0xf] %v544
  %577 = vst [vmem:[%s4 + $0x30] sm:$0xf] %v545
  %578 = vst [vmem:[%s4 + $0x34] sm:$0xf] %v546
  %579 = vst [vmem:[%s4 + $0x38] sm:$0xf] %v547
  %580 = vst [vmem:[%s4 + $0x3c] sm:$0xf] %v548
  // Predicated region
  $region18: #{discriminator_forward.6} parent=0 // pred_check
    _
  $region19: #{discriminator_forward.6} parent=0 // pred_check_branch
    %582 = sbr.rel (0) target = $region21
  $region20: #{discriminator_forward.6} parent=0 // pred_region
    _
  $region21: #{discriminator_forward.6} parent=0 // pred_fallthru
    _
  // Predicated region
  $region22: #{discriminator_forward.6} parent=0 // pred_check
    _
  $region23: #{discriminator_forward.6} parent=0 // pred_check_branch
    %584 = sbr.rel (0) target = $region25
  $region24: #{discriminator_forward.6} parent=0 // pred_region
    _
  $region25: #{discriminator_forward.6} parent=0 // pred_fallthru
    _

// kernel: discriminator_forward.7
$region0: #{discriminator_forward.7}
  #allocation0 [shape = 'u32[]', space=smem, size = 0x4, offset = 0x4, fixed_abs, tag = 'smem constant byte address 0x4 - core index']
  #allocation1 [shape = 'u32[144,128]{1,0:T(1,128)}', space=vmem, size = 0x12000, scoped, tag = 'internal scratch']
  %s0 = inlined_call_operand.vmem [shape: bf16[32,512], index: 0, kind: input, shape index: {}]
  %s1 = inlined_call_operand.vmem [shape: bf16[512,128], index: 1, kind: input, shape index: {}]
  %s2 = inlined_call_operand.vmem [shape: f32[1,128], index: 2, kind: input, shape index: {}]
  %s3 = inlined_call_operand.vmem [shape: f32[1,128], index: 3, kind: input, shape index: {}]
  %s4 = inlined_call_operand.vmem [shape: bf16[32,128], index: 4, kind: output, shape index: {}]
  %s5 = sld [smem:[#allocation0]]
  $region26: #{discriminator_forward.7} parent=0
    _
  %s7 = ssub.s32 1, %s5
  %s8 = scalar_select 0, %s7, %s5
  // Predicated region
  $region2: #{discriminator_forward.7} parent=0 // pred_check
    _
  $region3: #{discriminator_forward.7} parent=0 // pred_check_branch
    %10 = sbr.rel (0) target = $region5
  $region4: #{discriminator_forward.7} parent=0 // pred_region
    _
  $region5: #{discriminator_forward.7} parent=0 // pred_fallthru
    _
  // Predicated region
  $region6: #{discriminator_forward.7} parent=0 // pred_check
    _
  $region7: #{discriminator_forward.7} parent=0 // pred_check_branch
    %12 = sbr.rel (0) target = $region9
  $region8: #{discriminator_forward.7} parent=0 // pred_region
    _
  $region9: #{discriminator_forward.7} parent=0 // pred_fallthru
    _
  // Predicated region
  $region10: #{discriminator_forward.7} parent=0 // pred_check
    _
  $region11: #{discriminator_forward.7} parent=0 // pred_check_branch
    %14 = sbr.rel (0) target = $region13
  $region12: #{discriminator_forward.7} parent=0 // pred_region
    _
  $region13: #{discriminator_forward.7} parent=0 // pred_fallthru
    _
  // Predicated region
  $region14: #{discriminator_forward.7} parent=0 // pred_check
    _
  $region15: #{discriminator_forward.7} parent=0 // pred_check_branch
    %16 = sbr.rel (0) target = $region17
  $region16: #{discriminator_forward.7} parent=0 // pred_region
    _
  $region17: #{discriminator_forward.7} parent=0 // pred_fallthru
    _
  %v18 = vld [vmem:[%s0] sm:$0xff]
  %v19 = vld [vmem:[%s0 + $0x8] sm:$0xff]
  %v20 = vld [vmem:[%s0 + $0x10] sm:$0xff]
  %v21 = vld [vmem:[%s0 + $0x18] sm:$0xff]
  %v22 = vld [vmem:[%s0 + $0x20] sm:$0xff]
  %v23 = vld [vmem:[%s0 + $0x28] sm:$0xff]
  %v24 = vld [vmem:[%s0 + $0x30] sm:$0xff]
  %v25 = vld [vmem:[%s0 + $0x38] sm:$0xff]
  %v26 = vld [vmem:[%s1] sm:$0xf]
  %v27 = vld [vmem:[%s1 + $0x4] sm:$0xf]
  %v28 = vld [vmem:[%s1 + $0x8] sm:$0xf]
  %v29 = vld [vmem:[%s1 + $0xc] sm:$0xf]
  %v30 = vld [vmem:[%s1 + $0x10] sm:$0xf]
  %v31 = vld [vmem:[%s1 + $0x14] sm:$0xf]
  %v32 = vld [vmem:[%s1 + $0x18] sm:$0xf]
  %v33 = vld [vmem:[%s1 + $0x1c] sm:$0xf]
  %v34 = vld [vmem:[%s1 + $0x20] sm:$0xf]
  %v35 = vld [vmem:[%s1 + $0x24] sm:$0xf]
  %v36 = vld [vmem:[%s1 + $0x28] sm:$0xf]
  %v37 = vld [vmem:[%s1 + $0x2c] sm:$0xf]
  %v38 = vld [vmem:[%s1 + $0x30] sm:$0xf]
  %v39 = vld [vmem:[%s1 + $0x34] sm:$0xf]
  %v40 = vld [vmem:[%s1 + $0x38] sm:$0xf]
  %v41 = vld [vmem:[%s1 + $0x3c] sm:$0xf]
  %v42 = vld [vmem:[%s1 + $0x40] sm:$0xf]
  %v43 = vld [vmem:[%s1 + $0x44] sm:$0xf]
  %v44 = vld [vmem:[%s1 + $0x48] sm:$0xf]
  %v45 = vld [vmem:[%s1 + $0x4c] sm:$0xf]
  %v46 = vld [vmem:[%s1 + $0x50] sm:$0xf]
  %v47 = vld [vmem:[%s1 + $0x54] sm:$0xf]
  %v48 = vld [vmem:[%s1 + $0x58] sm:$0xf]
  %v49 = vld [vmem:[%s1 + $0x5c] sm:$0xf]
  %v50 = vld [vmem:[%s1 + $0x60] sm:$0xf]
  %v51 = vld [vmem:[%s1 + $0x64] sm:$0xf]
  %v52 = vld [vmem:[%s1 + $0x68] sm:$0xf]
  %v53 = vld [vmem:[%s1 + $0x6c] sm:$0xf]
  %v54 = vld [vmem:[%s1 + $0x70] sm:$0xf]
  %v55 = vld [vmem:[%s1 + $0x74] sm:$0xf]
  %v56 = vld [vmem:[%s1 + $0x78] sm:$0xf]
  %v57 = vld [vmem:[%s1 + $0x7c] sm:$0xf]
  %v58 = vld [vmem:[%s1 + $0x80] sm:$0xf]
  %v59 = vld [vmem:[%s1 + $0x84] sm:$0xf]
  %v60 = vld [vmem:[%s1 + $0x88] sm:$0xf]
  %v61 = vld [vmem:[%s1 + $0x8c] sm:$0xf]
  %v62 = vld [vmem:[%s1 + $0x90] sm:$0xf]
  %v63 = vld [vmem:[%s1 + $0x94] sm:$0xf]
  %v64 = vld [vmem:[%s1 + $0x98] sm:$0xf]
  %v65 = vld [vmem:[%s1 + $0x9c] sm:$0xf]
  %v66 = vld [vmem:[%s1 + $0xa0] sm:$0xf]
  %v67 = vld [vmem:[%s1 + $0xa4] sm:$0xf]
  %v68 = vld [vmem:[%s1 + $0xa8] sm:$0xf]
  %v69 = vld [vmem:[%s1 + $0xac] sm:$0xf]
  %v70 = vld [vmem:[%s1 + $0xb0] sm:$0xf]
  %v71 = vld [vmem:[%s1 + $0xb4] sm:$0xf]
  %v72 = vld [vmem:[%s1 + $0xb8] sm:$0xf]
  %v73 = vld [vmem:[%s1 + $0xbc] sm:$0xf]
  %v74 = vld [vmem:[%s1 + $0xc0] sm:$0xf]
  %v75 = vld [vmem:[%s1 + $0xc4] sm:$0xf]
  %v76 = vld [vmem:[%s1 + $0xc8] sm:$0xf]
  %v77 = vld [vmem:[%s1 + $0xcc] sm:$0xf]
  %v78 = vld [vmem:[%s1 + $0xd0] sm:$0xf]
  %v79 = vld [vmem:[%s1 + $0xd4] sm:$0xf]
  %v80 = vld [vmem:[%s1 + $0xd8] sm:$0xf]
  %v81 = vld [vmem:[%s1 + $0xdc] sm:$0xf]
  %v82 = vld [vmem:[%s1 + $0xe0] sm:$0xf]
  %v83 = vld [vmem:[%s1 + $0xe4] sm:$0xf]
  %v84 = vld [vmem:[%s1 + $0xe8] sm:$0xf]
  %v85 = vld [vmem:[%s1 + $0xec] sm:$0xf]
  %v86 = vld [vmem:[%s1 + $0xf0] sm:$0xf]
  %v87 = vld [vmem:[%s1 + $0xf4] sm:$0xf]
  %v88 = vld [vmem:[%s1 + $0xf8] sm:$0xf]
  %v89 = vld [vmem:[%s1 + $0xfc] sm:$0xf]
  %v98 = vunpack.c.l.b16 %v18
  %v99 = vunpack.c.h.b16 %v18
  %v100 = vunpack.c.l.b16 %v19
  %v101 = vunpack.c.h.b16 %v19
  %v102 = vunpack.c.l.b16 %v20
  %v103 = vunpack.c.h.b16 %v20
  %v104 = vunpack.c.l.b16 %v21
  %v105 = vunpack.c.h.b16 %v21
  %v106 = vunpack.c.l.b16 %v22
  %v107 = vunpack.c.h.b16 %v22
  %v108 = vunpack.c.l.b16 %v23
  %v109 = vunpack.c.h.b16 %v23
  %v110 = vunpack.c.l.b16 %v24
  %v111 = vunpack.c.h.b16 %v24
  %v112 = vunpack.c.l.b16 %v25
  %v113 = vunpack.c.h.b16 %v25
  %v114 = vpack.c.b16 %v102, %v98
  %v115 = vpack.c.b16 %v103, %v99
  %v116 = vpack.c.b16 %v104, %v100
  %v117 = vpack.c.b16 %v105, %v101
  %v118 = vpack.c.b16 %v110, %v106
  %v119 = vpack.c.b16 %v111, %v107
  %v120 = vpack.c.b16 %v112, %v108
  %v121 = vpack.c.b16 %v113, %v109
  %v194 = vunpack.c.l.b16 %v26
  %v195 = vunpack.c.l.b16 %v27
  %v196 = vunpack.c.l.b16 %v28
  %v197 = vunpack.c.l.b16 %v29
  %v198 = vunpack.c.l.b16 %v30
  %v199 = vunpack.c.l.b16 %v31
  %v200 = vunpack.c.l.b16 %v32
  %v201 = vunpack.c.l.b16 %v33
  %v202 = vunpack.c.l.b16 %v34
  %v203 = vunpack.c.l.b16 %v35
  %v204 = vunpack.c.l.b16 %v36
  %v205 = vunpack.c.l.b16 %v37
  %v206 = vunpack.c.l.b16 %v38
  %v207 = vunpack.c.l.b16 %v39
  %v208 = vunpack.c.l.b16 %v40
  %v209 = vunpack.c.l.b16 %v41
  %v210 = vunpack.c.l.b16 %v42
  %v211 = vunpack.c.l.b16 %v43
  %v212 = vunpack.c.l.b16 %v44
  %v213 = vunpack.c.l.b16 %v45
  %v214 = vunpack.c.l.b16 %v46
  %v215 = vunpack.c.l.b16 %v47
  %v216 = vunpack.c.l.b16 %v48
  %v217 = vunpack.c.l.b16 %v49
  %v218 = vunpack.c.l.b16 %v50
  %v219 = vunpack.c.l.b16 %v51
  %v220 = vunpack.c.l.b16 %v52
  %v221 = vunpack.c.l.b16 %v53
  %v222 = vunpack.c.l.b16 %v54
  %v223 = vunpack.c.l.b16 %v55
  %v224 = vunpack.c.l.b16 %v56
  %v225 = vunpack.c.l.b16 %v57
  %v226 = vunpack.c.l.b16 %v58
  %v227 = vunpack.c.l.b16 %v59
  %v228 = vunpack.c.l.b16 %v60
  %v229 = vunpack.c.l.b16 %v61
  %v230 = vunpack.c.l.b16 %v62
  %v231 = vunpack.c.l.b16 %v63
  %v232 = vunpack.c.l.b16 %v64
  %v233 = vunpack.c.l.b16 %v65
  %v234 = vunpack.c.l.b16 %v66
  %v235 = vunpack.c.l.b16 %v67
  %v236 = vunpack.c.l.b16 %v68
  %v237 = vunpack.c.l.b16 %v69
  %v238 = vunpack.c.l.b16 %v70
  %v239 = vunpack.c.l.b16 %v71
  %v240 = vunpack.c.l.b16 %v72
  %v241 = vunpack.c.l.b16 %v73
  %v242 = vunpack.c.l.b16 %v74
  %v243 = vunpack.c.l.b16 %v75
  %v244 = vunpack.c.l.b16 %v76
  %v245 = vunpack.c.l.b16 %v77
  %v246 = vunpack.c.l.b16 %v78
  %v247 = vunpack.c.l.b16 %v79
  %v248 = vunpack.c.l.b16 %v80
  %v249 = vunpack.c.l.b16 %v81
  %v250 = vunpack.c.l.b16 %v82
  %v251 = vunpack.c.l.b16 %v83
  %v252 = vunpack.c.l.b16 %v84
  %v253 = vunpack.c.l.b16 %v85
  %v254 = vunpack.c.l.b16 %v86
  %v255 = vunpack.c.l.b16 %v87
  %v256 = vunpack.c.l.b16 %v88
  %v257 = vunpack.c.l.b16 %v89
  %v258 = vpack.c.b16 %v195, %v194
  %v259 = vpack.c.b16 %v197, %v196
  %v260 = vpack.c.b16 %v199, %v198
  %v261 = vpack.c.b16 %v201, %v200
  %v262 = vpack.c.b16 %v203, %v202
  %v263 = vpack.c.b16 %v205, %v204
  %v264 = vpack.c.b16 %v207, %v206
  %v265 = vpack.c.b16 %v209, %v208
  %v266 = vpack.c.b16 %v211, %v210
  %v267 = vpack.c.b16 %v213, %v212
  %v268 = vpack.c.b16 %v215, %v214
  %v269 = vpack.c.b16 %v217, %v216
  %v270 = vpack.c.b16 %v219, %v218
  %v271 = vpack.c.b16 %v221, %v220
  %v272 = vpack.c.b16 %v223, %v222
  %v273 = vpack.c.b16 %v225, %v224
  %v274 = vpack.c.b16 %v227, %v226
  %v275 = vpack.c.b16 %v229, %v228
  %v276 = vpack.c.b16 %v231, %v230
  %v277 = vpack.c.b16 %v233, %v232
  %v278 = vpack.c.b16 %v235, %v234
  %v279 = vpack.c.b16 %v237, %v236
  %v280 = vpack.c.b16 %v239, %v238
  %v281 = vpack.c.b16 %v241, %v240
  %v282 = vpack.c.b16 %v243, %v242
  %v283 = vpack.c.b16 %v245, %v244
  %v284 = vpack.c.b16 %v247, %v246
  %v285 = vpack.c.b16 %v249, %v248
  %v286 = vpack.c.b16 %v251, %v250
  %v287 = vpack.c.b16 %v253, %v252
  %v288 = vpack.c.b16 %v255, %v254
  %v289 = vpack.c.b16 %v257, %v256
  %322 = vmatprep.subr.bf16.mxu0 0
  %323 = vmatpush1.bf16.msra.mxu0 %v258
  %324 = vmatprep.subr.bf16.mxu0 0
  %325 = vmatpush1.bf16.msra.mxu0 %v259
  %326 = vmatprep.subr.bf16.mxu0 0
  %327 = vmatpush1.bf16.msra.mxu0 %v260
  %328 = vmatprep.subr.bf16.mxu0 0
  %329 = vmatpush1.bf16.msra.mxu0 %v261
  %330 = vmatprep.subr.bf16.mxu0 0
  %331 = vmatpush1.bf16.msra.mxu0 %v262
  %332 = vmatprep.subr.bf16.mxu0 0
  %333 = vmatpush1.bf16.msra.mxu0 %v263
  %334 = vmatprep.subr.bf16.mxu0 0
  %335 = vmatpush1.bf16.msra.mxu0 %v264
  %336 = vmatprep.subr.bf16.mxu0 0
  %337 = vmatpush1.bf16.msra.mxu0 %v265
  %338 = vmatprep.subr.bf16.mxu0 0
  %339 = vmatpush1.bf16.msra.mxu0 %v266
  %340 = vmatprep.subr.bf16.mxu0 0
  %341 = vmatpush1.bf16.msra.mxu0 %v267
  %342 = vmatprep.subr.bf16.mxu0 0
  %343 = vmatpush1.bf16.msra.mxu0 %v268
  %344 = vmatprep.subr.bf16.mxu0 0
  %345 = vmatpush1.bf16.msra.mxu0 %v269
  %346 = vmatprep.subr.bf16.mxu0 0
  %347 = vmatpush1.bf16.msra.mxu0 %v270
  %348 = vmatprep.subr.bf16.mxu0 0
  %349 = vmatpush1.bf16.msra.mxu0 %v271
  %350 = vmatprep.subr.bf16.mxu0 0
  %351 = vmatpush1.bf16.msra.mxu0 %v272
  %352 = vmatprep.subr.bf16.mxu0 0
  %353 = vmatpush1.bf16.msra.mxu0 %v273
  %354 = vmatprep.mubr.bf16.mxu0 %v115
  %355 = vmatmul.mubr.bf16.gmra.mrb[0].mxu0 %v114
  %v356 = vpop.f32.mrb[0].mxu0
  %v357 = vadd.f32 0.0, %v356
  %v358 = vpop.f32.mrb[0].mxu0
  %v359 = vpop.f32.mrb[0].mxu0
  %v360 = vadd.f32 0.0, %v359
  %v361 = vpop.f32.mrb[0].mxu0
  %362 = vmatprep.mubr.bf16.mxu0 %v119
  %363 = vmatmul.mubr.bf16.gmra.mrb[0].mxu0 %v118
  %v364 = vpop.f32.mrb[0].mxu0
  %v365 = vadd.f32 0.0, %v364
  %v366 = vpop.f32.mrb[0].mxu0
  %v367 = vpop.f32.mrb[0].mxu0
  %v368 = vadd.f32 0.0, %v367
  %v369 = vpop.f32.mrb[0].mxu0
  %370 = vdwg.mxu0
  %371 = vmatprep.subr.bf16.mxu0 0
  %372 = vmatpush1.bf16.msra.mxu0 %v274
  %373 = vmatprep.subr.bf16.mxu0 0
  %374 = vmatpush1.bf16.msra.mxu0 %v275
  %375 = vmatprep.subr.bf16.mxu0 0
  %376 = vmatpush1.bf16.msra.mxu0 %v276
  %377 = vmatprep.subr.bf16.mxu0 0
  %378 = vmatpush1.bf16.msra.mxu0 %v277
  %379 = vmatprep.subr.bf16.mxu0 0
  %380 = vmatpush1.bf16.msra.mxu0 %v278
  %381 = vmatprep.subr.bf16.mxu0 0
  %382 = vmatpush1.bf16.msra.mxu0 %v279
  %383 = vmatprep.subr.bf16.mxu0 0
  %384 = vmatpush1.bf16.msra.mxu0 %v280
  %385 = vmatprep.subr.bf16.mxu0 0
  %386 = vmatpush1.bf16.msra.mxu0 %v281
  %387 = vmatprep.subr.bf16.mxu0 0
  %388 = vmatpush1.bf16.msra.mxu0 %v282
  %389 = vmatprep.subr.bf16.mxu0 0
  %390 = vmatpush1.bf16.msra.mxu0 %v283
  %391 = vmatprep.subr.bf16.mxu0 0
  %392 = vmatpush1.bf16.msra.mxu0 %v284
  %393 = vmatprep.subr.bf16.mxu0 0
  %394 = vmatpush1.bf16.msra.mxu0 %v285
  %395 = vmatprep.subr.bf16.mxu0 0
  %396 = vmatpush1.bf16.msra.mxu0 %v286
  %397 = vmatprep.subr.bf16.mxu0 0
  %398 = vmatpush1.bf16.msra.mxu0 %v287
  %399 = vmatprep.subr.bf16.mxu0 0
  %400 = vmatpush1.bf16.msra.mxu0 %v288
  %401 = vmatprep.subr.bf16.mxu0 0
  %402 = vmatpush1.bf16.msra.mxu0 %v289
  %403 = vmatprep.mubr.bf16.mxu0 %v117
  %404 = vmatmul.mubr.bf16.gmra.mrb[0].mxu0 %v116
  %v405 = vpop.f32.mrb[0].mxu0
  %v406 = vadd.f32 %v357, %v405
  %v407 = vpop.f32.mrb[0].mxu0
  %v408 = vpop.f32.mrb[0].mxu0
  %v409 = vadd.f32 %v360, %v408
  %v410 = vpop.f32.mrb[0].mxu0
  %411 = vmatprep.mubr.bf16.mxu0 %v121
  %412 = vmatmul.mubr.bf16.gmra.mrb[0].mxu0 %v120
  %v413 = vpop.f32.mrb[0].mxu0
  %v414 = vadd.f32 %v365, %v413
  %v415 = vpop.f32.mrb[0].mxu0
  %v416 = vpop.f32.mrb[0].mxu0
  %v417 = vadd.f32 %v368, %v416
  %v418 = vpop.f32.mrb[0].mxu0
  %419 = vdwg.mxu0
  %v420 = vadd.f32 %v406, %v409
  %v421 = vadd.f32 %v420, %v414
  %v422 = vadd.f32 %v421, %v417
  %v423 = vrot.slane %v422, 4
  %v424 = vadd.f32 %v422, %v423
  %v425 = vrot.slane %v424, 2
  %v426 = vadd.f32 %v424, %v425
  %v427 = vrot.slane %v426, 1
  %v428 = vadd.f32 %v426, %v427
  %v429 = vmul.f32 %v406, %v406
  %v430 = vmul.f32 %v409, %v409
  %v431 = vmul.f32 %v414, %v414
  %v432 = vmul.f32 %v417, %v417
  %v433 = vadd.f32 %v429, %v430
  %v434 = vadd.f32 %v433, %v431
  %v435 = vadd.f32 %v434, %v432
  %v436 = vrot.slane %v435, 4
  %v437 = vadd.f32 %v435, %v436
  %v438 = vrot.slane %v437, 2
  %v439 = vadd.f32 %v437, %v438
  %v440 = vrot.slane %v439, 1
  %v441 = vadd.f32 %v439, %v440
  %v442 = vmul.f32 %v428, 0.03125
  %v443 = vmul.f32 %v441, 0.03125
  %v444 = vmul.f32 %v442, %v442
  %v445 = vsub.f32 %v443, %v444
  %v446 = vmax.f32 %v445, 0.0
  %v447 = vld [vmem:[%s2] sm:$0x1]
  %v448 = vadd.f32 %v446, 1e-05
  %v449 = vrsqrt.pop %v448
  %v450 = vmul.f32 %v447, %v449
  %v451 = vld [vmem:[%s3] sm:$0x1]
  %v452 = vmul.f32 %v442, %v450
  %v453 = vsub.f32 %v451, %v452
  %v455 = vlaneseq
  %v456 = vshrl.u32 %v455, 7
  %v457 = vsub.s32 0, %v456
  %v458 = vrot.slane %v450, %v457
  %v460 = vmul.f32 %v406, %v458
  %v461 = vmul.f32 %v409, %v458
  %v462 = vmul.f32 %v414, %v458
  %v463 = vmul.f32 %v417, %v458
  %v465 = vlaneseq
  %v466 = vshrl.u32 %v465, 7
  %v467 = vsub.s32 0, %v466
  %v468 = vrot.slane %v453, %v467
  %v470 = vadd.f32 %v460, %v468
  %v471 = vadd.f32 %v461, %v468
  %v472 = vadd.f32 %v462, %v468
  %v473 = vadd.f32 %v463, %v468
  %vm474 = vcmp.ge.f32.partialorder %v470, 0.0
  %vm475 = vcmp.ge.f32.partialorder %v471, 0.0
  %vm476 = vcmp.ge.f32.partialorder %v472, 0.0
  %vm477 = vcmp.ge.f32.partialorder %v473, 0.0
  %v478 = vmul.f32 %v470, 0.2
  %v479 = vmul.f32 %v471, 0.2
  %v480 = vmul.f32 %v472, 0.2
  %v481 = vmul.f32 %v473, 0.2
  %v482 = vsel %vm474, %v470, %v478
  %v483 = vsel %vm475, %v471, %v479
  %v484 = vsel %vm476, %v472, %v480
  %v485 = vsel %vm477, %v473, %v481
  %v486 = vpack.c.bf16 %v483, %v482
  %v487 = vpack.c.bf16 %v485, %v484
  %v490 = vunpack.c.l.b16 %v486
  %v491 = vunpack.c.h.b16 %v486
  %v492 = vunpack.c.l.b16 %v487
  %v493 = vunpack.c.h.b16 %v487
  %v494 = vpack.c.b16 %v490, %v490
  %v495 = vpack.c.b16 %v491, %v491
  %v496 = vpack.c.b16 %v492, %v492
  %v497 = vpack.c.b16 %v493, %v493
  %502 = vst [vmem:[%s4] sm:$0xf] %v494
  %503 = vst [vmem:[%s4 + $0x4] sm:$0xf] %v495
  %504 = vst [vmem:[%s4 + $0x8] sm:$0xf] %v496
  %505 = vst [vmem:[%s4 + $0xc] sm:$0xf] %v497
  // Predicated region
  $region18: #{discriminator_forward.7} parent=0 // pred_check
    _
  $region19: #{discriminator_forward.7} parent=0 // pred_check_branch
    %507 = sbr.rel (0) target = $region21
  $region20: #{discriminator_forward.7} parent=0 // pred_region
    _
  $region21: #{discriminator_forward.7} parent=0 // pred_fallthru
    _
  // Predicated region
  $region22: #{discriminator_forward.7} parent=0 // pred_check
    _
  $region23: #{discriminator_forward.7} parent=0 // pred_check_branch
    %509 = sbr.rel (0) target = $region25
  $region24: #{discriminator_forward.7} parent=0 // pred_region
    _
  $region25: #{discriminator_forward.7} parent=0 // pred_fallthru
    _

</llo_original>
